<compile_context>
chip_gen: v6e
topology: v6e:2x2x1
jax: 0.10.0
libtpu: 0.0.40
codegen_flags: <defaults>
</compile_context>

<pallas_src>
import jax
import jax.numpy as jnp
from jax import lax
from jax.experimental import pallas as pl
from jax.experimental.pallas import tpu as pltpu

NC = 1          # nc_netD
NDF = 8         # ndf_netD
IN_PIX = 28 * 28            # 784  flattened input pixels (nc=1)
P1_COLS = 7 * 7 * NDF       # 392  real relu(pool(conv2)) features, layout (ph, pw, c)
P2_COLS = 2 * 2 * 2 * NDF   # 64   real relu(pool2(conv3)) features, layout (ph, pw, c)
P1_PAD = 512                # lane-padded stage-1 width (multiple of 128 and 256)
P2_PAD = 128                # lane-padded stage-2 width
N_CLS = 10


# ----------------------------- fused Pallas kernel --------------------------

def _netd_fused_kernel(x_ref, w2_ref, b2_ref, w3_ref, b3_ref, wl_ref, bl_ref,
                       o_ref):
    """Entire forward for one batch block; everything stays in VMEM."""

    def conv_pool_relu(act_bf16, w_tap_ref, b_row):
        # w_tap_ref[t] is the dense (Toeplitz) conv matrix restricted to pool
        # window position t, so relu(maxpool(conv(x))) == relu(max_t(x@W_t)+b).
        # Pool + ReLU are a pure epilogue of the MXU GEMMs (f32 accumulation,
        # f32 epilogue math -- v5e has no bf16 VPU).
        acc = jnp.dot(act_bf16, w_tap_ref[0], preferred_element_type=jnp.float32)
        for t in range(1, 4):
            acc = jnp.maximum(
                acc,
                jnp.dot(act_bf16, w_tap_ref[t],
                        preferred_element_type=jnp.float32))
        return jnp.maximum(acc + b_row, 0.0)

    x = x_ref[...]                                                     # (bb, 784) bf16
    p1 = conv_pool_relu(x, w2_ref, b2_ref[...])                        # (bb, 512) f32
    p2 = conv_pool_relu(p1.astype(jnp.bfloat16), w3_ref, b3_ref[...])  # (bb, 128) f32
    # TODO(synk): fc_drop (Dropout p=0.5) treated as identity (eval mode).
    o_ref[...] = (jnp.dot(p2.astype(jnp.bfloat16), wl_ref[...],
                          preferred_element_type=jnp.float32)
                  + bl_ref[...])                                        # (bb, 10)


# ----------------------------- wrapper ---------------------------------------

def _round_up(x, m):
    return (x + m - 1) // m * m


def netD_mnist_forward(x_nchw, kp, *, block_b=1024):
    """x_nchw: (N, 1, 28, 28). Returns (N, 10) float32 logits."""
    n = x_nchw.shape[0]
    # bf16 input stream: the kernel truncates to bf16 before the GEMM anyway,
    # so this halves the only per-step HBM read at zero numerical cost.
    x_flat = x_nchw.reshape(n, IN_PIX).astype(jnp.bfloat16)   # NCHW flatten, nc=1

    n8 = _round_up(n, 8)
    # Batch rows per grid step: big enough to amortize per-step overhead, but
    # capped so there are >=2 grid steps when the batch allows it (v7x has two
    # TensorCores sharding the "parallel" axis).
    bb = max(8, min(block_b, _round_up(pl.cdiv(n8, 2), 8)))
    n_pad = _round_up(n8, bb)
    if n_pad != n:
        x_flat = jnp.pad(x_flat, ((0, n_pad - n), (0, 0)))

    flops = 2 * n_pad * (4 * IN_PIX * P1_PAD + 4 * P1_PAD * P2_PAD
                         + P2_PAD * N_CLS)
    bytes_accessed = (x_flat.size * 2 + n_pad * N_CLS * 4
                      + sum(int(v.size) * v.dtype.itemsize for v in kp.values()))

    out = pl.pallas_call(
        _netd_fused_kernel,
        out_shape=jax.ShapeDtypeStruct((n_pad, N_CLS), jnp.float32),
        grid_spec=pltpu.PrefetchScalarGridSpec(
            num_scalar_prefetch=0,
            grid=(n_pad // bb,),
            in_specs=[
                # activations: tiled over batch, bf16
                pl.BlockSpec((bb, IN_PIX), lambda i: (i, 0)),
                # weights/biases: constant index_map -> DMA'd once, VMEM-resident
                pl.BlockSpec((4, IN_PIX, P1_PAD), lambda i: (0, 0, 0)),
                pl.BlockSpec((1, P1_PAD), lambda i: (0, 0)),
                pl.BlockSpec((4, P1_PAD, P2_PAD), lambda i: (0, 0, 0)),
                pl.BlockSpec((1, P2_PAD), lambda i: (0, 0)),
                pl.BlockSpec((P2_PAD, N_CLS), lambda i: (0, 0)),
                pl.BlockSpec((1, N_CLS), lambda i: (0, 0)),
            ],
            out_specs=pl.BlockSpec((bb, N_CLS), lambda i: (i, 0)),
        ),
        compiler_params=pltpu.CompilerParams(
            dimension_semantics=("parallel",),      # shard batch across v7x cores
            vmem_limit_bytes=48 * 1024 * 1024,      # fits v7x 64MiB; lifts v5e 16MiB default
        ),
        cost_estimate=pl.CostEstimate(flops=flops, transcendentals=0,
                                      bytes_accessed=bytes_accessed),
    )(x_flat, kp["w2"], kp["b2"], kp["w3"], kp["b3"], kp["wl"], kp["bl"])
    return out[:n]


# ----------------------------- params ----------------------------------------

def init_torch_params(key):
    """Random parameters in the PyTorch module's native layout/shapes."""
    k = jax.random.split(key, 6)
    return {
        "conv2_w": 0.02 * jax.random.normal(k[0], (NDF, NC, 4, 4), jnp.float32),
        "conv2_b": 0.02 * jax.random.normal(k[1], (NDF,), jnp.float32),
        "conv3_w": 0.02 * jax.random.normal(k[2], (2 * NDF, NDF, 3, 3), jnp.float32),
        "conv3_b": 0.02 * jax.random.normal(k[3], (2 * NDF,), jnp.float32),
        "linear_w": 0.02 * jax.random.normal(k[4], (N_CLS, NDF * 8), jnp.float32),
        "linear_b": 0.02 * jax.random.normal(k[5], (N_CLS,), jnp.float32),
    }


def convert_params(tp):
    """One-time re-parameterization (init-time glue, not in the hot path).

    Each conv becomes 4 dense tap matrices (one per 2x2 pool-window position),
    built exactly by pushing the unit basis through lax.conv (padding handled
    for free).  Column layout of every stage is (ph, pw, c); the linear weight
    rows are permuted from PyTorch's NCHW flatten to match.  All widths are
    zero-padded to lane multiples (392->512, 64->128): padded p1/p2 columns are
    exactly relu(0+0)=0 and hit only zero weight rows downstream.
    """
    dn = ("NCHW", "OIHW", "NCHW")
    hi = lax.Precision.HIGHEST

    # conv2: 784 inputs -> tap matrices (4, 784, 392) -> pad cols to 512
    basis = jnp.eye(IN_PIX, dtype=jnp.float32).reshape(IN_PIX, NC, 28, 28)
    y = lax.conv_general_dilated(basis, tp["conv2_w"], (2, 2), ((1, 1), (1, 1)),
                                 dimension_numbers=dn, precision=hi)  # (784,8,14,14)
    y = jnp.transpose(y, (0, 2, 3, 1)).reshape(IN_PIX, 7, 2, 7, 2, NDF)
    y = jnp.transpose(y, (0, 2, 4, 1, 3, 5)).reshape(IN_PIX, 4, P1_COLS)
    w2 = jnp.transpose(y, (1, 0, 2))                                  # (4,784,392)
    w2 = jnp.pad(w2, ((0, 0), (0, 0), (0, P1_PAD - P1_COLS)))         # (4,784,512)

    # conv3: input layout (ph, pw, c)=(7,7,8) -> tap matrices (4, 392, 64)
    #        -> pad rows to 512 (K) and cols to 128 (N)
    basis = jnp.transpose(
        jnp.eye(P1_COLS, dtype=jnp.float32).reshape(P1_COLS, 7, 7, NDF),
        (0, 3, 1, 2))                                                 # (392,8,7,7)
    y = lax.conv_general_dilated(basis, tp["conv3_w"], (2, 2), ((1, 1), (1, 1)),
                                 dimension_numbers=dn, precision=hi)  # (392,16,4,4)
    y = jnp.transpose(y, (0, 2, 3, 1)).reshape(P1_COLS, 2, 2, 2, 2, 2 * NDF)
    y = jnp.transpose(y, (0, 2, 4, 1, 3, 5)).reshape(P1_COLS, 4, P2_COLS)
    w3 = jnp.transpose(y, (1, 0, 2))                                  # (4,392,64)
    w3 = jnp.pad(w3, ((0, 0), (0, P1_PAD - P1_COLS),
                      (0, P2_PAD - P2_COLS)))                         # (4,512,128)

    # linear: reorder rows from PyTorch NCHW flatten (c, h, w) to our (h, w, c),
    # then pad K rows to 128.
    wl = jnp.transpose(tp["linear_w"].T.reshape(2 * NDF, 2, 2, N_CLS),
                       (1, 2, 0, 3)).reshape(P2_COLS, N_CLS)          # (64, 10)
    wl = jnp.pad(wl, ((0, P2_PAD - P2_COLS), (0, 0)))                 # (128, 10)

    b2 = jnp.pad(jnp.tile(tp["conv2_b"], 7 * 7),
                 (0, P1_PAD - P1_COLS)).reshape(1, P1_PAD)
    b3 = jnp.pad(jnp.tile(tp["conv3_b"], 2 * 2),
                 (0, P2_PAD - P2_COLS)).reshape(1, P2_PAD)

    return {
        # bf16 GEMM operands (f32 accumulation in-kernel) halve weight DMA/VMEM
        "w2": w2.astype(jnp.bfloat16),
        "b2": b2,
        "w3": w3.astype(jnp.bfloat16),
        "b3": b3,
        "wl": wl.astype(jnp.bfloat16),
        "bl": tp["linear_b"].reshape(1, N_CLS),
    }


# ----------------------------- pure-JAX reference ----------------------------

def reference_forward(x_nchw, tp):
    dn = ("NCHW", "OIHW", "NCHW")
    hi = lax.Precision.HIGHEST
    y = lax.conv_general_dilated(x_nchw.astype(jnp.float32), tp["conv2_w"],
                                 (2, 2), ((1, 1), (1, 1)),
                                 dimension_numbers=dn, precision=hi)
    y = y + tp["conv2_b"][None, :, None, None]
    y = lax.reduce_window(y, -jnp.inf, lax.max, (1, 1, 2, 2), (1, 1, 2, 2), "VALID")
    y = jnp.maximum(y, 0.0)
    y = lax.conv_general_dilated(y, tp["conv3_w"], (2, 2), ((1, 1), (1, 1)),
                                 dimension_numbers=dn, precision=hi)
    y = y + tp["conv3_b"][None, :, None, None]
    y = lax.reduce_window(y, -jnp.inf, lax.max, (1, 1, 2, 2), (1, 1, 2, 2), "VALID")
    y = jnp.maximum(y, 0.0)
    y = y.reshape(y.shape[0], -1)                      # NCHW flatten -> (N, 64)
    return jnp.dot(y, tp["linear_w"].T, precision=hi) + tp["linear_b"][None, :]


# ----------------------------- main -------------------------------------------

if __name__ == "__main__":
    key = jax.random.PRNGKey(0)
    pkey, xkey = jax.random.split(key)
    torch_params = init_torch_params(pkey)
    kernel_params = convert_params(torch_params)

    x = jax.random.normal(xkey, (2, NC, 28, 28), jnp.float32)   # MNIST-shaped

    out = jax.jit(netD_mnist_forward)(x, kernel_params)
    out = jax.block_until_ready(out)
    assert out.shape == (2, 10), out.shape

    # correctness vs plain-JAX f32 reference (loose tol: kernel GEMMs use bf16
    # inputs with f32 accumulation)
    ref = reference_forward(x, torch_params)
    rel = float(jnp.linalg.norm(out - ref) / (jnp.linalg.norm(ref) + 1e-12))
    assert rel < 0.1, f"mismatch vs reference: rel_l2={rel}"

    print("KERNEL_OK")
</pallas_src>

<mosaic_0001>
module attributes {stable_mosaic.version = 11 : i64} {
  func.func @_netd_fused_kernel(%arg0: i32, %arg1: memref<8x784xbf16, #tpu.memory_space<vmem>>, %arg2: memref<4x784x512xbf16, #tpu.memory_space<vmem>>, %arg3: memref<1x512xf32, #tpu.memory_space<vmem>>, %arg4: memref<4x512x128xbf16, #tpu.memory_space<vmem>>, %arg5: memref<1x128xf32, #tpu.memory_space<vmem>>, %arg6: memref<128x10xbf16, #tpu.memory_space<vmem>>, %arg7: memref<1x10xf32, #tpu.memory_space<vmem>>, %arg8: memref<8x10xf32, #tpu.memory_space<vmem>>) attributes {dimension_semantics = [#tpu.dimension_semantics<parallel>], iteration_bounds = array<i64: 1>, scalar_prefetch = 0 : i64, scratch_operands = 0 : i64, tpu.core_type = #tpu.core_type<tc>, window_params = [{transform_indices = @transform_0, window_bounds = array<i64: 8, 784>}, {pipeline_mode = #tpu.pipeline_mode<synchronous>, transform_indices = @transform_1, window_bounds = array<i64: 4, 784, 512>}, {pipeline_mode = #tpu.pipeline_mode<synchronous>, transform_indices = @transform_2, window_bounds = array<i64: 1, 512>}, {pipeline_mode = #tpu.pipeline_mode<synchronous>, transform_indices = @transform_3, window_bounds = array<i64: 4, 512, 128>}, {pipeline_mode = #tpu.pipeline_mode<synchronous>, transform_indices = @transform_4, window_bounds = array<i64: 1, 128>}, {pipeline_mode = #tpu.pipeline_mode<synchronous>, transform_indices = @transform_5, window_bounds = array<i64: 128, 10>}, {pipeline_mode = #tpu.pipeline_mode<synchronous>, transform_indices = @transform_6, window_bounds = array<i64: 1, 10>}, {transform_indices = @transform_7, window_bounds = array<i64: 8, 10>}]} {
    %c0 = arith.constant 0 : index
    %c0_0 = arith.constant 0 : index
    %0 = vector.load %arg1[%c0, %c0_0] : memref<8x784xbf16, #tpu.memory_space<vmem>>, vector<8x784xbf16>
    %c0_1 = arith.constant 0 : index
    %c0_2 = arith.constant 0 : index
    %1 = vector.load %arg3[%c0_1, %c0_2] : memref<1x512xf32, #tpu.memory_space<vmem>>, vector<1x512xf32>
    %c0_3 = arith.constant 0 : index
    %c0_4 = arith.constant 0 : index
    %c0_5 = arith.constant 0 : index
    %2 = vector.load %arg2[%c0_3, %c0_4, %c0_5] : memref<4x784x512xbf16, #tpu.memory_space<vmem>>, vector<1x784x512xbf16>
    %3 = vector.shape_cast %2 : vector<1x784x512xbf16> to vector<784x512xbf16>
    %cst = arith.constant dense<0.000000e+00> : vector<8x512xf32>
    %4 = tpu.matmul %0, %3, %cst {dimension_numbers = #tpu.dot_dimension_numbers<[1], [0], [0], [1], [0, 0, 1, 1], [], []>} : vector<8x784xbf16>, vector<784x512xbf16>, vector<8x512xf32> -> vector<8x512xf32>
    %c1 = arith.constant 1 : index
    %c0_6 = arith.constant 0 : index
    %c0_7 = arith.constant 0 : index
    %5 = vector.load %arg2[%c1, %c0_6, %c0_7] : memref<4x784x512xbf16, #tpu.memory_space<vmem>>, vector<1x784x512xbf16>
    %6 = vector.shape_cast %5 : vector<1x784x512xbf16> to vector<784x512xbf16>
    %cst_8 = arith.constant dense<0.000000e+00> : vector<8x512xf32>
    %7 = tpu.matmul %0, %6, %cst_8 {dimension_numbers = #tpu.dot_dimension_numbers<[1], [0], [0], [1], [0, 0, 1, 1], [], []>} : vector<8x784xbf16>, vector<784x512xbf16>, vector<8x512xf32> -> vector<8x512xf32>
    %8 = arith.maximumf %4, %7 : vector<8x512xf32>
    %c2 = arith.constant 2 : index
    %c0_9 = arith.constant 0 : index
    %c0_10 = arith.constant 0 : index
    %9 = vector.load %arg2[%c2, %c0_9, %c0_10] : memref<4x784x512xbf16, #tpu.memory_space<vmem>>, vector<1x784x512xbf16>
    %10 = vector.shape_cast %9 : vector<1x784x512xbf16> to vector<784x512xbf16>
    %cst_11 = arith.constant dense<0.000000e+00> : vector<8x512xf32>
    %11 = tpu.matmul %0, %10, %cst_11 {dimension_numbers = #tpu.dot_dimension_numbers<[1], [0], [0], [1], [0, 0, 1, 1], [], []>} : vector<8x784xbf16>, vector<784x512xbf16>, vector<8x512xf32> -> vector<8x512xf32>
    %12 = arith.maximumf %8, %11 : vector<8x512xf32>
    %c3 = arith.constant 3 : index
    %c0_12 = arith.constant 0 : index
    %c0_13 = arith.constant 0 : index
    %13 = vector.load %arg2[%c3, %c0_12, %c0_13] : memref<4x784x512xbf16, #tpu.memory_space<vmem>>, vector<1x784x512xbf16>
    %14 = vector.shape_cast %13 : vector<1x784x512xbf16> to vector<784x512xbf16>
    %cst_14 = arith.constant dense<0.000000e+00> : vector<8x512xf32>
    %15 = tpu.matmul %0, %14, %cst_14 {dimension_numbers = #tpu.dot_dimension_numbers<[1], [0], [0], [1], [0, 0, 1, 1], [], []>} : vector<8x784xbf16>, vector<784x512xbf16>, vector<8x512xf32> -> vector<8x512xf32>
    %16 = arith.maximumf %12, %15 : vector<8x512xf32>
    %17 = vector.broadcast %1 : vector<1x512xf32> to vector<8x512xf32>
    %18 = arith.addf %16, %17 : vector<8x512xf32>
    %cst_15 = arith.constant 0.000000e+00 : f32
    %19 = vector.broadcast %cst_15 : f32 to vector<8x512xf32>
    %20 = arith.maximumf %18, %19 : vector<8x512xf32>
    %21 = arith.truncf %20 : vector<8x512xf32> to vector<8x512xbf16>
    %c0_16 = arith.constant 0 : index
    %c0_17 = arith.constant 0 : index
    %22 = vector.load %arg5[%c0_16, %c0_17] : memref<1x128xf32, #tpu.memory_space<vmem>>, vector<1x128xf32>
    %c0_18 = arith.constant 0 : index
    %c0_19 = arith.constant 0 : index
    %c0_20 = arith.constant 0 : index
    %23 = vector.load %arg4[%c0_18, %c0_19, %c0_20] : memref<4x512x128xbf16, #tpu.memory_space<vmem>>, vector<1x512x128xbf16>
    %24 = vector.shape_cast %23 : vector<1x512x128xbf16> to vector<512x128xbf16>
    %cst_21 = arith.constant dense<0.000000e+00> : vector<8x128xf32>
    %25 = tpu.matmul %21, %24, %cst_21 {dimension_numbers = #tpu.dot_dimension_numbers<[1], [0], [0], [1], [0, 0, 1, 1], [], []>} : vector<8x512xbf16>, vector<512x128xbf16>, vector<8x128xf32> -> vector<8x128xf32>
    %c1_22 = arith.constant 1 : index
    %c0_23 = arith.constant 0 : index
    %c0_24 = arith.constant 0 : index
    %26 = vector.load %arg4[%c1_22, %c0_23, %c0_24] : memref<4x512x128xbf16, #tpu.memory_space<vmem>>, vector<1x512x128xbf16>
    %27 = vector.shape_cast %26 : vector<1x512x128xbf16> to vector<512x128xbf16>
    %cst_25 = arith.constant dense<0.000000e+00> : vector<8x128xf32>
    %28 = tpu.matmul %21, %27, %cst_25 {dimension_numbers = #tpu.dot_dimension_numbers<[1], [0], [0], [1], [0, 0, 1, 1], [], []>} : vector<8x512xbf16>, vector<512x128xbf16>, vector<8x128xf32> -> vector<8x128xf32>
    %29 = arith.maximumf %25, %28 : vector<8x128xf32>
    %c2_26 = arith.constant 2 : index
    %c0_27 = arith.constant 0 : index
    %c0_28 = arith.constant 0 : index
    %30 = vector.load %arg4[%c2_26, %c0_27, %c0_28] : memref<4x512x128xbf16, #tpu.memory_space<vmem>>, vector<1x512x128xbf16>
    %31 = vector.shape_cast %30 : vector<1x512x128xbf16> to vector<512x128xbf16>
    %cst_29 = arith.constant dense<0.000000e+00> : vector<8x128xf32>
    %32 = tpu.matmul %21, %31, %cst_29 {dimension_numbers = #tpu.dot_dimension_numbers<[1], [0], [0], [1], [0, 0, 1, 1], [], []>} : vector<8x512xbf16>, vector<512x128xbf16>, vector<8x128xf32> -> vector<8x128xf32>
    %33 = arith.maximumf %29, %32 : vector<8x128xf32>
    %c3_30 = arith.constant 3 : index
    %c0_31 = arith.constant 0 : index
    %c0_32 = arith.constant 0 : index
    %34 = vector.load %arg4[%c3_30, %c0_31, %c0_32] : memref<4x512x128xbf16, #tpu.memory_space<vmem>>, vector<1x512x128xbf16>
    %35 = vector.shape_cast %34 : vector<1x512x128xbf16> to vector<512x128xbf16>
    %cst_33 = arith.constant dense<0.000000e+00> : vector<8x128xf32>
    %36 = tpu.matmul %21, %35, %cst_33 {dimension_numbers = #tpu.dot_dimension_numbers<[1], [0], [0], [1], [0, 0, 1, 1], [], []>} : vector<8x512xbf16>, vector<512x128xbf16>, vector<8x128xf32> -> vector<8x128xf32>
    %37 = arith.maximumf %33, %36 : vector<8x128xf32>
    %38 = vector.broadcast %22 : vector<1x128xf32> to vector<8x128xf32>
    %39 = arith.addf %37, %38 : vector<8x128xf32>
    %cst_34 = arith.constant 0.000000e+00 : f32
    %40 = vector.broadcast %cst_34 : f32 to vector<8x128xf32>
    %41 = arith.maximumf %39, %40 : vector<8x128xf32>
    %42 = arith.truncf %41 : vector<8x128xf32> to vector<8x128xbf16>
    %c0_35 = arith.constant 0 : index
    %c0_36 = arith.constant 0 : index
    %43 = vector.load %arg6[%c0_35, %c0_36] : memref<128x10xbf16, #tpu.memory_space<vmem>>, vector<128x10xbf16>
    %cst_37 = arith.constant dense<0.000000e+00> : vector<8x10xf32>
    %44 = tpu.matmul %42, %43, %cst_37 {dimension_numbers = #tpu.dot_dimension_numbers<[1], [0], [0], [1], [0, 0, 1, 1], [], []>} : vector<8x128xbf16>, vector<128x10xbf16>, vector<8x10xf32> -> vector<8x10xf32>
    %c0_38 = arith.constant 0 : index
    %c0_39 = arith.constant 0 : index
    %45 = vector.load %arg7[%c0_38, %c0_39] : memref<1x10xf32, #tpu.memory_space<vmem>>, vector<1x10xf32>
    %46 = vector.broadcast %45 : vector<1x10xf32> to vector<8x10xf32>
    %47 = arith.addf %44, %46 : vector<8x10xf32>
    %c0_40 = arith.constant 0 : index
    %c0_41 = arith.constant 0 : index
    %48 = vector.load %arg8[%c0_40, %c0_41] : memref<8x10xf32, #tpu.memory_space<vmem>>, vector<8x10xf32>
    tpu.vector_store %arg8[%c0_40, %c0_41], %47 {strides = array<i32>} : memref<8x10xf32, #tpu.memory_space<vmem>>, vector<8x10xf32>,
    return
  }
  func.func @transform_0(%arg0: i32) -> (i32, i32) {
    %c0_i32 = arith.constant 0 : i32
    %c0_i32_0 = arith.constant 0 : i32
    return %arg0, %c0_i32 : i32, i32
  }
  func.func @transform_1(%arg0: i32) -> (i32, i32, i32) {
    %c0_i32 = arith.constant 0 : i32
    %c0_i32_0 = arith.constant 0 : i32
    %c0_i32_1 = arith.constant 0 : i32
    %c0_i32_2 = arith.constant 0 : i32
    return %c0_i32, %c0_i32_0, %c0_i32_1 : i32, i32, i32
  }
  func.func @transform_2(%arg0: i32) -> (i32, i32) {
    %c0_i32 = arith.constant 0 : i32
    %c0_i32_0 = arith.constant 0 : i32
    %c0_i32_1 = arith.constant 0 : i32
    return %c0_i32, %c0_i32_0 : i32, i32
  }
  func.func @transform_3(%arg0: i32) -> (i32, i32, i32) {
    %c0_i32 = arith.constant 0 : i32
    %c0_i32_0 = arith.constant 0 : i32
    %c0_i32_1 = arith.constant 0 : i32
    %c0_i32_2 = arith.constant 0 : i32
    return %c0_i32, %c0_i32_0, %c0_i32_1 : i32, i32, i32
  }
  func.func @transform_4(%arg0: i32) -> (i32, i32) {
    %c0_i32 = arith.constant 0 : i32
    %c0_i32_0 = arith.constant 0 : i32
    %c0_i32_1 = arith.constant 0 : i32
    return %c0_i32, %c0_i32_0 : i32, i32
  }
  func.func @transform_5(%arg0: i32) -> (i32, i32) {
    %c0_i32 = arith.constant 0 : i32
    %c0_i32_0 = arith.constant 0 : i32
    %c0_i32_1 = arith.constant 0 : i32
    return %c0_i32, %c0_i32_0 : i32, i32
  }
  func.func @transform_6(%arg0: i32) -> (i32, i32) {
    %c0_i32 = arith.constant 0 : i32
    %c0_i32_0 = arith.constant 0 : i32
    %c0_i32_1 = arith.constant 0 : i32
    return %c0_i32, %c0_i32_0 : i32, i32
  }
  func.func @transform_7(%arg0: i32) -> (i32, i32) {
    %c0_i32 = arith.constant 0 : i32
    %c0_i32_0 = arith.constant 0 : i32
    return %arg0, %c0_i32 : i32, i32
  }
}

</mosaic_0001>

<llo_original>
// kernel: netD_mnist_forward.1
$region0: #{netD_mnist_forward.1}
  #allocation0 [shape = 'u32[]', space=smem, size = 0x4, offset = 0x4, fixed_abs, tag = 'smem constant byte address 0x4 - core index']
  #allocation1 [shape = 'u32[144,128]{1,0:T(1,128)}', space=vmem, size = 0x12000, scoped, tag = 'internal scratch']
  %s0 = inlined_call_operand.vmem [shape: bf16[8,784], index: 0, kind: input, shape index: {}]
  %s1 = inlined_call_operand.hbm [shape: bf16[4,784,512], index: 1, kind: input, shape index: {}]
  %s2 = inlined_call_operand.hbm [shape: f32[1,512], index: 2, kind: input, shape index: {}]
  %s3 = inlined_call_operand.hbm [shape: bf16[4,512,128], index: 3, kind: input, shape index: {}]
  %s4 = inlined_call_operand.hbm [shape: f32[1,128], index: 4, kind: input, shape index: {}]
  %s5 = inlined_call_operand.vmem [shape: bf16[128,10], index: 5, kind: input, shape index: {}]
  %s6 = inlined_call_operand.hbm [shape: f32[1,10], index: 6, kind: input, shape index: {}]
  %s7 = inlined_call_operand.vmem [shape: f32[8,10], index: 7, kind: output, shape index: {}]
  %s8 = sld [smem:[#allocation0]]
  $region58: #{netD_mnist_forward.1} parent=0
    _
  %s10 = ssub.s32 1, %s8
  %s11 = scalar_select 0, %s10, %s8
  $region1: #{netD_mnist_forward.1} parent=0
    #allocation2 [shape = 'u8[3211264]{0}', space=vmem, size = 0x310000, scoped, tag = 'input window, operand 1, single buffered']
    #allocation3 [shape = 's32[1]{0}', space=sflag, size = 0x4, scoped, tag = 'scoped memory for netD_mnist_forward.1']
    #allocation4 [shape = 'u8[2048]{0}', space=vmem, size = 0x800, scoped, tag = 'input window, operand 2, single buffered']
    #allocation5 [shape = 's32[1]{0}', space=sflag, size = 0x4, scoped, tag = 'scoped memory for netD_mnist_forward.1']
    #allocation6 [shape = 'u8[524288]{0}', space=vmem, size = 0x80000, scoped, tag = 'input window, operand 3, single buffered']
    #allocation7 [shape = 'u8[512]{0}', space=vmem, size = 0x400, scoped, tag = 'input window, operand 4, single buffered']
    #allocation8 [shape = 's32[1]{0}', space=sflag, size = 0x4, scoped, tag = 'scoped memory for netD_mnist_forward.1']
    #allocation9 [shape = 'u8[512]{0}', space=vmem, size = 0x400, scoped, tag = 'input window, operand 6, single buffered']
    %12 = vsyncpa [#allocation3], 0
    %13 = vsyncpa [#allocation5], 0
    %14 = vsyncpa [#allocation8], 0
    // Predicated region
    $region2: #{netD_mnist_forward.1} parent=1 // pred_check
      _
    $region3: #{netD_mnist_forward.1} parent=1 // pred_check_branch
      %16 = sbr.rel (0) target = $region5
    $region4: #{netD_mnist_forward.1} parent=1 // pred_region
      _
    $region5: #{netD_mnist_forward.1} parent=1 // pred_fallthru
      _
    // Predicated region
    $region6: #{netD_mnist_forward.1} parent=1 // pred_check
      _
    $region7: #{netD_mnist_forward.1} parent=1 // pred_check_branch
      %18 = sbr.rel (0) target = $region9
    $region8: #{netD_mnist_forward.1} parent=1 // pred_region
      %s20 = ssub.s32 100352, 100352
      %21 = vsyncadd [#allocation3], %s20
      %s22 = sshll.u32 [#allocation2], 4
      %s23 = int_to_ptr.vmem [resolvable:$true] %s22
      %28 = dma.hbm_to_vmem [thread:$0]  %s1, 100352, %s23, [#allocation3], 256, 256, 16
    $region9: #{netD_mnist_forward.1} parent=1 // pred_fallthru
      _
    // Predicated region
    $region10: #{netD_mnist_forward.1} parent=1 // pred_check
      _
    $region11: #{netD_mnist_forward.1} parent=1 // pred_check_branch
      %30 = sbr.rel (0) target = $region13
    $region12: #{netD_mnist_forward.1} parent=1 // pred_region
      %s32 = ssub.s32 64, 64
      %33 = vsyncadd [#allocation5], %s32
      %s35 = sshll.u32 [#allocation4], 4
      %s36 = int_to_ptr.vmem [resolvable:$true] %s35
      %38 = dma.hbm_to_vmem [thread:$0]  %s2, 64, %s36, [#allocation5]
    $region13: #{netD_mnist_forward.1} parent=1 // pred_fallthru
      _
    // Predicated region
    $region14: #{netD_mnist_forward.1} parent=1 // pred_check
      _
    $region15: #{netD_mnist_forward.1} parent=1 // pred_check_branch
      %40 = sbr.rel (0) target = $region17
    $region16: #{netD_mnist_forward.1} parent=1 // pred_region
      %s42 = ssub.s32 16384, 16384
      %43 = vsyncadd [#allocation5], %s42
      %s44 = sshll.u32 [#allocation6], 4
      %s45 = int_to_ptr.vmem [resolvable:$true] %s44
      %50 = dma.hbm_to_vmem [thread:$0]  %s3, 16384, %s45, [#allocation5], 64, 64, 4
    $region17: #{netD_mnist_forward.1} parent=1 // pred_fallthru
      _
    // Predicated region
    $region18: #{netD_mnist_forward.1} parent=1 // pred_check
      _
    $region19: #{netD_mnist_forward.1} parent=1 // pred_check_branch
      %52 = sbr.rel (0) target = $region21
    $region20: #{netD_mnist_forward.1} parent=1 // pred_region
      %s54 = ssub.s32 16, 16
      %55 = vsyncadd [#allocation8], %s54
      %s57 = sshll.u32 [#allocation7], 4
      %s58 = int_to_ptr.vmem [resolvable:$true] %s57
      %60 = dma.hbm_to_vmem [thread:$0]  %s4, 16, %s58, [#allocation8]
    $region21: #{netD_mnist_forward.1} parent=1 // pred_fallthru
      _
    // Predicated region
    $region22: #{netD_mnist_forward.1} parent=1 // pred_check
      _
    $region23: #{netD_mnist_forward.1} parent=1 // pred_check_branch
      %62 = sbr.rel (0) target = $region25
    $region24: #{netD_mnist_forward.1} parent=1 // pred_region
      _
    $region25: #{netD_mnist_forward.1} parent=1 // pred_fallthru
      _
    // Predicated region
    $region26: #{netD_mnist_forward.1} parent=1 // pred_check
      _
    $region27: #{netD_mnist_forward.1} parent=1 // pred_check_branch
      %64 = sbr.rel (0) target = $region29
    $region28: #{netD_mnist_forward.1} parent=1 // pred_region
      %s66 = ssub.s32 16, 16
      %67 = vsyncadd [#allocation8], %s66
      %s69 = sshll.u32 [#allocation9], 4
      %s70 = int_to_ptr.vmem [resolvable:$true] %s69
      %72 = dma.hbm_to_vmem [thread:$0]  %s6, 16, %s70, [#allocation8]
    $region29: #{netD_mnist_forward.1} parent=1 // pred_fallthru
      _
    // Predicated region
    $region30: #{netD_mnist_forward.1} parent=1 // pred_check
      _
    $region31: #{netD_mnist_forward.1} parent=1 // pred_check_branch
      %74 = sbr.rel (0) target = $region33
    $region32: #{netD_mnist_forward.1} parent=1 // pred_region
      %75 = dma.done [#allocation3], 100352
    $region33: #{netD_mnist_forward.1} parent=1 // pred_fallthru
      _
    // Predicated region
    $region34: #{netD_mnist_forward.1} parent=1 // pred_check
      _
    $region35: #{netD_mnist_forward.1} parent=1 // pred_check_branch
      %77 = sbr.rel (0) target = $region37
    $region36: #{netD_mnist_forward.1} parent=1 // pred_region
      %78 = dma.done [#allocation5], 64
    $region37: #{netD_mnist_forward.1} parent=1 // pred_fallthru
      _
    // Predicated region
    $region38: #{netD_mnist_forward.1} parent=1 // pred_check
      _
    $region39: #{netD_mnist_forward.1} parent=1 // pred_check_branch
      %80 = sbr.rel (0) target = $region41
    $region40: #{netD_mnist_forward.1} parent=1 // pred_region
      %81 = dma.done [#allocation5], 16384
    $region41: #{netD_mnist_forward.1} parent=1 // pred_fallthru
      _
    // Predicated region
    $region42: #{netD_mnist_forward.1} parent=1 // pred_check
      _
    $region43: #{netD_mnist_forward.1} parent=1 // pred_check_branch
      %83 = sbr.rel (0) target = $region45
    $region44: #{netD_mnist_forward.1} parent=1 // pred_region
      %84 = dma.done [#allocation8], 16
    $region45: #{netD_mnist_forward.1} parent=1 // pred_fallthru
      _
    // Predicated region
    $region46: #{netD_mnist_forward.1} parent=1 // pred_check
      _
    $region47: #{netD_mnist_forward.1} parent=1 // pred_check_branch
      %86 = sbr.rel (0) target = $region49
    $region48: #{netD_mnist_forward.1} parent=1 // pred_region
      %87 = dma.done [#allocation8], 16
    $region49: #{netD_mnist_forward.1} parent=1 // pred_fallthru
      _
    %v89 = vld [vmem:[%s0] sm:$0xff]
    %v90 = vld [vmem:[%s0 + $0x8] sm:$0xff]
    %v91 = vld [vmem:[%s0 + $0x10] sm:$0xff]
    %v92 = vld [vmem:[%s0 + $0x18] sm:$0xf]
    %v93 = vld [vmem:[#allocation4] sm:$0xf]
    %v94 = vld [vmem:[#allocation2] sm:$0xff]
    %v95 = vld [vmem:[#allocation2 + $0x8] sm:$0xff]
    %v96 = vld [vmem:[#allocation2 + $0x10] sm:$0xff]
    %v97 = vld [vmem:[#allocation2 + $0x18] sm:$0xff]
    %v98 = vld [vmem:[#allocation2 + $0x20] sm:$0xff]
    %v99 = vld [vmem:[#allocation2 + $0x28] sm:$0xff]
    %v100 = vld [vmem:[#allocation2 + $0x30] sm:$0xff]
    %v101 = vld [vmem:[#allocation2 + $0x38] sm:$0xff]
    %v102 = vld [vmem:[#allocation2 + $0x40] sm:$0xff]
    %v103 = vld [vmem:[#allocation2 + $0x48] sm:$0xff]
    %v104 = vld [vmem:[#allocation2 + $0x50] sm:$0xff]
    %v105 = vld [vmem:[#allocation2 + $0x58] sm:$0xff]
    %v106 = vld [vmem:[#allocation2 + $0x60] sm:$0xff]
    %v107 = vld [vmem:[#allocation2 + $0x68] sm:$0xff]
    %v108 = vld [vmem:[#allocation2 + $0x70] sm:$0xff]
    %v109 = vld [vmem:[#allocation2 + $0x78] sm:$0xff]
    %v110 = vld [vmem:[#allocation2 + $0x80] sm:$0xff]
    %v111 = vld [vmem:[#allocation2 + $0x88] sm:$0xff]
    %v112 = vld [vmem:[#allocation2 + $0x90] sm:$0xff]
    %v113 = vld [vmem:[#allocation2 + $0x98] sm:$0xff]
    %v114 = vld [vmem:[#allocation2 + $0xa0] sm:$0xff]
    %v115 = vld [vmem:[#allocation2 + $0xa8] sm:$0xff]
    %v116 = vld [vmem:[#allocation2 + $0xb0] sm:$0xff]
    %v117 = vld [vmem:[#allocation2 + $0xb8] sm:$0xff]
    %v118 = vld [vmem:[#allocation2 + $0xc0] sm:$0xff]
    %v119 = vld [vmem:[#allocation2 + $0xc8] sm:$0xff]
    %v120 = vld [vmem:[#allocation2 + $0xd0] sm:$0xff]
    %v121 = vld [vmem:[#allocation2 + $0xd8] sm:$0xff]
    %v122 = vld [vmem:[#allocation2 + $0xe0] sm:$0xff]
    %v123 = vld [vmem:[#allocation2 + $0xe8] sm:$0xff]
    %v124 = vld [vmem:[#allocation2 + $0xf0] sm:$0xff]
    %v125 = vld [vmem:[#allocation2 + $0xf8] sm:$0xff]
    %v126 = vld [vmem:[#allocation2 + $0x100] sm:$0xff]
    %v127 = vld [vmem:[#allocation2 + $0x108] sm:$0xff]
    %v128 = vld [vmem:[#allocation2 + $0x110] sm:$0xff]
    %v129 = vld [vmem:[#allocation2 + $0x118] sm:$0xff]
    %v130 = vld [vmem:[#allocation2 + $0x120] sm:$0xff]
    %v131 = vld [vmem:[#allocation2 + $0x128] sm:$0xff]
    %v132 = vld [vmem:[#allocation2 + $0x130] sm:$0xff]
    %v133 = vld [vmem:[#allocation2 + $0x138] sm:$0xff]
    %v134 = vld [vmem:[#allocation2 + $0x140] sm:$0xff]
    %v135 = vld [vmem:[#allocation2 + $0x148] sm:$0xff]
    %v136 = vld [vmem:[#allocation2 + $0x150] sm:$0xff]
    %v137 = vld [vmem:[#allocation2 + $0x158] sm:$0xff]
    %v138 = vld [vmem:[#allocation2 + $0x160] sm:$0xff]
    %v139 = vld [vmem:[#allocation2 + $0x168] sm:$0xff]
    %v140 = vld [vmem:[#allocation2 + $0x170] sm:$0xff]
    %v141 = vld [vmem:[#allocation2 + $0x178] sm:$0xff]
    %v142 = vld [vmem:[#allocation2 + $0x180] sm:$0xff]
    %v143 = vld [vmem:[#allocation2 + $0x188] sm:$0xff]
    %v144 = vld [vmem:[#allocation2 + $0x190] sm:$0xff]
    %v145 = vld [vmem:[#allocation2 + $0x198] sm:$0xff]
    %v146 = vld [vmem:[#allocation2 + $0x1a0] sm:$0xff]
    %v147 = vld [vmem:[#allocation2 + $0x1a8] sm:$0xff]
    %v148 = vld [vmem:[#allocation2 + $0x1b0] sm:$0xff]
    %v149 = vld [vmem:[#allocation2 + $0x1b8] sm:$0xff]
    %v150 = vld [vmem:[#allocation2 + $0x1c0] sm:$0xff]
    %v151 = vld [vmem:[#allocation2 + $0x1c8] sm:$0xff]
    %v152 = vld [vmem:[#allocation2 + $0x1d0] sm:$0xff]
    %v153 = vld [vmem:[#allocation2 + $0x1d8] sm:$0xff]
    %v154 = vld [vmem:[#allocation2 + $0x1e0] sm:$0xff]
    %v155 = vld [vmem:[#allocation2 + $0x1e8] sm:$0xff]
    %v156 = vld [vmem:[#allocation2 + $0x1f0] sm:$0xff]
    %v157 = vld [vmem:[#allocation2 + $0x1f8] sm:$0xff]
    %v158 = vld [vmem:[#allocation2 + $0x200] sm:$0xff]
    %v159 = vld [vmem:[#allocation2 + $0x208] sm:$0xff]
    %v160 = vld [vmem:[#allocation2 + $0x210] sm:$0xff]
    %v161 = vld [vmem:[#allocation2 + $0x218] sm:$0xff]
    %v162 = vld [vmem:[#allocation2 + $0x220] sm:$0xff]
    %v163 = vld [vmem:[#allocation2 + $0x228] sm:$0xff]
    %v164 = vld [vmem:[#allocation2 + $0x230] sm:$0xff]
    %v165 = vld [vmem:[#allocation2 + $0x238] sm:$0xff]
    %v166 = vld [vmem:[#allocation2 + $0x240] sm:$0xff]
    %v167 = vld [vmem:[#allocation2 + $0x248] sm:$0xff]
    %v168 = vld [vmem:[#allocation2 + $0x250] sm:$0xff]
    %v169 = vld [vmem:[#allocation2 + $0x258] sm:$0xff]
    %v170 = vld [vmem:[#allocation2 + $0x260] sm:$0xff]
    %v171 = vld [vmem:[#allocation2 + $0x268] sm:$0xff]
    %v172 = vld [vmem:[#allocation2 + $0x270] sm:$0xff]
    %v173 = vld [vmem:[#allocation2 + $0x278] sm:$0xff]
    %v174 = vld [vmem:[#allocation2 + $0x280] sm:$0xff]
    %v175 = vld [vmem:[#allocation2 + $0x288] sm:$0xff]
    %v176 = vld [vmem:[#allocation2 + $0x290] sm:$0xff]
    %v177 = vld [vmem:[#allocation2 + $0x298] sm:$0xff]
    %v178 = vld [vmem:[#allocation2 + $0x2a0] sm:$0xff]
    %v179 = vld [vmem:[#allocation2 + $0x2a8] sm:$0xff]
    %v180 = vld [vmem:[#allocation2 + $0x2b0] sm:$0xff]
    %v181 = vld [vmem:[#allocation2 + $0x2b8] sm:$0xff]
    %v182 = vld [vmem:[#allocation2 + $0x2c0] sm:$0xff]
    %v183 = vld [vmem:[#allocation2 + $0x2c8] sm:$0xff]
    %v184 = vld [vmem:[#allocation2 + $0x2d0] sm:$0xff]
    %v185 = vld [vmem:[#allocation2 + $0x2d8] sm:$0xff]
    %v186 = vld [vmem:[#allocation2 + $0x2e0] sm:$0xff]
    %v187 = vld [vmem:[#allocation2 + $0x2e8] sm:$0xff]
    %v188 = vld [vmem:[#allocation2 + $0x2f0] sm:$0xff]
    %v189 = vld [vmem:[#allocation2 + $0x2f8] sm:$0xff]
    %v190 = vld [vmem:[#allocation2 + $0x300] sm:$0xff]
    %v191 = vld [vmem:[#allocation2 + $0x308] sm:$0xff]
    %v192 = vld [vmem:[#allocation2 + $0x310] sm:$0xff]
    %v193 = vld [vmem:[#allocation2 + $0x318] sm:$0xff]
    %v194 = vld [vmem:[#allocation2 + $0x320] sm:$0xff]
    %v195 = vld [vmem:[#allocation2 + $0x328] sm:$0xff]
    %v196 = vld [vmem:[#allocation2 + $0x330] sm:$0xff]
    %v197 = vld [vmem:[#allocation2 + $0x338] sm:$0xff]
    %v198 = vld [vmem:[#allocation2 + $0x340] sm:$0xff]
    %v199 = vld [vmem:[#allocation2 + $0x348] sm:$0xff]
    %v200 = vld [vmem:[#allocation2 + $0x350] sm:$0xff]
    %v201 = vld [vmem:[#allocation2 + $0x358] sm:$0xff]
    %v202 = vld [vmem:[#allocation2 + $0x360] sm:$0xff]
    %v203 = vld [vmem:[#allocation2 + $0x368] sm:$0xff]
    %v204 = vld [vmem:[#allocation2 + $0x370] sm:$0xff]
    %v205 = vld [vmem:[#allocation2 + $0x378] sm:$0xff]
    %v206 = vld [vmem:[#allocation2 + $0x380] sm:$0xff]
    %v207 = vld [vmem:[#allocation2 + $0x388] sm:$0xff]
    %v208 = vld [vmem:[#allocation2 + $0x390] sm:$0xff]
    %v209 = vld [vmem:[#allocation2 + $0x398] sm:$0xff]
    %v210 = vld [vmem:[#allocation2 + $0x3a0] sm:$0xff]
    %v211 = vld [vmem:[#allocation2 + $0x3a8] sm:$0xff]
    %v212 = vld [vmem:[#allocation2 + $0x3b0] sm:$0xff]
    %v213 = vld [vmem:[#allocation2 + $0x3b8] sm:$0xff]
    %v214 = vld [vmem:[#allocation2 + $0x3c0] sm:$0xff]
    %v215 = vld [vmem:[#allocation2 + $0x3c8] sm:$0xff]
    %v216 = vld [vmem:[#allocation2 + $0x3d0] sm:$0xff]
    %v217 = vld [vmem:[#allocation2 + $0x3d8] sm:$0xff]
    %v218 = vld [vmem:[#allocation2 + $0x3e0] sm:$0xff]
    %v219 = vld [vmem:[#allocation2 + $0x3e8] sm:$0xff]
    %v220 = vld [vmem:[#allocation2 + $0x3f0] sm:$0xff]
    %v221 = vld [vmem:[#allocation2 + $0x3f8] sm:$0xff]
    %v222 = vld [vmem:[#allocation2 + $0x400] sm:$0xff]
    %v223 = vld [vmem:[#allocation2 + $0x408] sm:$0xff]
    %v224 = vld [vmem:[#allocation2 + $0x410] sm:$0xff]
    %v225 = vld [vmem:[#allocation2 + $0x418] sm:$0xff]
    %v226 = vld [vmem:[#allocation2 + $0x420] sm:$0xff]
    %v227 = vld [vmem:[#allocation2 + $0x428] sm:$0xff]
    %v228 = vld [vmem:[#allocation2 + $0x430] sm:$0xff]
    %v229 = vld [vmem:[#allocation2 + $0x438] sm:$0xff]
    %v230 = vld [vmem:[#allocation2 + $0x440] sm:$0xff]
    %v231 = vld [vmem:[#allocation2 + $0x448] sm:$0xff]
    %v232 = vld [vmem:[#allocation2 + $0x450] sm:$0xff]
    %v233 = vld [vmem:[#allocation2 + $0x458] sm:$0xff]
    %v234 = vld [vmem:[#allocation2 + $0x460] sm:$0xff]
    %v235 = vld [vmem:[#allocation2 + $0x468] sm:$0xff]
    %v236 = vld [vmem:[#allocation2 + $0x470] sm:$0xff]
    %v237 = vld [vmem:[#allocation2 + $0x478] sm:$0xff]
    %v238 = vld [vmem:[#allocation2 + $0x480] sm:$0xff]
    %v239 = vld [vmem:[#allocation2 + $0x488] sm:$0xff]
    %v240 = vld [vmem:[#allocation2 + $0x490] sm:$0xff]
    %v241 = vld [vmem:[#allocation2 + $0x498] sm:$0xff]
    %v242 = vld [vmem:[#allocation2 + $0x4a0] sm:$0xff]
    %v243 = vld [vmem:[#allocation2 + $0x4a8] sm:$0xff]
    %v244 = vld [vmem:[#allocation2 + $0x4b0] sm:$0xff]
    %v245 = vld [vmem:[#allocation2 + $0x4b8] sm:$0xff]
    %v246 = vld [vmem:[#allocation2 + $0x4c0] sm:$0xff]
    %v247 = vld [vmem:[#allocation2 + $0x4c8] sm:$0xff]
    %v248 = vld [vmem:[#allocation2 + $0x4d0] sm:$0xff]
    %v249 = vld [vmem:[#allocation2 + $0x4d8] sm:$0xff]
    %v250 = vld [vmem:[#allocation2 + $0x4e0] sm:$0xff]
    %v251 = vld [vmem:[#allocation2 + $0x4e8] sm:$0xff]
    %v252 = vld [vmem:[#allocation2 + $0x4f0] sm:$0xff]
    %v253 = vld [vmem:[#allocation2 + $0x4f8] sm:$0xff]
    %v254 = vld [vmem:[#allocation2 + $0x500] sm:$0xff]
    %v255 = vld [vmem:[#allocation2 + $0x508] sm:$0xff]
    %v256 = vld [vmem:[#allocation2 + $0x510] sm:$0xff]
    %v257 = vld [vmem:[#allocation2 + $0x518] sm:$0xff]
    %v258 = vld [vmem:[#allocation2 + $0x520] sm:$0xff]
    %v259 = vld [vmem:[#allocation2 + $0x528] sm:$0xff]
    %v260 = vld [vmem:[#allocation2 + $0x530] sm:$0xff]
    %v261 = vld [vmem:[#allocation2 + $0x538] sm:$0xff]
    %v262 = vld [vmem:[#allocation2 + $0x540] sm:$0xff]
    %v263 = vld [vmem:[#allocation2 + $0x548] sm:$0xff]
    %v264 = vld [vmem:[#allocation2 + $0x550] sm:$0xff]
    %v265 = vld [vmem:[#allocation2 + $0x558] sm:$0xff]
    %v266 = vld [vmem:[#allocation2 + $0x560] sm:$0xff]
    %v267 = vld [vmem:[#allocation2 + $0x568] sm:$0xff]
    %v268 = vld [vmem:[#allocation2 + $0x570] sm:$0xff]
    %v269 = vld [vmem:[#allocation2 + $0x578] sm:$0xff]
    %v270 = vld [vmem:[#allocation2 + $0x580] sm:$0xff]
    %v271 = vld [vmem:[#allocation2 + $0x588] sm:$0xff]
    %v272 = vld [vmem:[#allocation2 + $0x590] sm:$0xff]
    %v273 = vld [vmem:[#allocation2 + $0x598] sm:$0xff]
    %v274 = vld [vmem:[#allocation2 + $0x5a0] sm:$0xff]
    %v275 = vld [vmem:[#allocation2 + $0x5a8] sm:$0xff]
    %v276 = vld [vmem:[#allocation2 + $0x5b0] sm:$0xff]
    %v277 = vld [vmem:[#allocation2 + $0x5b8] sm:$0xff]
    %v278 = vld [vmem:[#allocation2 + $0x5c0] sm:$0xff]
    %v279 = vld [vmem:[#allocation2 + $0x5c8] sm:$0xff]
    %v280 = vld [vmem:[#allocation2 + $0x5d0] sm:$0xff]
    %v281 = vld [vmem:[#allocation2 + $0x5d8] sm:$0xff]
    %v282 = vld [vmem:[#allocation2 + $0x5e0] sm:$0xff]
    %v283 = vld [vmem:[#allocation2 + $0x5e8] sm:$0xff]
    %v284 = vld [vmem:[#allocation2 + $0x5f0] sm:$0xff]
    %v285 = vld [vmem:[#allocation2 + $0x5f8] sm:$0xff]
    %v286 = vld [vmem:[#allocation2 + $0x600] sm:$0xff]
    %v287 = vld [vmem:[#allocation2 + $0x608] sm:$0xff]
    %v288 = vld [vmem:[#allocation2 + $0x610] sm:$0xff]
    %v289 = vld [vmem:[#allocation2 + $0x618] sm:$0xff]
    %v294 = vunpack.c.l.b16 %v89
    %v295 = vunpack.c.h.b16 %v89
    %v296 = vunpack.c.l.b16 %v90
    %v297 = vunpack.c.h.b16 %v90
    %v298 = vunpack.c.l.b16 %v91
    %v299 = vunpack.c.h.b16 %v91
    %v300 = vunpack.c.l.b16 %v92
    %v301 = vpack.c.b16 %v294, %v294
    %v302 = vpack.c.b16 %v295, %v295
    %v303 = vpack.c.b16 %v296, %v296
    %v304 = vpack.c.b16 %v297, %v297
    %v305 = vpack.c.b16 %v298, %v298
    %v306 = vpack.c.b16 %v299, %v299
    %v307 = vpack.c.b16 %v300, %v300
    %v510 = vunpack.c.l.b16 %v94
    %v511 = vunpack.c.h.b16 %v94
    %v512 = vunpack.c.l.b16 %v95
    %v513 = vunpack.c.h.b16 %v95
    %v514 = vunpack.c.l.b16 %v96
    %v515 = vunpack.c.h.b16 %v96
    %v516 = vunpack.c.l.b16 %v97
    %v517 = vunpack.c.h.b16 %v97
    %v518 = vunpack.c.l.b16 %v98
    %v519 = vunpack.c.h.b16 %v98
    %v520 = vunpack.c.l.b16 %v99
    %v521 = vunpack.c.h.b16 %v99
    %v522 = vunpack.c.l.b16 %v100
    %v523 = vunpack.c.h.b16 %v100
    %v524 = vunpack.c.l.b16 %v101
    %v525 = vunpack.c.h.b16 %v101
    %v526 = vunpack.c.l.b16 %v102
    %v527 = vunpack.c.h.b16 %v102
    %v528 = vunpack.c.l.b16 %v103
    %v529 = vunpack.c.h.b16 %v103
    %v530 = vunpack.c.l.b16 %v104
    %v531 = vunpack.c.h.b16 %v104
    %v532 = vunpack.c.l.b16 %v105
    %v533 = vunpack.c.h.b16 %v105
    %v534 = vunpack.c.l.b16 %v106
    %v535 = vunpack.c.h.b16 %v106
    %v536 = vunpack.c.l.b16 %v107
    %v537 = vunpack.c.h.b16 %v107
    %v538 = vunpack.c.l.b16 %v108
    %v539 = vunpack.c.h.b16 %v108
    %v540 = vunpack.c.l.b16 %v109
    %v541 = vunpack.c.h.b16 %v109
    %v542 = vunpack.c.l.b16 %v110
    %v543 = vunpack.c.h.b16 %v110
    %v544 = vunpack.c.l.b16 %v111
    %v545 = vunpack.c.h.b16 %v111
    %v546 = vunpack.c.l.b16 %v112
    %v547 = vunpack.c.h.b16 %v112
    %v548 = vunpack.c.l.b16 %v113
    %v549 = vunpack.c.h.b16 %v113
    %v550 = vunpack.c.l.b16 %v114
    %v551 = vunpack.c.h.b16 %v114
    %v552 = vunpack.c.l.b16 %v115
    %v553 = vunpack.c.h.b16 %v115
    %v554 = vunpack.c.l.b16 %v116
    %v555 = vunpack.c.h.b16 %v116
    %v556 = vunpack.c.l.b16 %v117
    %v557 = vunpack.c.h.b16 %v117
    %v558 = vunpack.c.l.b16 %v118
    %v559 = vunpack.c.h.b16 %v118
    %v560 = vunpack.c.l.b16 %v119
    %v561 = vunpack.c.h.b16 %v119
    %v562 = vunpack.c.l.b16 %v120
    %v563 = vunpack.c.h.b16 %v120
    %v564 = vunpack.c.l.b16 %v121
    %v565 = vunpack.c.h.b16 %v121
    %v566 = vunpack.c.l.b16 %v122
    %v567 = vunpack.c.h.b16 %v122
    %v568 = vunpack.c.l.b16 %v123
    %v569 = vunpack.c.h.b16 %v123
    %v570 = vunpack.c.l.b16 %v124
    %v571 = vunpack.c.h.b16 %v124
    %v572 = vunpack.c.l.b16 %v125
    %v573 = vunpack.c.h.b16 %v125
    %v574 = vunpack.c.l.b16 %v126
    %v575 = vunpack.c.h.b16 %v126
    %v576 = vunpack.c.l.b16 %v127
    %v577 = vunpack.c.h.b16 %v127
    %v578 = vunpack.c.l.b16 %v128
    %v579 = vunpack.c.h.b16 %v128
    %v580 = vunpack.c.l.b16 %v129
    %v581 = vunpack.c.h.b16 %v129
    %v582 = vunpack.c.l.b16 %v130
    %v583 = vunpack.c.h.b16 %v130
    %v584 = vunpack.c.l.b16 %v131
    %v585 = vunpack.c.h.b16 %v131
    %v586 = vunpack.c.l.b16 %v132
    %v587 = vunpack.c.h.b16 %v132
    %v588 = vunpack.c.l.b16 %v133
    %v589 = vunpack.c.h.b16 %v133
    %v590 = vunpack.c.l.b16 %v134
    %v591 = vunpack.c.h.b16 %v134
    %v592 = vunpack.c.l.b16 %v135
    %v593 = vunpack.c.h.b16 %v135
    %v594 = vunpack.c.l.b16 %v136
    %v595 = vunpack.c.h.b16 %v136
    %v596 = vunpack.c.l.b16 %v137
    %v597 = vunpack.c.h.b16 %v137
    %v598 = vunpack.c.l.b16 %v138
    %v599 = vunpack.c.h.b16 %v138
    %v600 = vunpack.c.l.b16 %v139
    %v601 = vunpack.c.h.b16 %v139
    %v602 = vunpack.c.l.b16 %v140
    %v603 = vunpack.c.h.b16 %v140
    %v604 = vunpack.c.l.b16 %v141
    %v605 = vunpack.c.h.b16 %v141
    %v606 = vunpack.c.l.b16 %v142
    %v607 = vunpack.c.h.b16 %v142
    %v608 = vunpack.c.l.b16 %v143
    %v609 = vunpack.c.h.b16 %v143
    %v610 = vunpack.c.l.b16 %v144
    %v611 = vunpack.c.h.b16 %v144
    %v612 = vunpack.c.l.b16 %v145
    %v613 = vunpack.c.h.b16 %v145
    %v614 = vunpack.c.l.b16 %v146
    %v615 = vunpack.c.h.b16 %v146
    %v616 = vunpack.c.l.b16 %v147
    %v617 = vunpack.c.h.b16 %v147
    %v618 = vunpack.c.l.b16 %v148
    %v619 = vunpack.c.h.b16 %v148
    %v620 = vunpack.c.l.b16 %v149
    %v621 = vunpack.c.h.b16 %v149
    %v622 = vunpack.c.l.b16 %v150
    %v623 = vunpack.c.h.b16 %v150
    %v624 = vunpack.c.l.b16 %v151
    %v625 = vunpack.c.h.b16 %v151
    %v626 = vunpack.c.l.b16 %v152
    %v627 = vunpack.c.h.b16 %v152
    %v628 = vunpack.c.l.b16 %v153
    %v629 = vunpack.c.h.b16 %v153
    %v630 = vunpack.c.l.b16 %v154
    %v631 = vunpack.c.h.b16 %v154
    %v632 = vunpack.c.l.b16 %v155
    %v633 = vunpack.c.h.b16 %v155
    %v634 = vunpack.c.l.b16 %v156
    %v635 = vunpack.c.h.b16 %v156
    %v636 = vunpack.c.l.b16 %v157
    %v637 = vunpack.c.h.b16 %v157
    %v638 = vunpack.c.l.b16 %v158
    %v639 = vunpack.c.h.b16 %v158
    %v640 = vunpack.c.l.b16 %v159
    %v641 = vunpack.c.h.b16 %v159
    %v642 = vunpack.c.l.b16 %v160
    %v643 = vunpack.c.h.b16 %v160
    %v644 = vunpack.c.l.b16 %v161
    %v645 = vunpack.c.h.b16 %v161
    %v646 = vunpack.c.l.b16 %v162
    %v647 = vunpack.c.h.b16 %v162
    %v648 = vunpack.c.l.b16 %v163
    %v649 = vunpack.c.h.b16 %v163
    %v650 = vunpack.c.l.b16 %v164
    %v651 = vunpack.c.h.b16 %v164
    %v652 = vunpack.c.l.b16 %v165
    %v653 = vunpack.c.h.b16 %v165
    %v654 = vunpack.c.l.b16 %v166
    %v655 = vunpack.c.h.b16 %v166
    %v656 = vunpack.c.l.b16 %v167
    %v657 = vunpack.c.h.b16 %v167
    %v658 = vunpack.c.l.b16 %v168
    %v659 = vunpack.c.h.b16 %v168
    %v660 = vunpack.c.l.b16 %v169
    %v661 = vunpack.c.h.b16 %v169
    %v662 = vunpack.c.l.b16 %v170
    %v663 = vunpack.c.h.b16 %v170
    %v664 = vunpack.c.l.b16 %v171
    %v665 = vunpack.c.h.b16 %v171
    %v666 = vunpack.c.l.b16 %v172
    %v667 = vunpack.c.h.b16 %v172
    %v668 = vunpack.c.l.b16 %v173
    %v669 = vunpack.c.h.b16 %v173
    %v670 = vunpack.c.l.b16 %v174
    %v671 = vunpack.c.h.b16 %v174
    %v672 = vunpack.c.l.b16 %v175
    %v673 = vunpack.c.h.b16 %v175
    %v674 = vunpack.c.l.b16 %v176
    %v675 = vunpack.c.h.b16 %v176
    %v676 = vunpack.c.l.b16 %v177
    %v677 = vunpack.c.h.b16 %v177
    %v678 = vunpack.c.l.b16 %v178
    %v679 = vunpack.c.h.b16 %v178
    %v680 = vunpack.c.l.b16 %v179
    %v681 = vunpack.c.h.b16 %v179
    %v682 = vunpack.c.l.b16 %v180
    %v683 = vunpack.c.h.b16 %v180
    %v684 = vunpack.c.l.b16 %v181
    %v685 = vunpack.c.h.b16 %v181
    %v686 = vunpack.c.l.b16 %v182
    %v687 = vunpack.c.h.b16 %v182
    %v688 = vunpack.c.l.b16 %v183
    %v689 = vunpack.c.h.b16 %v183
    %v690 = vunpack.c.l.b16 %v184
    %v691 = vunpack.c.h.b16 %v184
    %v692 = vunpack.c.l.b16 %v185
    %v693 = vunpack.c.h.b16 %v185
    %v694 = vunpack.c.l.b16 %v186
    %v695 = vunpack.c.h.b16 %v186
    %v696 = vunpack.c.l.b16 %v187
    %v697 = vunpack.c.h.b16 %v187
    %v698 = vunpack.c.l.b16 %v188
    %v699 = vunpack.c.h.b16 %v188
    %v700 = vunpack.c.l.b16 %v189
    %v701 = vunpack.c.h.b16 %v189
    %v702 = vunpack.c.l.b16 %v190
    %v703 = vunpack.c.h.b16 %v190
    %v704 = vunpack.c.l.b16 %v191
    %v705 = vunpack.c.h.b16 %v191
    %v706 = vunpack.c.l.b16 %v192
    %v707 = vunpack.c.h.b16 %v192
    %v708 = vunpack.c.l.b16 %v193
    %v709 = vunpack.c.h.b16 %v193
    %v710 = vunpack.c.l.b16 %v194
    %v711 = vunpack.c.h.b16 %v194
    %v712 = vunpack.c.l.b16 %v195
    %v713 = vunpack.c.h.b16 %v195
    %v714 = vunpack.c.l.b16 %v196
    %v715 = vunpack.c.h.b16 %v196
    %v716 = vunpack.c.l.b16 %v197
    %v717 = vunpack.c.h.b16 %v197
    %v718 = vunpack.c.l.b16 %v198
    %v719 = vunpack.c.h.b16 %v198
    %v720 = vunpack.c.l.b16 %v199
    %v721 = vunpack.c.h.b16 %v199
    %v722 = vunpack.c.l.b16 %v200
    %v723 = vunpack.c.h.b16 %v200
    %v724 = vunpack.c.l.b16 %v201
    %v725 = vunpack.c.h.b16 %v201
    %v726 = vunpack.c.l.b16 %v202
    %v727 = vunpack.c.h.b16 %v202
    %v728 = vunpack.c.l.b16 %v203
    %v729 = vunpack.c.h.b16 %v203
    %v730 = vunpack.c.l.b16 %v204
    %v731 = vunpack.c.h.b16 %v204
    %v732 = vunpack.c.l.b16 %v205
    %v733 = vunpack.c.h.b16 %v205
    %v734 = vunpack.c.l.b16 %v206
    %v735 = vunpack.c.h.b16 %v206
    %v736 = vunpack.c.l.b16 %v207
    %v737 = vunpack.c.h.b16 %v207
    %v738 = vunpack.c.l.b16 %v208
    %v739 = vunpack.c.h.b16 %v208
    %v740 = vunpack.c.l.b16 %v209
    %v741 = vunpack.c.h.b16 %v209
    %v742 = vunpack.c.l.b16 %v210
    %v743 = vunpack.c.h.b16 %v210
    %v744 = vunpack.c.l.b16 %v211
    %v745 = vunpack.c.h.b16 %v211
    %v746 = vunpack.c.l.b16 %v212
    %v747 = vunpack.c.h.b16 %v212
    %v748 = vunpack.c.l.b16 %v213
    %v749 = vunpack.c.h.b16 %v213
    %v750 = vunpack.c.l.b16 %v214
    %v751 = vunpack.c.h.b16 %v214
    %v752 = vunpack.c.l.b16 %v215
    %v753 = vunpack.c.h.b16 %v215
    %v754 = vunpack.c.l.b16 %v216
    %v755 = vunpack.c.h.b16 %v216
    %v756 = vunpack.c.l.b16 %v217
    %v757 = vunpack.c.h.b16 %v217
    %v758 = vunpack.c.l.b16 %v218
    %v759 = vunpack.c.h.b16 %v218
    %v760 = vunpack.c.l.b16 %v219
    %v761 = vunpack.c.h.b16 %v219
    %v762 = vunpack.c.l.b16 %v220
    %v763 = vunpack.c.h.b16 %v220
    %v764 = vunpack.c.l.b16 %v221
    %v765 = vunpack.c.h.b16 %v221
    %v766 = vunpack.c.l.b16 %v222
    %v767 = vunpack.c.h.b16 %v222
    %v768 = vunpack.c.l.b16 %v223
    %v769 = vunpack.c.h.b16 %v223
    %v770 = vunpack.c.l.b16 %v224
    %v771 = vunpack.c.h.b16 %v224
    %v772 = vunpack.c.l.b16 %v225
    %v773 = vunpack.c.h.b16 %v225
    %v774 = vunpack.c.l.b16 %v226
    %v775 = vunpack.c.h.b16 %v226
    %v776 = vunpack.c.l.b16 %v227
    %v777 = vunpack.c.h.b16 %v227
    %v778 = vunpack.c.l.b16 %v228
    %v779 = vunpack.c.h.b16 %v228
    %v780 = vunpack.c.l.b16 %v229
    %v781 = vunpack.c.h.b16 %v229
    %v782 = vunpack.c.l.b16 %v230
    %v783 = vunpack.c.h.b16 %v230
    %v784 = vunpack.c.l.b16 %v231
    %v785 = vunpack.c.h.b16 %v231
    %v786 = vunpack.c.l.b16 %v232
    %v787 = vunpack.c.h.b16 %v232
    %v788 = vunpack.c.l.b16 %v233
    %v789 = vunpack.c.h.b16 %v233
    %v790 = vunpack.c.l.b16 %v234
    %v791 = vunpack.c.h.b16 %v234
    %v792 = vunpack.c.l.b16 %v235
    %v793 = vunpack.c.h.b16 %v235
    %v794 = vunpack.c.l.b16 %v236
    %v795 = vunpack.c.h.b16 %v236
    %v796 = vunpack.c.l.b16 %v237
    %v797 = vunpack.c.h.b16 %v237
    %v798 = vunpack.c.l.b16 %v238
    %v799 = vunpack.c.h.b16 %v238
    %v800 = vunpack.c.l.b16 %v239
    %v801 = vunpack.c.h.b16 %v239
    %v802 = vunpack.c.l.b16 %v240
    %v803 = vunpack.c.h.b16 %v240
    %v804 = vunpack.c.l.b16 %v241
    %v805 = vunpack.c.h.b16 %v241
    %v806 = vunpack.c.l.b16 %v242
    %v807 = vunpack.c.h.b16 %v242
    %v808 = vunpack.c.l.b16 %v243
    %v809 = vunpack.c.h.b16 %v243
    %v810 = vunpack.c.l.b16 %v244
    %v811 = vunpack.c.h.b16 %v244
    %v812 = vunpack.c.l.b16 %v245
    %v813 = vunpack.c.h.b16 %v245
    %v814 = vunpack.c.l.b16 %v246
    %v815 = vunpack.c.h.b16 %v246
    %v816 = vunpack.c.l.b16 %v247
    %v817 = vunpack.c.h.b16 %v247
    %v818 = vunpack.c.l.b16 %v248
    %v819 = vunpack.c.h.b16 %v248
    %v820 = vunpack.c.l.b16 %v249
    %v821 = vunpack.c.h.b16 %v249
    %v822 = vunpack.c.l.b16 %v250
    %v823 = vunpack.c.h.b16 %v250
    %v824 = vunpack.c.l.b16 %v251
    %v825 = vunpack.c.h.b16 %v251
    %v826 = vunpack.c.l.b16 %v252
    %v827 = vunpack.c.h.b16 %v252
    %v828 = vunpack.c.l.b16 %v253
    %v829 = vunpack.c.h.b16 %v253
    %v830 = vunpack.c.l.b16 %v254
    %v831 = vunpack.c.h.b16 %v254
    %v832 = vunpack.c.l.b16 %v255
    %v833 = vunpack.c.h.b16 %v255
    %v834 = vunpack.c.l.b16 %v256
    %v835 = vunpack.c.h.b16 %v256
    %v836 = vunpack.c.l.b16 %v257
    %v837 = vunpack.c.h.b16 %v257
    %v838 = vunpack.c.l.b16 %v258
    %v839 = vunpack.c.h.b16 %v258
    %v840 = vunpack.c.l.b16 %v259
    %v841 = vunpack.c.h.b16 %v259
    %v842 = vunpack.c.l.b16 %v260
    %v843 = vunpack.c.h.b16 %v260
    %v844 = vunpack.c.l.b16 %v261
    %v845 = vunpack.c.h.b16 %v261
    %v846 = vunpack.c.l.b16 %v262
    %v847 = vunpack.c.h.b16 %v262
    %v848 = vunpack.c.l.b16 %v263
    %v849 = vunpack.c.h.b16 %v263
    %v850 = vunpack.c.l.b16 %v264
    %v851 = vunpack.c.h.b16 %v264
    %v852 = vunpack.c.l.b16 %v265
    %v853 = vunpack.c.h.b16 %v265
    %v854 = vunpack.c.l.b16 %v266
    %v855 = vunpack.c.h.b16 %v266
    %v856 = vunpack.c.l.b16 %v267
    %v857 = vunpack.c.h.b16 %v267
    %v858 = vunpack.c.l.b16 %v268
    %v859 = vunpack.c.h.b16 %v268
    %v860 = vunpack.c.l.b16 %v269
    %v861 = vunpack.c.h.b16 %v269
    %v862 = vunpack.c.l.b16 %v270
    %v863 = vunpack.c.h.b16 %v270
    %v864 = vunpack.c.l.b16 %v271
    %v865 = vunpack.c.h.b16 %v271
    %v866 = vunpack.c.l.b16 %v272
    %v867 = vunpack.c.h.b16 %v272
    %v868 = vunpack.c.l.b16 %v273
    %v869 = vunpack.c.h.b16 %v273
    %v870 = vunpack.c.l.b16 %v274
    %v871 = vunpack.c.h.b16 %v274
    %v872 = vunpack.c.l.b16 %v275
    %v873 = vunpack.c.h.b16 %v275
    %v874 = vunpack.c.l.b16 %v276
    %v875 = vunpack.c.h.b16 %v276
    %v876 = vunpack.c.l.b16 %v277
    %v877 = vunpack.c.h.b16 %v277
    %v878 = vunpack.c.l.b16 %v278
    %v879 = vunpack.c.h.b16 %v278
    %v880 = vunpack.c.l.b16 %v279
    %v881 = vunpack.c.h.b16 %v279
    %v882 = vunpack.c.l.b16 %v280
    %v883 = vunpack.c.h.b16 %v280
    %v884 = vunpack.c.l.b16 %v281
    %v885 = vunpack.c.h.b16 %v281
    %v886 = vunpack.c.l.b16 %v282
    %v887 = vunpack.c.h.b16 %v282
    %v888 = vunpack.c.l.b16 %v283
    %v889 = vunpack.c.h.b16 %v283
    %v890 = vunpack.c.l.b16 %v284
    %v891 = vunpack.c.h.b16 %v284
    %v892 = vunpack.c.l.b16 %v285
    %v893 = vunpack.c.h.b16 %v285
    %v894 = vunpack.c.l.b16 %v286
    %v895 = vunpack.c.h.b16 %v286
    %v896 = vunpack.c.l.b16 %v287
    %v897 = vunpack.c.h.b16 %v287
    %v898 = vunpack.c.l.b16 %v288
    %v899 = vunpack.c.h.b16 %v288
    %v900 = vunpack.c.l.b16 %v289
    %v901 = vunpack.c.h.b16 %v289
    %v902 = vpack.c.b16 %v514, %v510
    %v903 = vpack.c.b16 %v515, %v511
    %v904 = vpack.c.b16 %v516, %v512
    %v905 = vpack.c.b16 %v517, %v513
    %v906 = vpack.c.b16 %v522, %v518
    %v907 = vpack.c.b16 %v523, %v519
    %v908 = vpack.c.b16 %v524, %v520
    %v909 = vpack.c.b16 %v525, %v521
    %v910 = vpack.c.b16 %v530, %v526
    %v911 = vpack.c.b16 %v531, %v527
    %v912 = vpack.c.b16 %v532, %v528
    %v913 = vpack.c.b16 %v533, %v529
    %v914 = vpack.c.b16 %v538, %v534
    %v915 = vpack.c.b16 %v539, %v535
    %v916 = vpack.c.b16 %v540, %v536
    %v917 = vpack.c.b16 %v541, %v537
    %v918 = vpack.c.b16 %v546, %v542
    %v919 = vpack.c.b16 %v547, %v543
    %v920 = vpack.c.b16 %v548, %v544
    %v921 = vpack.c.b16 %v549, %v545
    %v922 = vpack.c.b16 %v554, %v550
    %v923 = vpack.c.b16 %v555, %v551
    %v924 = vpack.c.b16 %v556, %v552
    %v925 = vpack.c.b16 %v557, %v553
    %v926 = vpack.c.b16 %v562, %v558
    %v927 = vpack.c.b16 %v563, %v559
    %v928 = vpack.c.b16 %v564, %v560
    %v929 = vpack.c.b16 %v565, %v561
    %v930 = vpack.c.b16 %v570, %v566
    %v931 = vpack.c.b16 %v571, %v567
    %v932 = vpack.c.b16 %v572, %v568
    %v933 = vpack.c.b16 %v573, %v569
    %v934 = vpack.c.b16 %v578, %v574
    %v935 = vpack.c.b16 %v579, %v575
    %v936 = vpack.c.b16 %v580, %v576
    %v937 = vpack.c.b16 %v581, %v577
    %v938 = vpack.c.b16 %v586, %v582
    %v939 = vpack.c.b16 %v587, %v583
    %v940 = vpack.c.b16 %v588, %v584
    %v941 = vpack.c.b16 %v589, %v585
    %v942 = vpack.c.b16 %v594, %v590
    %v943 = vpack.c.b16 %v595, %v591
    %v944 = vpack.c.b16 %v596, %v592
    %v945 = vpack.c.b16 %v597, %v593
    %v946 = vpack.c.b16 %v602, %v598
    %v947 = vpack.c.b16 %v603, %v599
    %v948 = vpack.c.b16 %v604, %v600
    %v949 = vpack.c.b16 %v605, %v601
    %v950 = vpack.c.b16 %v610, %v606
    %v951 = vpack.c.b16 %v611, %v607
    %v952 = vpack.c.b16 %v612, %v608
    %v953 = vpack.c.b16 %v613, %v609
    %v954 = vpack.c.b16 %v618, %v614
    %v955 = vpack.c.b16 %v619, %v615
    %v956 = vpack.c.b16 %v620, %v616
    %v957 = vpack.c.b16 %v621, %v617
    %v958 = vpack.c.b16 %v626, %v622
    %v959 = vpack.c.b16 %v627, %v623
    %v960 = vpack.c.b16 %v628, %v624
    %v961 = vpack.c.b16 %v629, %v625
    %v962 = vpack.c.b16 %v634, %v630
    %v963 = vpack.c.b16 %v635, %v631
    %v964 = vpack.c.b16 %v636, %v632
    %v965 = vpack.c.b16 %v637, %v633
    %v966 = vpack.c.b16 %v642, %v638
    %v967 = vpack.c.b16 %v643, %v639
    %v968 = vpack.c.b16 %v644, %v640
    %v969 = vpack.c.b16 %v645, %v641
    %v970 = vpack.c.b16 %v650, %v646
    %v971 = vpack.c.b16 %v651, %v647
    %v972 = vpack.c.b16 %v652, %v648
    %v973 = vpack.c.b16 %v653, %v649
    %v974 = vpack.c.b16 %v658, %v654
    %v975 = vpack.c.b16 %v659, %v655
    %v976 = vpack.c.b16 %v660, %v656
    %v977 = vpack.c.b16 %v661, %v657
    %v978 = vpack.c.b16 %v666, %v662
    %v979 = vpack.c.b16 %v667, %v663
    %v980 = vpack.c.b16 %v668, %v664
    %v981 = vpack.c.b16 %v669, %v665
    %v982 = vpack.c.b16 %v674, %v670
    %v983 = vpack.c.b16 %v675, %v671
    %v984 = vpack.c.b16 %v676, %v672
    %v985 = vpack.c.b16 %v677, %v673
    %v986 = vpack.c.b16 %v682, %v678
    %v987 = vpack.c.b16 %v683, %v679
    %v988 = vpack.c.b16 %v684, %v680
    %v989 = vpack.c.b16 %v685, %v681
    %v990 = vpack.c.b16 %v690, %v686
    %v991 = vpack.c.b16 %v691, %v687
    %v992 = vpack.c.b16 %v692, %v688
    %v993 = vpack.c.b16 %v693, %v689
    %v994 = vpack.c.b16 %v698, %v694
    %v995 = vpack.c.b16 %v699, %v695
    %v996 = vpack.c.b16 %v700, %v696
    %v997 = vpack.c.b16 %v701, %v697
    %v998 = vpack.c.b16 %v706, %v702
    %v999 = vpack.c.b16 %v707, %v703
    %v1000 = vpack.c.b16 %v708, %v704
    %v1001 = vpack.c.b16 %v709, %v705
    %v1002 = vpack.c.b16 %v714, %v710
    %v1003 = vpack.c.b16 %v715, %v711
    %v1004 = vpack.c.b16 %v716, %v712
    %v1005 = vpack.c.b16 %v717, %v713
    %v1006 = vpack.c.b16 %v722, %v718
    %v1007 = vpack.c.b16 %v723, %v719
    %v1008 = vpack.c.b16 %v724, %v720
    %v1009 = vpack.c.b16 %v725, %v721
    %v1010 = vpack.c.b16 %v730, %v726
    %v1011 = vpack.c.b16 %v731, %v727
    %v1012 = vpack.c.b16 %v732, %v728
    %v1013 = vpack.c.b16 %v733, %v729
    %v1014 = vpack.c.b16 %v738, %v734
    %v1015 = vpack.c.b16 %v739, %v735
    %v1016 = vpack.c.b16 %v740, %v736
    %v1017 = vpack.c.b16 %v741, %v737
    %v1018 = vpack.c.b16 %v746, %v742
    %v1019 = vpack.c.b16 %v747, %v743
    %v1020 = vpack.c.b16 %v748, %v744
    %v1021 = vpack.c.b16 %v749, %v745
    %v1022 = vpack.c.b16 %v754, %v750
    %v1023 = vpack.c.b16 %v755, %v751
    %v1024 = vpack.c.b16 %v756, %v752
    %v1025 = vpack.c.b16 %v757, %v753
    %v1026 = vpack.c.b16 %v762, %v758
    %v1027 = vpack.c.b16 %v763, %v759
    %v1028 = vpack.c.b16 %v764, %v760
    %v1029 = vpack.c.b16 %v765, %v761
    %v1030 = vpack.c.b16 %v770, %v766
    %v1031 = vpack.c.b16 %v771, %v767
    %v1032 = vpack.c.b16 %v772, %v768
    %v1033 = vpack.c.b16 %v773, %v769
    %v1034 = vpack.c.b16 %v778, %v774
    %v1035 = vpack.c.b16 %v779, %v775
    %v1036 = vpack.c.b16 %v780, %v776
    %v1037 = vpack.c.b16 %v781, %v777
    %v1038 = vpack.c.b16 %v786, %v782
    %v1039 = vpack.c.b16 %v787, %v783
    %v1040 = vpack.c.b16 %v788, %v784
    %v1041 = vpack.c.b16 %v789, %v785
    %v1042 = vpack.c.b16 %v794, %v790
    %v1043 = vpack.c.b16 %v795, %v791
    %v1044 = vpack.c.b16 %v796, %v792
    %v1045 = vpack.c.b16 %v797, %v793
    %v1046 = vpack.c.b16 %v802, %v798
    %v1047 = vpack.c.b16 %v803, %v799
    %v1048 = vpack.c.b16 %v804, %v800
    %v1049 = vpack.c.b16 %v805, %v801
    %v1050 = vpack.c.b16 %v810, %v806
    %v1051 = vpack.c.b16 %v811, %v807
    %v1052 = vpack.c.b16 %v812, %v808
    %v1053 = vpack.c.b16 %v813, %v809
    %v1054 = vpack.c.b16 %v818, %v814
    %v1055 = vpack.c.b16 %v819, %v815
    %v1056 = vpack.c.b16 %v820, %v816
    %v1057 = vpack.c.b16 %v821, %v817
    %v1058 = vpack.c.b16 %v826, %v822
    %v1059 = vpack.c.b16 %v827, %v823
    %v1060 = vpack.c.b16 %v828, %v824
    %v1061 = vpack.c.b16 %v829, %v825
    %v1062 = vpack.c.b16 %v834, %v830
    %v1063 = vpack.c.b16 %v835, %v831
    %v1064 = vpack.c.b16 %v836, %v832
    %v1065 = vpack.c.b16 %v837, %v833
    %v1066 = vpack.c.b16 %v842, %v838
    %v1067 = vpack.c.b16 %v843, %v839
    %v1068 = vpack.c.b16 %v844, %v840
    %v1069 = vpack.c.b16 %v845, %v841
    %v1070 = vpack.c.b16 %v850, %v846
    %v1071 = vpack.c.b16 %v851, %v847
    %v1072 = vpack.c.b16 %v852, %v848
    %v1073 = vpack.c.b16 %v853, %v849
    %v1074 = vpack.c.b16 %v858, %v854
    %v1075 = vpack.c.b16 %v859, %v855
    %v1076 = vpack.c.b16 %v860, %v856
    %v1077 = vpack.c.b16 %v861, %v857
    %v1078 = vpack.c.b16 %v866, %v862
    %v1079 = vpack.c.b16 %v867, %v863
    %v1080 = vpack.c.b16 %v868, %v864
    %v1081 = vpack.c.b16 %v869, %v865
    %v1082 = vpack.c.b16 %v874, %v870
    %v1083 = vpack.c.b16 %v875, %v871
    %v1084 = vpack.c.b16 %v876, %v872
    %v1085 = vpack.c.b16 %v877, %v873
    %v1086 = vpack.c.b16 %v882, %v878
    %v1087 = vpack.c.b16 %v883, %v879
    %v1088 = vpack.c.b16 %v884, %v880
    %v1089 = vpack.c.b16 %v885, %v881
    %v1090 = vpack.c.b16 %v890, %v886
    %v1091 = vpack.c.b16 %v891, %v887
    %v1092 = vpack.c.b16 %v892, %v888
    %v1093 = vpack.c.b16 %v893, %v889
    %v1094 = vpack.c.b16 %v898, %v894
    %v1095 = vpack.c.b16 %v899, %v895
    %v1096 = vpack.c.b16 %v900, %v896
    %v1097 = vpack.c.b16 %v901, %v897
    %vm1294 = vcmask 130048
    %v1296 = vsel %vm1294, %v307, 0
    %1298 = vmatprep.subr.bf16.mxu0 %v931
    %1299 = vmatpush1.bf16.msra.mxu0 %v930
    %1300 = vmatprep.subr.bf16.mxu0 %v927
    %1301 = vmatpush1.bf16.msra.mxu0 %v926
    %1302 = vmatprep.subr.bf16.mxu0 %v923
    %1303 = vmatpush1.bf16.msra.mxu0 %v922
    %1304 = vmatprep.subr.bf16.mxu0 %v919
    %1305 = vmatpush1.bf16.msra.mxu0 %v918
    %1306 = vmatprep.subr.bf16.mxu0 %v915
    %1307 = vmatpush1.bf16.msra.mxu0 %v914
    %1308 = vmatprep.subr.bf16.mxu0 %v911
    %1309 = vmatpush1.bf16.msra.mxu0 %v910
    %1310 = vmatprep.subr.bf16.mxu0 %v907
    %1311 = vmatpush1.bf16.msra.mxu0 %v906
    %1312 = vmatprep.subr.bf16.mxu0 %v903
    %1313 = vmatpush1.bf16.msra.mxu0 %v902
    %1314 = vmatprep.subr.bf16.mxu0 %v963
    %1315 = vmatpush2.bf16.msra.mxu0 %v962
    %1316 = vmatprep.subr.bf16.mxu0 %v959
    %1317 = vmatpush2.bf16.msra.mxu0 %v958
    %1318 = vmatprep.subr.bf16.mxu0 %v955
    %1319 = vmatpush2.bf16.msra.mxu0 %v954
    %1320 = vmatprep.subr.bf16.mxu0 %v951
    %1321 = vmatpush2.bf16.msra.mxu0 %v950
    %1322 = vmatprep.subr.bf16.mxu0 %v947
    %1323 = vmatpush2.bf16.msra.mxu0 %v946
    %1324 = vmatprep.subr.bf16.mxu0 %v943
    %1325 = vmatpush2.bf16.msra.mxu0 %v942
    %1326 = vmatprep.subr.bf16.mxu0 %v939
    %1327 = vmatpush2.bf16.msra.mxu0 %v938
    %1328 = vmatprep.subr.bf16.mxu0 %v935
    %1329 = vmatpush2.bf16.msra.mxu0 %v934
    %1330 = vmatprep.mubr.bf16.mxu0 %v302
    %1331 = vmatmul.mubr.bf16.gmra.mxu0 %v301
    %v1332 = vpop.f32.mrf.mxu0
    %v1333 = vadd.f32 0.0, %v1332
    %v1334 = vpop.f32.mrf.mxu0
    %v1335 = vadd.f32 0.0, %v1334
    %v1336 = vpop.f32.mrf.mxu0
    %v1337 = vpop.f32.mrf.mxu0
    %1338 = vdwg.mxu0
    %1339 = vmatprep.subr.bf16.mxu0 %v995
    %1340 = vmatpush1.bf16.msra.mxu0 %v994
    %1341 = vmatprep.subr.bf16.mxu0 %v991
    %1342 = vmatpush1.bf16.msra.mxu0 %v990
    %1343 = vmatprep.subr.bf16.mxu0 %v987
    %1344 = vmatpush1.bf16.msra.mxu0 %v986
    %1345 = vmatprep.subr.bf16.mxu0 %v983
    %1346 = vmatpush1.bf16.msra.mxu0 %v982
    %1347 = vmatprep.subr.bf16.mxu0 %v979
    %1348 = vmatpush1.bf16.msra.mxu0 %v978
    %1349 = vmatprep.subr.bf16.mxu0 %v975
    %1350 = vmatpush1.bf16.msra.mxu0 %v974
    %1351 = vmatprep.subr.bf16.mxu0 %v971
    %1352 = vmatpush1.bf16.msra.mxu0 %v970
    %1353 = vmatprep.subr.bf16.mxu0 %v967
    %1354 = vmatpush1.bf16.msra.mxu0 %v966
    %1355 = vmatprep.subr.bf16.mxu0 %v1027
    %1356 = vmatpush2.bf16.msra.mxu0 %v1026
    %1357 = vmatprep.subr.bf16.mxu0 %v1023
    %1358 = vmatpush2.bf16.msra.mxu0 %v1022
    %1359 = vmatprep.subr.bf16.mxu0 %v1019
    %1360 = vmatpush2.bf16.msra.mxu0 %v1018
    %1361 = vmatprep.subr.bf16.mxu0 %v1015
    %1362 = vmatpush2.bf16.msra.mxu0 %v1014
    %1363 = vmatprep.subr.bf16.mxu0 %v1011
    %1364 = vmatpush2.bf16.msra.mxu0 %v1010
    %1365 = vmatprep.subr.bf16.mxu0 %v1007
    %1366 = vmatpush2.bf16.msra.mxu0 %v1006
    %1367 = vmatprep.subr.bf16.mxu0 %v1003
    %1368 = vmatpush2.bf16.msra.mxu0 %v1002
    %1369 = vmatprep.subr.bf16.mxu0 %v999
    %1370 = vmatpush2.bf16.msra.mxu0 %v998
    %1371 = vmatprep.mubr.bf16.mxu0 %v304
    %1372 = vmatmul.mubr.bf16.gmra.mxu0 %v303
    %v1373 = vpop.f32.mrf.mxu0
    %v1374 = vadd.f32 %v1333, %v1373
    %v1375 = vpop.f32.mrf.mxu0
    %v1376 = vadd.f32 %v1335, %v1375
    %v1377 = vpop.f32.mrf.mxu0
    %v1378 = vpop.f32.mrf.mxu0
    %1379 = vdwg.mxu0
    %1380 = vmatprep.subr.bf16.mxu0 %v1059
    %1381 = vmatpush1.bf16.msra.mxu0 %v1058
    %1382 = vmatprep.subr.bf16.mxu0 %v1055
    %1383 = vmatpush1.bf16.msra.mxu0 %v1054
    %1384 = vmatprep.subr.bf16.mxu0 %v1051
    %1385 = vmatpush1.bf16.msra.mxu0 %v1050
    %1386 = vmatprep.subr.bf16.mxu0 %v1047
    %1387 = vmatpush1.bf16.msra.mxu0 %v1046
    %1388 = vmatprep.subr.bf16.mxu0 %v1043
    %1389 = vmatpush1.bf16.msra.mxu0 %v1042
    %1390 = vmatprep.subr.bf16.mxu0 %v1039
    %1391 = vmatpush1.bf16.msra.mxu0 %v1038
    %1392 = vmatprep.subr.bf16.mxu0 %v1035
    %1393 = vmatpush1.bf16.msra.mxu0 %v1034
    %1394 = vmatprep.subr.bf16.mxu0 %v1031
    %1395 = vmatpush1.bf16.msra.mxu0 %v1030
    %1396 = vmatprep.subr.bf16.mxu0 %v1091
    %1397 = vmatpush2.bf16.msra.mxu0 %v1090
    %1398 = vmatprep.subr.bf16.mxu0 %v1087
    %1399 = vmatpush2.bf16.msra.mxu0 %v1086
    %1400 = vmatprep.subr.bf16.mxu0 %v1083
    %1401 = vmatpush2.bf16.msra.mxu0 %v1082
    %1402 = vmatprep.subr.bf16.mxu0 %v1079
    %1403 = vmatpush2.bf16.msra.mxu0 %v1078
    %1404 = vmatprep.subr.bf16.mxu0 %v1075
    %1405 = vmatpush2.bf16.msra.mxu0 %v1074
    %1406 = vmatprep.subr.bf16.mxu0 %v1071
    %1407 = vmatpush2.bf16.msra.mxu0 %v1070
    %1408 = vmatprep.subr.bf16.mxu0 %v1067
    %1409 = vmatpush2.bf16.msra.mxu0 %v1066
    %1410 = vmatprep.subr.bf16.mxu0 %v1063
    %1411 = vmatpush2.bf16.msra.mxu0 %v1062
    %1412 = vmatprep.mubr.bf16.mxu0 %v306
    %1413 = vmatmul.mubr.bf16.gmra.mxu0 %v305
    %v1414 = vpop.f32.mrf.mxu0
    %v1415 = vadd.f32 %v1374, %v1414
    %v1416 = vpop.f32.mrf.mxu0
    %v1417 = vadd.f32 %v1376, %v1416
    %v1418 = vpop.f32.mrf.mxu0
    %v1419 = vpop.f32.mrf.mxu0
    %1420 = vdwg.mxu0
    %1421 = vmatprep.subr.bf16.mxu0 0
    %1422 = vmatpush1.bf16.msra.mxu0 0
    %1423 = vmatprep.subr.bf16.mxu0 0
    %1424 = vmatpush1.bf16.msra.mxu0 0
    %1425 = vmatprep.subr.bf16.mxu0 0
    %1426 = vmatpush1.bf16.msra.mxu0 0
    %1427 = vmatprep.subr.bf16.mxu0 0
    %1428 = vmatpush1.bf16.msra.mxu0 0
    %1429 = vmatprep.subr.bf16.mxu0 0
    %1430 = vmatpush1.bf16.msra.mxu0 0
    %1431 = vmatprep.subr.bf16.mxu0 0
    %1432 = vmatpush1.bf16.msra.mxu0 0
    %1433 = vmatprep.subr.bf16.mxu0 0
    %1434 = vmatpush1.bf16.msra.mxu0 0
    %1435 = vmatprep.subr.bf16.mxu0 %v1095
    %1436 = vmatpush1.bf16.msra.mxu0 %v1094
    %1437 = vmatprep.subr.bf16.mxu0 0
    %1438 = vmatpush2.bf16.msra.mxu0 0
    %1439 = vmatprep.subr.bf16.mxu0 0
    %1440 = vmatpush2.bf16.msra.mxu0 0
    %1441 = vmatprep.subr.bf16.mxu0 0
    %1442 = vmatpush2.bf16.msra.mxu0 0
    %1443 = vmatprep.subr.bf16.mxu0 0
    %1444 = vmatpush2.bf16.msra.mxu0 0
    %1445 = vmatprep.subr.bf16.mxu0 0
    %1446 = vmatpush2.bf16.msra.mxu0 0
    %1447 = vmatprep.subr.bf16.mxu0 0
    %1448 = vmatpush2.bf16.msra.mxu0 0
    %1449 = vmatprep.subr.bf16.mxu0 0
    %1450 = vmatpush2.bf16.msra.mxu0 0
    %1451 = vmatprep.subr.bf16.mxu0 0
    %1452 = vmatpush2.bf16.msra.mxu0 0
    %1453 = vmatprep.mubr.bf16.mxu0 0
    %1454 = vmatmul.mubr.bf16.gmra.mxu0 %v1296
    %v1455 = vpop.f32.mrf.mxu0
    %v1456 = vadd.f32 %v1415, %v1455
    %v1457 = vpop.f32.mrf.mxu0
    %v1458 = vadd.f32 %v1417, %v1457
    %v1459 = vpop.f32.mrf.mxu0
    %v1460 = vpop.f32.mrf.mxu0
    %1461 = vdwg.mxu0
    %1462 = vmatprep.subr.bf16.mxu0 %v933
    %1463 = vmatpush1.bf16.msra.mxu0 %v932
    %1464 = vmatprep.subr.bf16.mxu0 %v929
    %1465 = vmatpush1.bf16.msra.mxu0 %v928
    %1466 = vmatprep.subr.bf16.mxu0 %v925
    %1467 = vmatpush1.bf16.msra.mxu0 %v924
    %1468 = vmatprep.subr.bf16.mxu0 %v921
    %1469 = vmatpush1.bf16.msra.mxu0 %v920
    %1470 = vmatprep.subr.bf16.mxu0 %v917
    %1471 = vmatpush1.bf16.msra.mxu0 %v916
    %1472 = vmatprep.subr.bf16.mxu0 %v913
    %1473 = vmatpush1.bf16.msra.mxu0 %v912
    %1474 = vmatprep.subr.bf16.mxu0 %v909
    %1475 = vmatpush1.bf16.msra.mxu0 %v908
    %1476 = vmatprep.subr.bf16.mxu0 %v905
    %1477 = vmatpush1.bf16.msra.mxu0 %v904
    %1478 = vmatprep.subr.bf16.mxu0 %v965
    %1479 = vmatpush2.bf16.msra.mxu0 %v964
    %1480 = vmatprep.subr.bf16.mxu0 %v961
    %1481 = vmatpush2.bf16.msra.mxu0 %v960
    %1482 = vmatprep.subr.bf16.mxu0 %v957
    %1483 = vmatpush2.bf16.msra.mxu0 %v956
    %1484 = vmatprep.subr.bf16.mxu0 %v953
    %1485 = vmatpush2.bf16.msra.mxu0 %v952
    %1486 = vmatprep.subr.bf16.mxu0 %v949
    %1487 = vmatpush2.bf16.msra.mxu0 %v948
    %1488 = vmatprep.subr.bf16.mxu0 %v945
    %1489 = vmatpush2.bf16.msra.mxu0 %v944
    %1490 = vmatprep.subr.bf16.mxu0 %v941
    %1491 = vmatpush2.bf16.msra.mxu0 %v940
    %1492 = vmatprep.subr.bf16.mxu0 %v937
    %1493 = vmatpush2.bf16.msra.mxu0 %v936
    %1494 = vmatprep.mubr.bf16.mxu0 %v302
    %1495 = vmatmul.mubr.bf16.gmra.mxu0 %v301
    %v1496 = vpop.f32.mrf.mxu0
    %v1497 = vadd.f32 0.0, %v1496
    %v1498 = vpop.f32.mrf.mxu0
    %v1499 = vadd.f32 0.0, %v1498
    %v1500 = vpop.f32.mrf.mxu0
    %v1501 = vpop.f32.mrf.mxu0
    %1502 = vdwg.mxu0
    %1503 = vmatprep.subr.bf16.mxu0 %v997
    %1504 = vmatpush1.bf16.msra.mxu0 %v996
    %1505 = vmatprep.subr.bf16.mxu0 %v993
    %1506 = vmatpush1.bf16.msra.mxu0 %v992
    %1507 = vmatprep.subr.bf16.mxu0 %v989
    %1508 = vmatpush1.bf16.msra.mxu0 %v988
    %1509 = vmatprep.subr.bf16.mxu0 %v985
    %1510 = vmatpush1.bf16.msra.mxu0 %v984
    %1511 = vmatprep.subr.bf16.mxu0 %v981
    %1512 = vmatpush1.bf16.msra.mxu0 %v980
    %1513 = vmatprep.subr.bf16.mxu0 %v977
    %1514 = vmatpush1.bf16.msra.mxu0 %v976
    %1515 = vmatprep.subr.bf16.mxu0 %v973
    %1516 = vmatpush1.bf16.msra.mxu0 %v972
    %1517 = vmatprep.subr.bf16.mxu0 %v969
    %1518 = vmatpush1.bf16.msra.mxu0 %v968
    %1519 = vmatprep.subr.bf16.mxu0 %v1029
    %1520 = vmatpush2.bf16.msra.mxu0 %v1028
    %1521 = vmatprep.subr.bf16.mxu0 %v1025
    %1522 = vmatpush2.bf16.msra.mxu0 %v1024
    %1523 = vmatprep.subr.bf16.mxu0 %v1021
    %1524 = vmatpush2.bf16.msra.mxu0 %v1020
    %1525 = vmatprep.subr.bf16.mxu0 %v1017
    %1526 = vmatpush2.bf16.msra.mxu0 %v1016
    %1527 = vmatprep.subr.bf16.mxu0 %v1013
    %1528 = vmatpush2.bf16.msra.mxu0 %v1012
    %1529 = vmatprep.subr.bf16.mxu0 %v1009
    %1530 = vmatpush2.bf16.msra.mxu0 %v1008
    %1531 = vmatprep.subr.bf16.mxu0 %v1005
    %1532 = vmatpush2.bf16.msra.mxu0 %v1004
    %1533 = vmatprep.subr.bf16.mxu0 %v1001
    %1534 = vmatpush2.bf16.msra.mxu0 %v1000
    %1535 = vmatprep.mubr.bf16.mxu0 %v304
    %1536 = vmatmul.mubr.bf16.gmra.mxu0 %v303
    %v1537 = vpop.f32.mrf.mxu0
    %v1538 = vadd.f32 %v1497, %v1537
    %v1539 = vpop.f32.mrf.mxu0
    %v1540 = vadd.f32 %v1499, %v1539
    %v1541 = vpop.f32.mrf.mxu0
    %v1542 = vpop.f32.mrf.mxu0
    %1543 = vdwg.mxu0
    %1544 = vmatprep.subr.bf16.mxu0 %v1061
    %1545 = vmatpush1.bf16.msra.mxu0 %v1060
    %1546 = vmatprep.subr.bf16.mxu0 %v1057
    %1547 = vmatpush1.bf16.msra.mxu0 %v1056
    %1548 = vmatprep.subr.bf16.mxu0 %v1053
    %1549 = vmatpush1.bf16.msra.mxu0 %v1052
    %1550 = vmatprep.subr.bf16.mxu0 %v1049
    %1551 = vmatpush1.bf16.msra.mxu0 %v1048
    %1552 = vmatprep.subr.bf16.mxu0 %v1045
    %1553 = vmatpush1.bf16.msra.mxu0 %v1044
    %1554 = vmatprep.subr.bf16.mxu0 %v1041
    %1555 = vmatpush1.bf16.msra.mxu0 %v1040
    %1556 = vmatprep.subr.bf16.mxu0 %v1037
    %1557 = vmatpush1.bf16.msra.mxu0 %v1036
    %1558 = vmatprep.subr.bf16.mxu0 %v1033
    %1559 = vmatpush1.bf16.msra.mxu0 %v1032
    %1560 = vmatprep.subr.bf16.mxu0 %v1093
    %1561 = vmatpush2.bf16.msra.mxu0 %v1092
    %1562 = vmatprep.subr.bf16.mxu0 %v1089
    %1563 = vmatpush2.bf16.msra.mxu0 %v1088
    %1564 = vmatprep.subr.bf16.mxu0 %v1085
    %1565 = vmatpush2.bf16.msra.mxu0 %v1084
    %1566 = vmatprep.subr.bf16.mxu0 %v1081
    %1567 = vmatpush2.bf16.msra.mxu0 %v1080
    %1568 = vmatprep.subr.bf16.mxu0 %v1077
    %1569 = vmatpush2.bf16.msra.mxu0 %v1076
    %1570 = vmatprep.subr.bf16.mxu0 %v1073
    %1571 = vmatpush2.bf16.msra.mxu0 %v1072
    %1572 = vmatprep.subr.bf16.mxu0 %v1069
    %1573 = vmatpush2.bf16.msra.mxu0 %v1068
    %1574 = vmatprep.subr.bf16.mxu0 %v1065
    %1575 = vmatpush2.bf16.msra.mxu0 %v1064
    %1576 = vmatprep.mubr.bf16.mxu0 %v306
    %1577 = vmatmul.mubr.bf16.gmra.mxu0 %v305
    %v1578 = vpop.f32.mrf.mxu0
    %v1579 = vadd.f32 %v1538, %v1578
    %v1580 = vpop.f32.mrf.mxu0
    %v1581 = vadd.f32 %v1540, %v1580
    %v1582 = vpop.f32.mrf.mxu0
    %v1583 = vpop.f32.mrf.mxu0
    %1584 = vdwg.mxu0
    %1585 = vmatprep.subr.bf16.mxu0 0
    %1586 = vmatpush1.bf16.msra.mxu0 0
    %1587 = vmatprep.subr.bf16.mxu0 0
    %1588 = vmatpush1.bf16.msra.mxu0 0
    %1589 = vmatprep.subr.bf16.mxu0 0
    %1590 = vmatpush1.bf16.msra.mxu0 0
    %1591 = vmatprep.subr.bf16.mxu0 0
    %1592 = vmatpush1.bf16.msra.mxu0 0
    %1593 = vmatprep.subr.bf16.mxu0 0
    %1594 = vmatpush1.bf16.msra.mxu0 0
    %1595 = vmatprep.subr.bf16.mxu0 0
    %1596 = vmatpush1.bf16.msra.mxu0 0
    %1597 = vmatprep.subr.bf16.mxu0 0
    %1598 = vmatpush1.bf16.msra.mxu0 0
    %1599 = vmatprep.subr.bf16.mxu0 %v1097
    %1600 = vmatpush1.bf16.msra.mxu0 %v1096
    %1601 = vmatprep.subr.bf16.mxu0 0
    %1602 = vmatpush2.bf16.msra.mxu0 0
    %1603 = vmatprep.subr.bf16.mxu0 0
    %1604 = vmatpush2.bf16.msra.mxu0 0
    %1605 = vmatprep.subr.bf16.mxu0 0
    %1606 = vmatpush2.bf16.msra.mxu0 0
    %1607 = vmatprep.subr.bf16.mxu0 0
    %1608 = vmatpush2.bf16.msra.mxu0 0
    %1609 = vmatprep.subr.bf16.mxu0 0
    %1610 = vmatpush2.bf16.msra.mxu0 0
    %1611 = vmatprep.subr.bf16.mxu0 0
    %1612 = vmatpush2.bf16.msra.mxu0 0
    %1613 = vmatprep.subr.bf16.mxu0 0
    %1614 = vmatpush2.bf16.msra.mxu0 0
    %1615 = vmatprep.subr.bf16.mxu0 0
    %1616 = vmatpush2.bf16.msra.mxu0 0
    %1617 = vmatprep.mubr.bf16.mxu0 0
    %1618 = vmatmul.mubr.bf16.gmra.mxu0 %v1296
    %v1619 = vpop.f32.mrf.mxu0
    %v1620 = vadd.f32 %v1579, %v1619
    %v1621 = vpop.f32.mrf.mxu0
    %v1622 = vadd.f32 %v1581, %v1621
    %v1623 = vpop.f32.mrf.mxu0
    %v1624 = vpop.f32.mrf.mxu0
    %1625 = vdwg.mxu0
    %s1626 = scalar_lea.vmem [#allocation2], 1568
    %v1627 = vld [vmem:[%s1626] sm:$0xff]
    %v1628 = vld [vmem:[%s1626 + $0x8] sm:$0xff]
    %v1629 = vld [vmem:[%s1626 + $0x10] sm:$0xff]
    %v1630 = vld [vmem:[%s1626 + $0x18] sm:$0xff]
    %v1631 = vld [vmem:[%s1626 + $0x20] sm:$0xff]
    %v1632 = vld [vmem:[%s1626 + $0x28] sm:$0xff]
    %v1633 = vld [vmem:[%s1626 + $0x30] sm:$0xff]
    %v1634 = vld [vmem:[%s1626 + $0x38] sm:$0xff]
    %v1635 = vld [vmem:[%s1626 + $0x40] sm:$0xff]
    %v1636 = vld [vmem:[%s1626 + $0x48] sm:$0xff]
    %v1637 = vld [vmem:[%s1626 + $0x50] sm:$0xff]
    %v1638 = vld [vmem:[%s1626 + $0x58] sm:$0xff]
    %v1639 = vld [vmem:[%s1626 + $0x60] sm:$0xff]
    %v1640 = vld [vmem:[%s1626 + $0x68] sm:$0xff]
    %v1641 = vld [vmem:[%s1626 + $0x70] sm:$0xff]
    %v1642 = vld [vmem:[%s1626 + $0x78] sm:$0xff]
    %v1643 = vld [vmem:[%s1626 + $0x80] sm:$0xff]
    %v1644 = vld [vmem:[%s1626 + $0x88] sm:$0xff]
    %v1645 = vld [vmem:[%s1626 + $0x90] sm:$0xff]
    %v1646 = vld [vmem:[%s1626 + $0x98] sm:$0xff]
    %v1647 = vld [vmem:[%s1626 + $0xa0] sm:$0xff]
    %v1648 = vld [vmem:[%s1626 + $0xa8] sm:$0xff]
    %v1649 = vld [vmem:[%s1626 + $0xb0] sm:$0xff]
    %v1650 = vld [vmem:[%s1626 + $0xb8] sm:$0xff]
    %v1651 = vld [vmem:[%s1626 + $0xc0] sm:$0xff]
    %v1652 = vld [vmem:[%s1626 + $0xc8] sm:$0xff]
    %v1653 = vld [vmem:[%s1626 + $0xd0] sm:$0xff]
    %v1654 = vld [vmem:[%s1626 + $0xd8] sm:$0xff]
    %v1655 = vld [vmem:[%s1626 + $0xe0] sm:$0xff]
    %v1656 = vld [vmem:[%s1626 + $0xe8] sm:$0xff]
    %v1657 = vld [vmem:[%s1626 + $0xf0] sm:$0xff]
    %v1658 = vld [vmem:[%s1626 + $0xf8] sm:$0xff]
    %v1659 = vld [vmem:[%s1626 + $0x100] sm:$0xff]
    %v1660 = vld [vmem:[%s1626 + $0x108] sm:$0xff]
    %v1661 = vld [vmem:[%s1626 + $0x110] sm:$0xff]
    %v1662 = vld [vmem:[%s1626 + $0x118] sm:$0xff]
    %v1663 = vld [vmem:[%s1626 + $0x120] sm:$0xff]
    %v1664 = vld [vmem:[%s1626 + $0x128] sm:$0xff]
    %v1665 = vld [vmem:[%s1626 + $0x130] sm:$0xff]
    %v1666 = vld [vmem:[%s1626 + $0x138] sm:$0xff]
    %v1667 = vld [vmem:[%s1626 + $0x140] sm:$0xff]
    %v1668 = vld [vmem:[%s1626 + $0x148] sm:$0xff]
    %v1669 = vld [vmem:[%s1626 + $0x150] sm:$0xff]
    %v1670 = vld [vmem:[%s1626 + $0x158] sm:$0xff]
    %v1671 = vld [vmem:[%s1626 + $0x160] sm:$0xff]
    %v1672 = vld [vmem:[%s1626 + $0x168] sm:$0xff]
    %v1673 = vld [vmem:[%s1626 + $0x170] sm:$0xff]
    %v1674 = vld [vmem:[%s1626 + $0x178] sm:$0xff]
    %v1675 = vld [vmem:[%s1626 + $0x180] sm:$0xff]
    %v1676 = vld [vmem:[%s1626 + $0x188] sm:$0xff]
    %v1677 = vld [vmem:[%s1626 + $0x190] sm:$0xff]
    %v1678 = vld [vmem:[%s1626 + $0x198] sm:$0xff]
    %v1679 = vld [vmem:[%s1626 + $0x1a0] sm:$0xff]
    %v1680 = vld [vmem:[%s1626 + $0x1a8] sm:$0xff]
    %v1681 = vld [vmem:[%s1626 + $0x1b0] sm:$0xff]
    %v1682 = vld [vmem:[%s1626 + $0x1b8] sm:$0xff]
    %v1683 = vld [vmem:[%s1626 + $0x1c0] sm:$0xff]
    %v1684 = vld [vmem:[%s1626 + $0x1c8] sm:$0xff]
    %v1685 = vld [vmem:[%s1626 + $0x1d0] sm:$0xff]
    %v1686 = vld [vmem:[%s1626 + $0x1d8] sm:$0xff]
    %v1687 = vld [vmem:[%s1626 + $0x1e0] sm:$0xff]
    %v1688 = vld [vmem:[%s1626 + $0x1e8] sm:$0xff]
    %v1689 = vld [vmem:[%s1626 + $0x1f0] sm:$0xff]
    %v1690 = vld [vmem:[%s1626 + $0x1f8] sm:$0xff]
    %v1691 = vld [vmem:[%s1626 + $0x200] sm:$0xff]
    %v1692 = vld [vmem:[%s1626 + $0x208] sm:$0xff]
    %v1693 = vld [vmem:[%s1626 + $0x210] sm:$0xff]
    %v1694 = vld [vmem:[%s1626 + $0x218] sm:$0xff]
    %v1695 = vld [vmem:[%s1626 + $0x220] sm:$0xff]
    %v1696 = vld [vmem:[%s1626 + $0x228] sm:$0xff]
    %v1697 = vld [vmem:[%s1626 + $0x230] sm:$0xff]
    %v1698 = vld [vmem:[%s1626 + $0x238] sm:$0xff]
    %v1699 = vld [vmem:[%s1626 + $0x240] sm:$0xff]
    %v1700 = vld [vmem:[%s1626 + $0x248] sm:$0xff]
    %v1701 = vld [vmem:[%s1626 + $0x250] sm:$0xff]
    %v1702 = vld [vmem:[%s1626 + $0x258] sm:$0xff]
    %v1703 = vld [vmem:[%s1626 + $0x260] sm:$0xff]
    %v1704 = vld [vmem:[%s1626 + $0x268] sm:$0xff]
    %v1705 = vld [vmem:[%s1626 + $0x270] sm:$0xff]
    %v1706 = vld [vmem:[%s1626 + $0x278] sm:$0xff]
    %v1707 = vld [vmem:[%s1626 + $0x280] sm:$0xff]
    %v1708 = vld [vmem:[%s1626 + $0x288] sm:$0xff]
    %v1709 = vld [vmem:[%s1626 + $0x290] sm:$0xff]
    %v1710 = vld [vmem:[%s1626 + $0x298] sm:$0xff]
    %v1711 = vld [vmem:[%s1626 + $0x2a0] sm:$0xff]
    %v1712 = vld [vmem:[%s1626 + $0x2a8] sm:$0xff]
    %v1713 = vld [vmem:[%s1626 + $0x2b0] sm:$0xff]
    %v1714 = vld [vmem:[%s1626 + $0x2b8] sm:$0xff]
    %v1715 = vld [vmem:[%s1626 + $0x2c0] sm:$0xff]
    %v1716 = vld [vmem:[%s1626 + $0x2c8] sm:$0xff]
    %v1717 = vld [vmem:[%s1626 + $0x2d0] sm:$0xff]
    %v1718 = vld [vmem:[%s1626 + $0x2d8] sm:$0xff]
    %v1719 = vld [vmem:[%s1626 + $0x2e0] sm:$0xff]
    %v1720 = vld [vmem:[%s1626 + $0x2e8] sm:$0xff]
    %v1721 = vld [vmem:[%s1626 + $0x2f0] sm:$0xff]
    %v1722 = vld [vmem:[%s1626 + $0x2f8] sm:$0xff]
    %v1723 = vld [vmem:[%s1626 + $0x300] sm:$0xff]
    %v1724 = vld [vmem:[%s1626 + $0x308] sm:$0xff]
    %v1725 = vld [vmem:[%s1626 + $0x310] sm:$0xff]
    %v1726 = vld [vmem:[%s1626 + $0x318] sm:$0xff]
    %v1727 = vld [vmem:[%s1626 + $0x320] sm:$0xff]
    %v1728 = vld [vmem:[%s1626 + $0x328] sm:$0xff]
    %v1729 = vld [vmem:[%s1626 + $0x330] sm:$0xff]
    %v1730 = vld [vmem:[%s1626 + $0x338] sm:$0xff]
    %v1731 = vld [vmem:[%s1626 + $0x340] sm:$0xff]
    %v1732 = vld [vmem:[%s1626 + $0x348] sm:$0xff]
    %v1733 = vld [vmem:[%s1626 + $0x350] sm:$0xff]
    %v1734 = vld [vmem:[%s1626 + $0x358] sm:$0xff]
    %v1735 = vld [vmem:[%s1626 + $0x360] sm:$0xff]
    %v1736 = vld [vmem:[%s1626 + $0x368] sm:$0xff]
    %v1737 = vld [vmem:[%s1626 + $0x370] sm:$0xff]
    %v1738 = vld [vmem:[%s1626 + $0x378] sm:$0xff]
    %v1739 = vld [vmem:[%s1626 + $0x380] sm:$0xff]
    %v1740 = vld [vmem:[%s1626 + $0x388] sm:$0xff]
    %v1741 = vld [vmem:[%s1626 + $0x390] sm:$0xff]
    %v1742 = vld [vmem:[%s1626 + $0x398] sm:$0xff]
    %v1743 = vld [vmem:[%s1626 + $0x3a0] sm:$0xff]
    %v1744 = vld [vmem:[%s1626 + $0x3a8] sm:$0xff]
    %v1745 = vld [vmem:[%s1626 + $0x3b0] sm:$0xff]
    %v1746 = vld [vmem:[%s1626 + $0x3b8] sm:$0xff]
    %v1747 = vld [vmem:[%s1626 + $0x3c0] sm:$0xff]
    %v1748 = vld [vmem:[%s1626 + $0x3c8] sm:$0xff]
    %v1749 = vld [vmem:[%s1626 + $0x3d0] sm:$0xff]
    %v1750 = vld [vmem:[%s1626 + $0x3d8] sm:$0xff]
    %v1751 = vld [vmem:[%s1626 + $0x3e0] sm:$0xff]
    %v1752 = vld [vmem:[%s1626 + $0x3e8] sm:$0xff]
    %v1753 = vld [vmem:[%s1626 + $0x3f0] sm:$0xff]
    %v1754 = vld [vmem:[%s1626 + $0x3f8] sm:$0xff]
    %v1755 = vld [vmem:[%s1626 + $0x400] sm:$0xff]
    %v1756 = vld [vmem:[%s1626 + $0x408] sm:$0xff]
    %v1757 = vld [vmem:[%s1626 + $0x410] sm:$0xff]
    %v1758 = vld [vmem:[%s1626 + $0x418] sm:$0xff]
    %v1759 = vld [vmem:[%s1626 + $0x420] sm:$0xff]
    %v1760 = vld [vmem:[%s1626 + $0x428] sm:$0xff]
    %v1761 = vld [vmem:[%s1626 + $0x430] sm:$0xff]
    %v1762 = vld [vmem:[%s1626 + $0x438] sm:$0xff]
    %v1763 = vld [vmem:[%s1626 + $0x440] sm:$0xff]
    %v1764 = vld [vmem:[%s1626 + $0x448] sm:$0xff]
    %v1765 = vld [vmem:[%s1626 + $0x450] sm:$0xff]
    %v1766 = vld [vmem:[%s1626 + $0x458] sm:$0xff]
    %v1767 = vld [vmem:[%s1626 + $0x460] sm:$0xff]
    %v1768 = vld [vmem:[%s1626 + $0x468] sm:$0xff]
    %v1769 = vld [vmem:[%s1626 + $0x470] sm:$0xff]
    %v1770 = vld [vmem:[%s1626 + $0x478] sm:$0xff]
    %v1771 = vld [vmem:[%s1626 + $0x480] sm:$0xff]
    %v1772 = vld [vmem:[%s1626 + $0x488] sm:$0xff]
    %v1773 = vld [vmem:[%s1626 + $0x490] sm:$0xff]
    %v1774 = vld [vmem:[%s1626 + $0x498] sm:$0xff]
    %v1775 = vld [vmem:[%s1626 + $0x4a0] sm:$0xff]
    %v1776 = vld [vmem:[%s1626 + $0x4a8] sm:$0xff]
    %v1777 = vld [vmem:[%s1626 + $0x4b0] sm:$0xff]
    %v1778 = vld [vmem:[%s1626 + $0x4b8] sm:$0xff]
    %v1779 = vld [vmem:[%s1626 + $0x4c0] sm:$0xff]
    %v1780 = vld [vmem:[%s1626 + $0x4c8] sm:$0xff]
    %v1781 = vld [vmem:[%s1626 + $0x4d0] sm:$0xff]
    %v1782 = vld [vmem:[%s1626 + $0x4d8] sm:$0xff]
    %v1783 = vld [vmem:[%s1626 + $0x4e0] sm:$0xff]
    %v1784 = vld [vmem:[%s1626 + $0x4e8] sm:$0xff]
    %v1785 = vld [vmem:[%s1626 + $0x4f0] sm:$0xff]
    %v1786 = vld [vmem:[%s1626 + $0x4f8] sm:$0xff]
    %v1787 = vld [vmem:[%s1626 + $0x500] sm:$0xff]
    %v1788 = vld [vmem:[%s1626 + $0x508] sm:$0xff]
    %v1789 = vld [vmem:[%s1626 + $0x510] sm:$0xff]
    %v1790 = vld [vmem:[%s1626 + $0x518] sm:$0xff]
    %v1791 = vld [vmem:[%s1626 + $0x520] sm:$0xff]
    %v1792 = vld [vmem:[%s1626 + $0x528] sm:$0xff]
    %v1793 = vld [vmem:[%s1626 + $0x530] sm:$0xff]
    %v1794 = vld [vmem:[%s1626 + $0x538] sm:$0xff]
    %v1795 = vld [vmem:[%s1626 + $0x540] sm:$0xff]
    %v1796 = vld [vmem:[%s1626 + $0x548] sm:$0xff]
    %v1797 = vld [vmem:[%s1626 + $0x550] sm:$0xff]
    %v1798 = vld [vmem:[%s1626 + $0x558] sm:$0xff]
    %v1799 = vld [vmem:[%s1626 + $0x560] sm:$0xff]
    %v1800 = vld [vmem:[%s1626 + $0x568] sm:$0xff]
    %v1801 = vld [vmem:[%s1626 + $0x570] sm:$0xff]
    %v1802 = vld [vmem:[%s1626 + $0x578] sm:$0xff]
    %v1803 = vld [vmem:[%s1626 + $0x580] sm:$0xff]
    %v1804 = vld [vmem:[%s1626 + $0x588] sm:$0xff]
    %v1805 = vld [vmem:[%s1626 + $0x590] sm:$0xff]
    %v1806 = vld [vmem:[%s1626 + $0x598] sm:$0xff]
    %v1807 = vld [vmem:[%s1626 + $0x5a0] sm:$0xff]
    %v1808 = vld [vmem:[%s1626 + $0x5a8] sm:$0xff]
    %v1809 = vld [vmem:[%s1626 + $0x5b0] sm:$0xff]
    %v1810 = vld [vmem:[%s1626 + $0x5b8] sm:$0xff]
    %v1811 = vld [vmem:[%s1626 + $0x5c0] sm:$0xff]
    %v1812 = vld [vmem:[%s1626 + $0x5c8] sm:$0xff]
    %v1813 = vld [vmem:[%s1626 + $0x5d0] sm:$0xff]
    %v1814 = vld [vmem:[%s1626 + $0x5d8] sm:$0xff]
    %v1815 = vld [vmem:[%s1626 + $0x5e0] sm:$0xff]
    %v1816 = vld [vmem:[%s1626 + $0x5e8] sm:$0xff]
    %v1817 = vld [vmem:[%s1626 + $0x5f0] sm:$0xff]
    %v1818 = vld [vmem:[%s1626 + $0x5f8] sm:$0xff]
    %v1819 = vld [vmem:[%s1626 + $0x600] sm:$0xff]
    %v1820 = vld [vmem:[%s1626 + $0x608] sm:$0xff]
    %v1821 = vld [vmem:[%s1626 + $0x610] sm:$0xff]
    %v1822 = vld [vmem:[%s1626 + $0x618] sm:$0xff]
    %v2019 = vunpack.c.l.b16 %v1627
    %v2020 = vunpack.c.h.b16 %v1627
    %v2021 = vunpack.c.l.b16 %v1628
    %v2022 = vunpack.c.h.b16 %v1628
    %v2023 = vunpack.c.l.b16 %v1629
    %v2024 = vunpack.c.h.b16 %v1629
    %v2025 = vunpack.c.l.b16 %v1630
    %v2026 = vunpack.c.h.b16 %v1630
    %v2027 = vunpack.c.l.b16 %v1631
    %v2028 = vunpack.c.h.b16 %v1631
    %v2029 = vunpack.c.l.b16 %v1632
    %v2030 = vunpack.c.h.b16 %v1632
    %v2031 = vunpack.c.l.b16 %v1633
    %v2032 = vunpack.c.h.b16 %v1633
    %v2033 = vunpack.c.l.b16 %v1634
    %v2034 = vunpack.c.h.b16 %v1634
    %v2035 = vunpack.c.l.b16 %v1635
    %v2036 = vunpack.c.h.b16 %v1635
    %v2037 = vunpack.c.l.b16 %v1636
    %v2038 = vunpack.c.h.b16 %v1636
    %v2039 = vunpack.c.l.b16 %v1637
    %v2040 = vunpack.c.h.b16 %v1637
    %v2041 = vunpack.c.l.b16 %v1638
    %v2042 = vunpack.c.h.b16 %v1638
    %v2043 = vunpack.c.l.b16 %v1639
    %v2044 = vunpack.c.h.b16 %v1639
    %v2045 = vunpack.c.l.b16 %v1640
    %v2046 = vunpack.c.h.b16 %v1640
    %v2047 = vunpack.c.l.b16 %v1641
    %v2048 = vunpack.c.h.b16 %v1641
    %v2049 = vunpack.c.l.b16 %v1642
    %v2050 = vunpack.c.h.b16 %v1642
    %v2051 = vunpack.c.l.b16 %v1643
    %v2052 = vunpack.c.h.b16 %v1643
    %v2053 = vunpack.c.l.b16 %v1644
    %v2054 = vunpack.c.h.b16 %v1644
    %v2055 = vunpack.c.l.b16 %v1645
    %v2056 = vunpack.c.h.b16 %v1645
    %v2057 = vunpack.c.l.b16 %v1646
    %v2058 = vunpack.c.h.b16 %v1646
    %v2059 = vunpack.c.l.b16 %v1647
    %v2060 = vunpack.c.h.b16 %v1647
    %v2061 = vunpack.c.l.b16 %v1648
    %v2062 = vunpack.c.h.b16 %v1648
    %v2063 = vunpack.c.l.b16 %v1649
    %v2064 = vunpack.c.h.b16 %v1649
    %v2065 = vunpack.c.l.b16 %v1650
    %v2066 = vunpack.c.h.b16 %v1650
    %v2067 = vunpack.c.l.b16 %v1651
    %v2068 = vunpack.c.h.b16 %v1651
    %v2069 = vunpack.c.l.b16 %v1652
    %v2070 = vunpack.c.h.b16 %v1652
    %v2071 = vunpack.c.l.b16 %v1653
    %v2072 = vunpack.c.h.b16 %v1653
    %v2073 = vunpack.c.l.b16 %v1654
    %v2074 = vunpack.c.h.b16 %v1654
    %v2075 = vunpack.c.l.b16 %v1655
    %v2076 = vunpack.c.h.b16 %v1655
    %v2077 = vunpack.c.l.b16 %v1656
    %v2078 = vunpack.c.h.b16 %v1656
    %v2079 = vunpack.c.l.b16 %v1657
    %v2080 = vunpack.c.h.b16 %v1657
    %v2081 = vunpack.c.l.b16 %v1658
    %v2082 = vunpack.c.h.b16 %v1658
    %v2083 = vunpack.c.l.b16 %v1659
    %v2084 = vunpack.c.h.b16 %v1659
    %v2085 = vunpack.c.l.b16 %v1660
    %v2086 = vunpack.c.h.b16 %v1660
    %v2087 = vunpack.c.l.b16 %v1661
    %v2088 = vunpack.c.h.b16 %v1661
    %v2089 = vunpack.c.l.b16 %v1662
    %v2090 = vunpack.c.h.b16 %v1662
    %v2091 = vunpack.c.l.b16 %v1663
    %v2092 = vunpack.c.h.b16 %v1663
    %v2093 = vunpack.c.l.b16 %v1664
    %v2094 = vunpack.c.h.b16 %v1664
    %v2095 = vunpack.c.l.b16 %v1665
    %v2096 = vunpack.c.h.b16 %v1665
    %v2097 = vunpack.c.l.b16 %v1666
    %v2098 = vunpack.c.h.b16 %v1666
    %v2099 = vunpack.c.l.b16 %v1667
    %v2100 = vunpack.c.h.b16 %v1667
    %v2101 = vunpack.c.l.b16 %v1668
    %v2102 = vunpack.c.h.b16 %v1668
    %v2103 = vunpack.c.l.b16 %v1669
    %v2104 = vunpack.c.h.b16 %v1669
    %v2105 = vunpack.c.l.b16 %v1670
    %v2106 = vunpack.c.h.b16 %v1670
    %v2107 = vunpack.c.l.b16 %v1671
    %v2108 = vunpack.c.h.b16 %v1671
    %v2109 = vunpack.c.l.b16 %v1672
    %v2110 = vunpack.c.h.b16 %v1672
    %v2111 = vunpack.c.l.b16 %v1673
    %v2112 = vunpack.c.h.b16 %v1673
    %v2113 = vunpack.c.l.b16 %v1674
    %v2114 = vunpack.c.h.b16 %v1674
    %v2115 = vunpack.c.l.b16 %v1675
    %v2116 = vunpack.c.h.b16 %v1675
    %v2117 = vunpack.c.l.b16 %v1676
    %v2118 = vunpack.c.h.b16 %v1676
    %v2119 = vunpack.c.l.b16 %v1677
    %v2120 = vunpack.c.h.b16 %v1677
    %v2121 = vunpack.c.l.b16 %v1678
    %v2122 = vunpack.c.h.b16 %v1678
    %v2123 = vunpack.c.l.b16 %v1679
    %v2124 = vunpack.c.h.b16 %v1679
    %v2125 = vunpack.c.l.b16 %v1680
    %v2126 = vunpack.c.h.b16 %v1680
    %v2127 = vunpack.c.l.b16 %v1681
    %v2128 = vunpack.c.h.b16 %v1681
    %v2129 = vunpack.c.l.b16 %v1682
    %v2130 = vunpack.c.h.b16 %v1682
    %v2131 = vunpack.c.l.b16 %v1683
    %v2132 = vunpack.c.h.b16 %v1683
    %v2133 = vunpack.c.l.b16 %v1684
    %v2134 = vunpack.c.h.b16 %v1684
    %v2135 = vunpack.c.l.b16 %v1685
    %v2136 = vunpack.c.h.b16 %v1685
    %v2137 = vunpack.c.l.b16 %v1686
    %v2138 = vunpack.c.h.b16 %v1686
    %v2139 = vunpack.c.l.b16 %v1687
    %v2140 = vunpack.c.h.b16 %v1687
    %v2141 = vunpack.c.l.b16 %v1688
    %v2142 = vunpack.c.h.b16 %v1688
    %v2143 = vunpack.c.l.b16 %v1689
    %v2144 = vunpack.c.h.b16 %v1689
    %v2145 = vunpack.c.l.b16 %v1690
    %v2146 = vunpack.c.h.b16 %v1690
    %v2147 = vunpack.c.l.b16 %v1691
    %v2148 = vunpack.c.h.b16 %v1691
    %v2149 = vunpack.c.l.b16 %v1692
    %v2150 = vunpack.c.h.b16 %v1692
    %v2151 = vunpack.c.l.b16 %v1693
    %v2152 = vunpack.c.h.b16 %v1693
    %v2153 = vunpack.c.l.b16 %v1694
    %v2154 = vunpack.c.h.b16 %v1694
    %v2155 = vunpack.c.l.b16 %v1695
    %v2156 = vunpack.c.h.b16 %v1695
    %v2157 = vunpack.c.l.b16 %v1696
    %v2158 = vunpack.c.h.b16 %v1696
    %v2159 = vunpack.c.l.b16 %v1697
    %v2160 = vunpack.c.h.b16 %v1697
    %v2161 = vunpack.c.l.b16 %v1698
    %v2162 = vunpack.c.h.b16 %v1698
    %v2163 = vunpack.c.l.b16 %v1699
    %v2164 = vunpack.c.h.b16 %v1699
    %v2165 = vunpack.c.l.b16 %v1700
    %v2166 = vunpack.c.h.b16 %v1700
    %v2167 = vunpack.c.l.b16 %v1701
    %v2168 = vunpack.c.h.b16 %v1701
    %v2169 = vunpack.c.l.b16 %v1702
    %v2170 = vunpack.c.h.b16 %v1702
    %v2171 = vunpack.c.l.b16 %v1703
    %v2172 = vunpack.c.h.b16 %v1703
    %v2173 = vunpack.c.l.b16 %v1704
    %v2174 = vunpack.c.h.b16 %v1704
    %v2175 = vunpack.c.l.b16 %v1705
    %v2176 = vunpack.c.h.b16 %v1705
    %v2177 = vunpack.c.l.b16 %v1706
    %v2178 = vunpack.c.h.b16 %v1706
    %v2179 = vunpack.c.l.b16 %v1707
    %v2180 = vunpack.c.h.b16 %v1707
    %v2181 = vunpack.c.l.b16 %v1708
    %v2182 = vunpack.c.h.b16 %v1708
    %v2183 = vunpack.c.l.b16 %v1709
    %v2184 = vunpack.c.h.b16 %v1709
    %v2185 = vunpack.c.l.b16 %v1710
    %v2186 = vunpack.c.h.b16 %v1710
    %v2187 = vunpack.c.l.b16 %v1711
    %v2188 = vunpack.c.h.b16 %v1711
    %v2189 = vunpack.c.l.b16 %v1712
    %v2190 = vunpack.c.h.b16 %v1712
    %v2191 = vunpack.c.l.b16 %v1713
    %v2192 = vunpack.c.h.b16 %v1713
    %v2193 = vunpack.c.l.b16 %v1714
    %v2194 = vunpack.c.h.b16 %v1714
    %v2195 = vunpack.c.l.b16 %v1715
    %v2196 = vunpack.c.h.b16 %v1715
    %v2197 = vunpack.c.l.b16 %v1716
    %v2198 = vunpack.c.h.b16 %v1716
    %v2199 = vunpack.c.l.b16 %v1717
    %v2200 = vunpack.c.h.b16 %v1717
    %v2201 = vunpack.c.l.b16 %v1718
    %v2202 = vunpack.c.h.b16 %v1718
    %v2203 = vunpack.c.l.b16 %v1719
    %v2204 = vunpack.c.h.b16 %v1719
    %v2205 = vunpack.c.l.b16 %v1720
    %v2206 = vunpack.c.h.b16 %v1720
    %v2207 = vunpack.c.l.b16 %v1721
    %v2208 = vunpack.c.h.b16 %v1721
    %v2209 = vunpack.c.l.b16 %v1722
    %v2210 = vunpack.c.h.b16 %v1722
    %v2211 = vunpack.c.l.b16 %v1723
    %v2212 = vunpack.c.h.b16 %v1723
    %v2213 = vunpack.c.l.b16 %v1724
    %v2214 = vunpack.c.h.b16 %v1724
    %v2215 = vunpack.c.l.b16 %v1725
    %v2216 = vunpack.c.h.b16 %v1725
    %v2217 = vunpack.c.l.b16 %v1726
    %v2218 = vunpack.c.h.b16 %v1726
    %v2219 = vunpack.c.l.b16 %v1727
    %v2220 = vunpack.c.h.b16 %v1727
    %v2221 = vunpack.c.l.b16 %v1728
    %v2222 = vunpack.c.h.b16 %v1728
    %v2223 = vunpack.c.l.b16 %v1729
    %v2224 = vunpack.c.h.b16 %v1729
    %v2225 = vunpack.c.l.b16 %v1730
    %v2226 = vunpack.c.h.b16 %v1730
    %v2227 = vunpack.c.l.b16 %v1731
    %v2228 = vunpack.c.h.b16 %v1731
    %v2229 = vunpack.c.l.b16 %v1732
    %v2230 = vunpack.c.h.b16 %v1732
    %v2231 = vunpack.c.l.b16 %v1733
    %v2232 = vunpack.c.h.b16 %v1733
    %v2233 = vunpack.c.l.b16 %v1734
    %v2234 = vunpack.c.h.b16 %v1734
    %v2235 = vunpack.c.l.b16 %v1735
    %v2236 = vunpack.c.h.b16 %v1735
    %v2237 = vunpack.c.l.b16 %v1736
    %v2238 = vunpack.c.h.b16 %v1736
    %v2239 = vunpack.c.l.b16 %v1737
    %v2240 = vunpack.c.h.b16 %v1737
    %v2241 = vunpack.c.l.b16 %v1738
    %v2242 = vunpack.c.h.b16 %v1738
    %v2243 = vunpack.c.l.b16 %v1739
    %v2244 = vunpack.c.h.b16 %v1739
    %v2245 = vunpack.c.l.b16 %v1740
    %v2246 = vunpack.c.h.b16 %v1740
    %v2247 = vunpack.c.l.b16 %v1741
    %v2248 = vunpack.c.h.b16 %v1741
    %v2249 = vunpack.c.l.b16 %v1742
    %v2250 = vunpack.c.h.b16 %v1742
    %v2251 = vunpack.c.l.b16 %v1743
    %v2252 = vunpack.c.h.b16 %v1743
    %v2253 = vunpack.c.l.b16 %v1744
    %v2254 = vunpack.c.h.b16 %v1744
    %v2255 = vunpack.c.l.b16 %v1745
    %v2256 = vunpack.c.h.b16 %v1745
    %v2257 = vunpack.c.l.b16 %v1746
    %v2258 = vunpack.c.h.b16 %v1746
    %v2259 = vunpack.c.l.b16 %v1747
    %v2260 = vunpack.c.h.b16 %v1747
    %v2261 = vunpack.c.l.b16 %v1748
    %v2262 = vunpack.c.h.b16 %v1748
    %v2263 = vunpack.c.l.b16 %v1749
    %v2264 = vunpack.c.h.b16 %v1749
    %v2265 = vunpack.c.l.b16 %v1750
    %v2266 = vunpack.c.h.b16 %v1750
    %v2267 = vunpack.c.l.b16 %v1751
    %v2268 = vunpack.c.h.b16 %v1751
    %v2269 = vunpack.c.l.b16 %v1752
    %v2270 = vunpack.c.h.b16 %v1752
    %v2271 = vunpack.c.l.b16 %v1753
    %v2272 = vunpack.c.h.b16 %v1753
    %v2273 = vunpack.c.l.b16 %v1754
    %v2274 = vunpack.c.h.b16 %v1754
    %v2275 = vunpack.c.l.b16 %v1755
    %v2276 = vunpack.c.h.b16 %v1755
    %v2277 = vunpack.c.l.b16 %v1756
    %v2278 = vunpack.c.h.b16 %v1756
    %v2279 = vunpack.c.l.b16 %v1757
    %v2280 = vunpack.c.h.b16 %v1757
    %v2281 = vunpack.c.l.b16 %v1758
    %v2282 = vunpack.c.h.b16 %v1758
    %v2283 = vunpack.c.l.b16 %v1759
    %v2284 = vunpack.c.h.b16 %v1759
    %v2285 = vunpack.c.l.b16 %v1760
    %v2286 = vunpack.c.h.b16 %v1760
    %v2287 = vunpack.c.l.b16 %v1761
    %v2288 = vunpack.c.h.b16 %v1761
    %v2289 = vunpack.c.l.b16 %v1762
    %v2290 = vunpack.c.h.b16 %v1762
    %v2291 = vunpack.c.l.b16 %v1763
    %v2292 = vunpack.c.h.b16 %v1763
    %v2293 = vunpack.c.l.b16 %v1764
    %v2294 = vunpack.c.h.b16 %v1764
    %v2295 = vunpack.c.l.b16 %v1765
    %v2296 = vunpack.c.h.b16 %v1765
    %v2297 = vunpack.c.l.b16 %v1766
    %v2298 = vunpack.c.h.b16 %v1766
    %v2299 = vunpack.c.l.b16 %v1767
    %v2300 = vunpack.c.h.b16 %v1767
    %v2301 = vunpack.c.l.b16 %v1768
    %v2302 = vunpack.c.h.b16 %v1768
    %v2303 = vunpack.c.l.b16 %v1769
    %v2304 = vunpack.c.h.b16 %v1769
    %v2305 = vunpack.c.l.b16 %v1770
    %v2306 = vunpack.c.h.b16 %v1770
    %v2307 = vunpack.c.l.b16 %v1771
    %v2308 = vunpack.c.h.b16 %v1771
    %v2309 = vunpack.c.l.b16 %v1772
    %v2310 = vunpack.c.h.b16 %v1772
    %v2311 = vunpack.c.l.b16 %v1773
    %v2312 = vunpack.c.h.b16 %v1773
    %v2313 = vunpack.c.l.b16 %v1774
    %v2314 = vunpack.c.h.b16 %v1774
    %v2315 = vunpack.c.l.b16 %v1775
    %v2316 = vunpack.c.h.b16 %v1775
    %v2317 = vunpack.c.l.b16 %v1776
    %v2318 = vunpack.c.h.b16 %v1776
    %v2319 = vunpack.c.l.b16 %v1777
    %v2320 = vunpack.c.h.b16 %v1777
    %v2321 = vunpack.c.l.b16 %v1778
    %v2322 = vunpack.c.h.b16 %v1778
    %v2323 = vunpack.c.l.b16 %v1779
    %v2324 = vunpack.c.h.b16 %v1779
    %v2325 = vunpack.c.l.b16 %v1780
    %v2326 = vunpack.c.h.b16 %v1780
    %v2327 = vunpack.c.l.b16 %v1781
    %v2328 = vunpack.c.h.b16 %v1781
    %v2329 = vunpack.c.l.b16 %v1782
    %v2330 = vunpack.c.h.b16 %v1782
    %v2331 = vunpack.c.l.b16 %v1783
    %v2332 = vunpack.c.h.b16 %v1783
    %v2333 = vunpack.c.l.b16 %v1784
    %v2334 = vunpack.c.h.b16 %v1784
    %v2335 = vunpack.c.l.b16 %v1785
    %v2336 = vunpack.c.h.b16 %v1785
    %v2337 = vunpack.c.l.b16 %v1786
    %v2338 = vunpack.c.h.b16 %v1786
    %v2339 = vunpack.c.l.b16 %v1787
    %v2340 = vunpack.c.h.b16 %v1787
    %v2341 = vunpack.c.l.b16 %v1788
    %v2342 = vunpack.c.h.b16 %v1788
    %v2343 = vunpack.c.l.b16 %v1789
    %v2344 = vunpack.c.h.b16 %v1789
    %v2345 = vunpack.c.l.b16 %v1790
    %v2346 = vunpack.c.h.b16 %v1790
    %v2347 = vunpack.c.l.b16 %v1791
    %v2348 = vunpack.c.h.b16 %v1791
    %v2349 = vunpack.c.l.b16 %v1792
    %v2350 = vunpack.c.h.b16 %v1792
    %v2351 = vunpack.c.l.b16 %v1793
    %v2352 = vunpack.c.h.b16 %v1793
    %v2353 = vunpack.c.l.b16 %v1794
    %v2354 = vunpack.c.h.b16 %v1794
    %v2355 = vunpack.c.l.b16 %v1795
    %v2356 = vunpack.c.h.b16 %v1795
    %v2357 = vunpack.c.l.b16 %v1796
    %v2358 = vunpack.c.h.b16 %v1796
    %v2359 = vunpack.c.l.b16 %v1797
    %v2360 = vunpack.c.h.b16 %v1797
    %v2361 = vunpack.c.l.b16 %v1798
    %v2362 = vunpack.c.h.b16 %v1798
    %v2363 = vunpack.c.l.b16 %v1799
    %v2364 = vunpack.c.h.b16 %v1799
    %v2365 = vunpack.c.l.b16 %v1800
    %v2366 = vunpack.c.h.b16 %v1800
    %v2367 = vunpack.c.l.b16 %v1801
    %v2368 = vunpack.c.h.b16 %v1801
    %v2369 = vunpack.c.l.b16 %v1802
    %v2370 = vunpack.c.h.b16 %v1802
    %v2371 = vunpack.c.l.b16 %v1803
    %v2372 = vunpack.c.h.b16 %v1803
    %v2373 = vunpack.c.l.b16 %v1804
    %v2374 = vunpack.c.h.b16 %v1804
    %v2375 = vunpack.c.l.b16 %v1805
    %v2376 = vunpack.c.h.b16 %v1805
    %v2377 = vunpack.c.l.b16 %v1806
    %v2378 = vunpack.c.h.b16 %v1806
    %v2379 = vunpack.c.l.b16 %v1807
    %v2380 = vunpack.c.h.b16 %v1807
    %v2381 = vunpack.c.l.b16 %v1808
    %v2382 = vunpack.c.h.b16 %v1808
    %v2383 = vunpack.c.l.b16 %v1809
    %v2384 = vunpack.c.h.b16 %v1809
    %v2385 = vunpack.c.l.b16 %v1810
    %v2386 = vunpack.c.h.b16 %v1810
    %v2387 = vunpack.c.l.b16 %v1811
    %v2388 = vunpack.c.h.b16 %v1811
    %v2389 = vunpack.c.l.b16 %v1812
    %v2390 = vunpack.c.h.b16 %v1812
    %v2391 = vunpack.c.l.b16 %v1813
    %v2392 = vunpack.c.h.b16 %v1813
    %v2393 = vunpack.c.l.b16 %v1814
    %v2394 = vunpack.c.h.b16 %v1814
    %v2395 = vunpack.c.l.b16 %v1815
    %v2396 = vunpack.c.h.b16 %v1815
    %v2397 = vunpack.c.l.b16 %v1816
    %v2398 = vunpack.c.h.b16 %v1816
    %v2399 = vunpack.c.l.b16 %v1817
    %v2400 = vunpack.c.h.b16 %v1817
    %v2401 = vunpack.c.l.b16 %v1818
    %v2402 = vunpack.c.h.b16 %v1818
    %v2403 = vunpack.c.l.b16 %v1819
    %v2404 = vunpack.c.h.b16 %v1819
    %v2405 = vunpack.c.l.b16 %v1820
    %v2406 = vunpack.c.h.b16 %v1820
    %v2407 = vunpack.c.l.b16 %v1821
    %v2408 = vunpack.c.h.b16 %v1821
    %v2409 = vunpack.c.l.b16 %v1822
    %v2410 = vunpack.c.h.b16 %v1822
    %v2411 = vpack.c.b16 %v2023, %v2019
    %v2412 = vpack.c.b16 %v2024, %v2020
    %v2413 = vpack.c.b16 %v2025, %v2021
    %v2414 = vpack.c.b16 %v2026, %v2022
    %v2415 = vpack.c.b16 %v2031, %v2027
    %v2416 = vpack.c.b16 %v2032, %v2028
    %v2417 = vpack.c.b16 %v2033, %v2029
    %v2418 = vpack.c.b16 %v2034, %v2030
    %v2419 = vpack.c.b16 %v2039, %v2035
    %v2420 = vpack.c.b16 %v2040, %v2036
    %v2421 = vpack.c.b16 %v2041, %v2037
    %v2422 = vpack.c.b16 %v2042, %v2038
    %v2423 = vpack.c.b16 %v2047, %v2043
    %v2424 = vpack.c.b16 %v2048, %v2044
    %v2425 = vpack.c.b16 %v2049, %v2045
    %v2426 = vpack.c.b16 %v2050, %v2046
    %v2427 = vpack.c.b16 %v2055, %v2051
    %v2428 = vpack.c.b16 %v2056, %v2052
    %v2429 = vpack.c.b16 %v2057, %v2053
    %v2430 = vpack.c.b16 %v2058, %v2054
    %v2431 = vpack.c.b16 %v2063, %v2059
    %v2432 = vpack.c.b16 %v2064, %v2060
    %v2433 = vpack.c.b16 %v2065, %v2061
    %v2434 = vpack.c.b16 %v2066, %v2062
    %v2435 = vpack.c.b16 %v2071, %v2067
    %v2436 = vpack.c.b16 %v2072, %v2068
    %v2437 = vpack.c.b16 %v2073, %v2069
    %v2438 = vpack.c.b16 %v2074, %v2070
    %v2439 = vpack.c.b16 %v2079, %v2075
    %v2440 = vpack.c.b16 %v2080, %v2076
    %v2441 = vpack.c.b16 %v2081, %v2077
    %v2442 = vpack.c.b16 %v2082, %v2078
    %v2443 = vpack.c.b16 %v2087, %v2083
    %v2444 = vpack.c.b16 %v2088, %v2084
    %v2445 = vpack.c.b16 %v2089, %v2085
    %v2446 = vpack.c.b16 %v2090, %v2086
    %v2447 = vpack.c.b16 %v2095, %v2091
    %v2448 = vpack.c.b16 %v2096, %v2092
    %v2449 = vpack.c.b16 %v2097, %v2093
    %v2450 = vpack.c.b16 %v2098, %v2094
    %v2451 = vpack.c.b16 %v2103, %v2099
    %v2452 = vpack.c.b16 %v2104, %v2100
    %v2453 = vpack.c.b16 %v2105, %v2101
    %v2454 = vpack.c.b16 %v2106, %v2102
    %v2455 = vpack.c.b16 %v2111, %v2107
    %v2456 = vpack.c.b16 %v2112, %v2108
    %v2457 = vpack.c.b16 %v2113, %v2109
    %v2458 = vpack.c.b16 %v2114, %v2110
    %v2459 = vpack.c.b16 %v2119, %v2115
    %v2460 = vpack.c.b16 %v2120, %v2116
    %v2461 = vpack.c.b16 %v2121, %v2117
    %v2462 = vpack.c.b16 %v2122, %v2118
    %v2463 = vpack.c.b16 %v2127, %v2123
    %v2464 = vpack.c.b16 %v2128, %v2124
    %v2465 = vpack.c.b16 %v2129, %v2125
    %v2466 = vpack.c.b16 %v2130, %v2126
    %v2467 = vpack.c.b16 %v2135, %v2131
    %v2468 = vpack.c.b16 %v2136, %v2132
    %v2469 = vpack.c.b16 %v2137, %v2133
    %v2470 = vpack.c.b16 %v2138, %v2134
    %v2471 = vpack.c.b16 %v2143, %v2139
    %v2472 = vpack.c.b16 %v2144, %v2140
    %v2473 = vpack.c.b16 %v2145, %v2141
    %v2474 = vpack.c.b16 %v2146, %v2142
    %v2475 = vpack.c.b16 %v2151, %v2147
    %v2476 = vpack.c.b16 %v2152, %v2148
    %v2477 = vpack.c.b16 %v2153, %v2149
    %v2478 = vpack.c.b16 %v2154, %v2150
    %v2479 = vpack.c.b16 %v2159, %v2155
    %v2480 = vpack.c.b16 %v2160, %v2156
    %v2481 = vpack.c.b16 %v2161, %v2157
    %v2482 = vpack.c.b16 %v2162, %v2158
    %v2483 = vpack.c.b16 %v2167, %v2163
    %v2484 = vpack.c.b16 %v2168, %v2164
    %v2485 = vpack.c.b16 %v2169, %v2165
    %v2486 = vpack.c.b16 %v2170, %v2166
    %v2487 = vpack.c.b16 %v2175, %v2171
    %v2488 = vpack.c.b16 %v2176, %v2172
    %v2489 = vpack.c.b16 %v2177, %v2173
    %v2490 = vpack.c.b16 %v2178, %v2174
    %v2491 = vpack.c.b16 %v2183, %v2179
    %v2492 = vpack.c.b16 %v2184, %v2180
    %v2493 = vpack.c.b16 %v2185, %v2181
    %v2494 = vpack.c.b16 %v2186, %v2182
    %v2495 = vpack.c.b16 %v2191, %v2187
    %v2496 = vpack.c.b16 %v2192, %v2188
    %v2497 = vpack.c.b16 %v2193, %v2189
    %v2498 = vpack.c.b16 %v2194, %v2190
    %v2499 = vpack.c.b16 %v2199, %v2195
    %v2500 = vpack.c.b16 %v2200, %v2196
    %v2501 = vpack.c.b16 %v2201, %v2197
    %v2502 = vpack.c.b16 %v2202, %v2198
    %v2503 = vpack.c.b16 %v2207, %v2203
    %v2504 = vpack.c.b16 %v2208, %v2204
    %v2505 = vpack.c.b16 %v2209, %v2205
    %v2506 = vpack.c.b16 %v2210, %v2206
    %v2507 = vpack.c.b16 %v2215, %v2211
    %v2508 = vpack.c.b16 %v2216, %v2212
    %v2509 = vpack.c.b16 %v2217, %v2213
    %v2510 = vpack.c.b16 %v2218, %v2214
    %v2511 = vpack.c.b16 %v2223, %v2219
    %v2512 = vpack.c.b16 %v2224, %v2220
    %v2513 = vpack.c.b16 %v2225, %v2221
    %v2514 = vpack.c.b16 %v2226, %v2222
    %v2515 = vpack.c.b16 %v2231, %v2227
    %v2516 = vpack.c.b16 %v2232, %v2228
    %v2517 = vpack.c.b16 %v2233, %v2229
    %v2518 = vpack.c.b16 %v2234, %v2230
    %v2519 = vpack.c.b16 %v2239, %v2235
    %v2520 = vpack.c.b16 %v2240, %v2236
    %v2521 = vpack.c.b16 %v2241, %v2237
    %v2522 = vpack.c.b16 %v2242, %v2238
    %v2523 = vpack.c.b16 %v2247, %v2243
    %v2524 = vpack.c.b16 %v2248, %v2244
    %v2525 = vpack.c.b16 %v2249, %v2245
    %v2526 = vpack.c.b16 %v2250, %v2246
    %v2527 = vpack.c.b16 %v2255, %v2251
    %v2528 = vpack.c.b16 %v2256, %v2252
    %v2529 = vpack.c.b16 %v2257, %v2253
    %v2530 = vpack.c.b16 %v2258, %v2254
    %v2531 = vpack.c.b16 %v2263, %v2259
    %v2532 = vpack.c.b16 %v2264, %v2260
    %v2533 = vpack.c.b16 %v2265, %v2261
    %v2534 = vpack.c.b16 %v2266, %v2262
    %v2535 = vpack.c.b16 %v2271, %v2267
    %v2536 = vpack.c.b16 %v2272, %v2268
    %v2537 = vpack.c.b16 %v2273, %v2269
    %v2538 = vpack.c.b16 %v2274, %v2270
    %v2539 = vpack.c.b16 %v2279, %v2275
    %v2540 = vpack.c.b16 %v2280, %v2276
    %v2541 = vpack.c.b16 %v2281, %v2277
    %v2542 = vpack.c.b16 %v2282, %v2278
    %v2543 = vpack.c.b16 %v2287, %v2283
    %v2544 = vpack.c.b16 %v2288, %v2284
    %v2545 = vpack.c.b16 %v2289, %v2285
    %v2546 = vpack.c.b16 %v2290, %v2286
    %v2547 = vpack.c.b16 %v2295, %v2291
    %v2548 = vpack.c.b16 %v2296, %v2292
    %v2549 = vpack.c.b16 %v2297, %v2293
    %v2550 = vpack.c.b16 %v2298, %v2294
    %v2551 = vpack.c.b16 %v2303, %v2299
    %v2552 = vpack.c.b16 %v2304, %v2300
    %v2553 = vpack.c.b16 %v2305, %v2301
    %v2554 = vpack.c.b16 %v2306, %v2302
    %v2555 = vpack.c.b16 %v2311, %v2307
    %v2556 = vpack.c.b16 %v2312, %v2308
    %v2557 = vpack.c.b16 %v2313, %v2309
    %v2558 = vpack.c.b16 %v2314, %v2310
    %v2559 = vpack.c.b16 %v2319, %v2315
    %v2560 = vpack.c.b16 %v2320, %v2316
    %v2561 = vpack.c.b16 %v2321, %v2317
    %v2562 = vpack.c.b16 %v2322, %v2318
    %v2563 = vpack.c.b16 %v2327, %v2323
    %v2564 = vpack.c.b16 %v2328, %v2324
    %v2565 = vpack.c.b16 %v2329, %v2325
    %v2566 = vpack.c.b16 %v2330, %v2326
    %v2567 = vpack.c.b16 %v2335, %v2331
    %v2568 = vpack.c.b16 %v2336, %v2332
    %v2569 = vpack.c.b16 %v2337, %v2333
    %v2570 = vpack.c.b16 %v2338, %v2334
    %v2571 = vpack.c.b16 %v2343, %v2339
    %v2572 = vpack.c.b16 %v2344, %v2340
    %v2573 = vpack.c.b16 %v2345, %v2341
    %v2574 = vpack.c.b16 %v2346, %v2342
    %v2575 = vpack.c.b16 %v2351, %v2347
    %v2576 = vpack.c.b16 %v2352, %v2348
    %v2577 = vpack.c.b16 %v2353, %v2349
    %v2578 = vpack.c.b16 %v2354, %v2350
    %v2579 = vpack.c.b16 %v2359, %v2355
    %v2580 = vpack.c.b16 %v2360, %v2356
    %v2581 = vpack.c.b16 %v2361, %v2357
    %v2582 = vpack.c.b16 %v2362, %v2358
    %v2583 = vpack.c.b16 %v2367, %v2363
    %v2584 = vpack.c.b16 %v2368, %v2364
    %v2585 = vpack.c.b16 %v2369, %v2365
    %v2586 = vpack.c.b16 %v2370, %v2366
    %v2587 = vpack.c.b16 %v2375, %v2371
    %v2588 = vpack.c.b16 %v2376, %v2372
    %v2589 = vpack.c.b16 %v2377, %v2373
    %v2590 = vpack.c.b16 %v2378, %v2374
    %v2591 = vpack.c.b16 %v2383, %v2379
    %v2592 = vpack.c.b16 %v2384, %v2380
    %v2593 = vpack.c.b16 %v2385, %v2381
    %v2594 = vpack.c.b16 %v2386, %v2382
    %v2595 = vpack.c.b16 %v2391, %v2387
    %v2596 = vpack.c.b16 %v2392, %v2388
    %v2597 = vpack.c.b16 %v2393, %v2389
    %v2598 = vpack.c.b16 %v2394, %v2390
    %v2599 = vpack.c.b16 %v2399, %v2395
    %v2600 = vpack.c.b16 %v2400, %v2396
    %v2601 = vpack.c.b16 %v2401, %v2397
    %v2602 = vpack.c.b16 %v2402, %v2398
    %v2603 = vpack.c.b16 %v2407, %v2403
    %v2604 = vpack.c.b16 %v2408, %v2404
    %v2605 = vpack.c.b16 %v2409, %v2405
    %v2606 = vpack.c.b16 %v2410, %v2406
    %2803 = vmatprep.subr.bf16.mxu0 %v2440
    %2804 = vmatpush1.bf16.msra.mxu0 %v2439
    %2805 = vmatprep.subr.bf16.mxu0 %v2436
    %2806 = vmatpush1.bf16.msra.mxu0 %v2435
    %2807 = vmatprep.subr.bf16.mxu0 %v2432
    %2808 = vmatpush1.bf16.msra.mxu0 %v2431
    %2809 = vmatprep.subr.bf16.mxu0 %v2428
    %2810 = vmatpush1.bf16.msra.mxu0 %v2427
    %2811 = vmatprep.subr.bf16.mxu0 %v2424
    %2812 = vmatpush1.bf16.msra.mxu0 %v2423
    %2813 = vmatprep.subr.bf16.mxu0 %v2420
    %2814 = vmatpush1.bf16.msra.mxu0 %v2419
    %2815 = vmatprep.subr.bf16.mxu0 %v2416
    %2816 = vmatpush1.bf16.msra.mxu0 %v2415
    %2817 = vmatprep.subr.bf16.mxu0 %v2412
    %2818 = vmatpush1.bf16.msra.mxu0 %v2411
    %2819 = vmatprep.subr.bf16.mxu0 %v2472
    %2820 = vmatpush2.bf16.msra.mxu0 %v2471
    %2821 = vmatprep.subr.bf16.mxu0 %v2468
    %2822 = vmatpush2.bf16.msra.mxu0 %v2467
    %2823 = vmatprep.subr.bf16.mxu0 %v2464
    %2824 = vmatpush2.bf16.msra.mxu0 %v2463
    %2825 = vmatprep.subr.bf16.mxu0 %v2460
    %2826 = vmatpush2.bf16.msra.mxu0 %v2459
    %2827 = vmatprep.subr.bf16.mxu0 %v2456
    %2828 = vmatpush2.bf16.msra.mxu0 %v2455
    %2829 = vmatprep.subr.bf16.mxu0 %v2452
    %2830 = vmatpush2.bf16.msra.mxu0 %v2451
    %2831 = vmatprep.subr.bf16.mxu0 %v2448
    %2832 = vmatpush2.bf16.msra.mxu0 %v2447
    %2833 = vmatprep.subr.bf16.mxu0 %v2444
    %2834 = vmatpush2.bf16.msra.mxu0 %v2443
    %2835 = vmatprep.mubr.bf16.mxu0 %v302
    %2836 = vmatmul.mubr.bf16.gmra.mxu0 %v301
    %v2837 = vpop.f32.mrf.mxu0
    %v2838 = vadd.f32 0.0, %v2837
    %v2839 = vpop.f32.mrf.mxu0
    %v2840 = vadd.f32 0.0, %v2839
    %v2841 = vpop.f32.mrf.mxu0
    %v2842 = vpop.f32.mrf.mxu0
    %2843 = vdwg.mxu0
    %2844 = vmatprep.subr.bf16.mxu0 %v2504
    %2845 = vmatpush1.bf16.msra.mxu0 %v2503
    %2846 = vmatprep.subr.bf16.mxu0 %v2500
    %2847 = vmatpush1.bf16.msra.mxu0 %v2499
    %2848 = vmatprep.subr.bf16.mxu0 %v2496
    %2849 = vmatpush1.bf16.msra.mxu0 %v2495
    %2850 = vmatprep.subr.bf16.mxu0 %v2492
    %2851 = vmatpush1.bf16.msra.mxu0 %v2491
    %2852 = vmatprep.subr.bf16.mxu0 %v2488
    %2853 = vmatpush1.bf16.msra.mxu0 %v2487
    %2854 = vmatprep.subr.bf16.mxu0 %v2484
    %2855 = vmatpush1.bf16.msra.mxu0 %v2483
    %2856 = vmatprep.subr.bf16.mxu0 %v2480
    %2857 = vmatpush1.bf16.msra.mxu0 %v2479
    %2858 = vmatprep.subr.bf16.mxu0 %v2476
    %2859 = vmatpush1.bf16.msra.mxu0 %v2475
    %2860 = vmatprep.subr.bf16.mxu0 %v2536
    %2861 = vmatpush2.bf16.msra.mxu0 %v2535
    %2862 = vmatprep.subr.bf16.mxu0 %v2532
    %2863 = vmatpush2.bf16.msra.mxu0 %v2531
    %2864 = vmatprep.subr.bf16.mxu0 %v2528
    %2865 = vmatpush2.bf16.msra.mxu0 %v2527
    %2866 = vmatprep.subr.bf16.mxu0 %v2524
    %2867 = vmatpush2.bf16.msra.mxu0 %v2523
    %2868 = vmatprep.subr.bf16.mxu0 %v2520
    %2869 = vmatpush2.bf16.msra.mxu0 %v2519
    %2870 = vmatprep.subr.bf16.mxu0 %v2516
    %2871 = vmatpush2.bf16.msra.mxu0 %v2515
    %2872 = vmatprep.subr.bf16.mxu0 %v2512
    %2873 = vmatpush2.bf16.msra.mxu0 %v2511
    %2874 = vmatprep.subr.bf16.mxu0 %v2508
    %2875 = vmatpush2.bf16.msra.mxu0 %v2507
    %2876 = vmatprep.mubr.bf16.mxu0 %v304
    %2877 = vmatmul.mubr.bf16.gmra.mxu0 %v303
    %v2878 = vpop.f32.mrf.mxu0
    %v2879 = vadd.f32 %v2838, %v2878
    %v2880 = vpop.f32.mrf.mxu0
    %v2881 = vadd.f32 %v2840, %v2880
    %v2882 = vpop.f32.mrf.mxu0
    %v2883 = vpop.f32.mrf.mxu0
    %2884 = vdwg.mxu0
    %2885 = vmatprep.subr.bf16.mxu0 %v2568
    %2886 = vmatpush1.bf16.msra.mxu0 %v2567
    %2887 = vmatprep.subr.bf16.mxu0 %v2564
    %2888 = vmatpush1.bf16.msra.mxu0 %v2563
    %2889 = vmatprep.subr.bf16.mxu0 %v2560
    %2890 = vmatpush1.bf16.msra.mxu0 %v2559
    %2891 = vmatprep.subr.bf16.mxu0 %v2556
    %2892 = vmatpush1.bf16.msra.mxu0 %v2555
    %2893 = vmatprep.subr.bf16.mxu0 %v2552
    %2894 = vmatpush1.bf16.msra.mxu0 %v2551
    %2895 = vmatprep.subr.bf16.mxu0 %v2548
    %2896 = vmatpush1.bf16.msra.mxu0 %v2547
    %2897 = vmatprep.subr.bf16.mxu0 %v2544
    %2898 = vmatpush1.bf16.msra.mxu0 %v2543
    %2899 = vmatprep.subr.bf16.mxu0 %v2540
    %2900 = vmatpush1.bf16.msra.mxu0 %v2539
    %2901 = vmatprep.subr.bf16.mxu0 %v2600
    %2902 = vmatpush2.bf16.msra.mxu0 %v2599
    %2903 = vmatprep.subr.bf16.mxu0 %v2596
    %2904 = vmatpush2.bf16.msra.mxu0 %v2595
    %2905 = vmatprep.subr.bf16.mxu0 %v2592
    %2906 = vmatpush2.bf16.msra.mxu0 %v2591
    %2907 = vmatprep.subr.bf16.mxu0 %v2588
    %2908 = vmatpush2.bf16.msra.mxu0 %v2587
    %2909 = vmatprep.subr.bf16.mxu0 %v2584
    %2910 = vmatpush2.bf16.msra.mxu0 %v2583
    %2911 = vmatprep.subr.bf16.mxu0 %v2580
    %2912 = vmatpush2.bf16.msra.mxu0 %v2579
    %2913 = vmatprep.subr.bf16.mxu0 %v2576
    %2914 = vmatpush2.bf16.msra.mxu0 %v2575
    %2915 = vmatprep.subr.bf16.mxu0 %v2572
    %2916 = vmatpush2.bf16.msra.mxu0 %v2571
    %2917 = vmatprep.mubr.bf16.mxu0 %v306
    %2918 = vmatmul.mubr.bf16.gmra.mxu0 %v305
    %v2919 = vpop.f32.mrf.mxu0
    %v2920 = vadd.f32 %v2879, %v2919
    %v2921 = vpop.f32.mrf.mxu0
    %v2922 = vadd.f32 %v2881, %v2921
    %v2923 = vpop.f32.mrf.mxu0
    %v2924 = vpop.f32.mrf.mxu0
    %2925 = vdwg.mxu0
    %2926 = vmatprep.subr.bf16.mxu0 0
    %2927 = vmatpush1.bf16.msra.mxu0 0
    %2928 = vmatprep.subr.bf16.mxu0 0
    %2929 = vmatpush1.bf16.msra.mxu0 0
    %2930 = vmatprep.subr.bf16.mxu0 0
    %2931 = vmatpush1.bf16.msra.mxu0 0
    %2932 = vmatprep.subr.bf16.mxu0 0
    %2933 = vmatpush1.bf16.msra.mxu0 0
    %2934 = vmatprep.subr.bf16.mxu0 0
    %2935 = vmatpush1.bf16.msra.mxu0 0
    %2936 = vmatprep.subr.bf16.mxu0 0
    %2937 = vmatpush1.bf16.msra.mxu0 0
    %2938 = vmatprep.subr.bf16.mxu0 0
    %2939 = vmatpush1.bf16.msra.mxu0 0
    %2940 = vmatprep.subr.bf16.mxu0 %v2604
    %2941 = vmatpush1.bf16.msra.mxu0 %v2603
    %2942 = vmatprep.subr.bf16.mxu0 0
    %2943 = vmatpush2.bf16.msra.mxu0 0
    %2944 = vmatprep.subr.bf16.mxu0 0
    %2945 = vmatpush2.bf16.msra.mxu0 0
    %2946 = vmatprep.subr.bf16.mxu0 0
    %2947 = vmatpush2.bf16.msra.mxu0 0
    %2948 = vmatprep.subr.bf16.mxu0 0
    %2949 = vmatpush2.bf16.msra.mxu0 0
    %2950 = vmatprep.subr.bf16.mxu0 0
    %2951 = vmatpush2.bf16.msra.mxu0 0
    %2952 = vmatprep.subr.bf16.mxu0 0
    %2953 = vmatpush2.bf16.msra.mxu0 0
    %2954 = vmatprep.subr.bf16.mxu0 0
    %2955 = vmatpush2.bf16.msra.mxu0 0
    %2956 = vmatprep.subr.bf16.mxu0 0
    %2957 = vmatpush2.bf16.msra.mxu0 0
    %2958 = vmatprep.mubr.bf16.mxu0 0
    %2959 = vmatmul.mubr.bf16.gmra.mxu0 %v1296
    %v2960 = vpop.f32.mrf.mxu0
    %v2961 = vadd.f32 %v2920, %v2960
    %v2962 = vpop.f32.mrf.mxu0
    %v2963 = vadd.f32 %v2922, %v2962
    %v2964 = vpop.f32.mrf.mxu0
    %v2965 = vpop.f32.mrf.mxu0
    %2966 = vdwg.mxu0
    %2967 = vmatprep.subr.bf16.mxu0 %v2442
    %2968 = vmatpush1.bf16.msra.mxu0 %v2441
    %2969 = vmatprep.subr.bf16.mxu0 %v2438
    %2970 = vmatpush1.bf16.msra.mxu0 %v2437
    %2971 = vmatprep.subr.bf16.mxu0 %v2434
    %2972 = vmatpush1.bf16.msra.mxu0 %v2433
    %2973 = vmatprep.subr.bf16.mxu0 %v2430
    %2974 = vmatpush1.bf16.msra.mxu0 %v2429
    %2975 = vmatprep.subr.bf16.mxu0 %v2426
    %2976 = vmatpush1.bf16.msra.mxu0 %v2425
    %2977 = vmatprep.subr.bf16.mxu0 %v2422
    %2978 = vmatpush1.bf16.msra.mxu0 %v2421
    %2979 = vmatprep.subr.bf16.mxu0 %v2418
    %2980 = vmatpush1.bf16.msra.mxu0 %v2417
    %2981 = vmatprep.subr.bf16.mxu0 %v2414
    %2982 = vmatpush1.bf16.msra.mxu0 %v2413
    %2983 = vmatprep.subr.bf16.mxu0 %v2474
    %2984 = vmatpush2.bf16.msra.mxu0 %v2473
    %2985 = vmatprep.subr.bf16.mxu0 %v2470
    %2986 = vmatpush2.bf16.msra.mxu0 %v2469
    %2987 = vmatprep.subr.bf16.mxu0 %v2466
    %2988 = vmatpush2.bf16.msra.mxu0 %v2465
    %2989 = vmatprep.subr.bf16.mxu0 %v2462
    %2990 = vmatpush2.bf16.msra.mxu0 %v2461
    %2991 = vmatprep.subr.bf16.mxu0 %v2458
    %2992 = vmatpush2.bf16.msra.mxu0 %v2457
    %2993 = vmatprep.subr.bf16.mxu0 %v2454
    %2994 = vmatpush2.bf16.msra.mxu0 %v2453
    %2995 = vmatprep.subr.bf16.mxu0 %v2450
    %2996 = vmatpush2.bf16.msra.mxu0 %v2449
    %2997 = vmatprep.subr.bf16.mxu0 %v2446
    %2998 = vmatpush2.bf16.msra.mxu0 %v2445
    %2999 = vmatprep.mubr.bf16.mxu0 %v302
    %3000 = vmatmul.mubr.bf16.gmra.mxu0 %v301
    %v3001 = vpop.f32.mrf.mxu0
    %v3002 = vadd.f32 0.0, %v3001
    %v3003 = vpop.f32.mrf.mxu0
    %v3004 = vadd.f32 0.0, %v3003
    %v3005 = vpop.f32.mrf.mxu0
    %v3006 = vpop.f32.mrf.mxu0
    %3007 = vdwg.mxu0
    %3008 = vmatprep.subr.bf16.mxu0 %v2506
    %3009 = vmatpush1.bf16.msra.mxu0 %v2505
    %3010 = vmatprep.subr.bf16.mxu0 %v2502
    %3011 = vmatpush1.bf16.msra.mxu0 %v2501
    %3012 = vmatprep.subr.bf16.mxu0 %v2498
    %3013 = vmatpush1.bf16.msra.mxu0 %v2497
    %3014 = vmatprep.subr.bf16.mxu0 %v2494
    %3015 = vmatpush1.bf16.msra.mxu0 %v2493
    %3016 = vmatprep.subr.bf16.mxu0 %v2490
    %3017 = vmatpush1.bf16.msra.mxu0 %v2489
    %3018 = vmatprep.subr.bf16.mxu0 %v2486
    %3019 = vmatpush1.bf16.msra.mxu0 %v2485
    %3020 = vmatprep.subr.bf16.mxu0 %v2482
    %3021 = vmatpush1.bf16.msra.mxu0 %v2481
    %3022 = vmatprep.subr.bf16.mxu0 %v2478
    %3023 = vmatpush1.bf16.msra.mxu0 %v2477
    %3024 = vmatprep.subr.bf16.mxu0 %v2538
    %3025 = vmatpush2.bf16.msra.mxu0 %v2537
    %3026 = vmatprep.subr.bf16.mxu0 %v2534
    %3027 = vmatpush2.bf16.msra.mxu0 %v2533
    %3028 = vmatprep.subr.bf16.mxu0 %v2530
    %3029 = vmatpush2.bf16.msra.mxu0 %v2529
    %3030 = vmatprep.subr.bf16.mxu0 %v2526
    %3031 = vmatpush2.bf16.msra.mxu0 %v2525
    %3032 = vmatprep.subr.bf16.mxu0 %v2522
    %3033 = vmatpush2.bf16.msra.mxu0 %v2521
    %3034 = vmatprep.subr.bf16.mxu0 %v2518
    %3035 = vmatpush2.bf16.msra.mxu0 %v2517
    %3036 = vmatprep.subr.bf16.mxu0 %v2514
    %3037 = vmatpush2.bf16.msra.mxu0 %v2513
    %3038 = vmatprep.subr.bf16.mxu0 %v2510
    %3039 = vmatpush2.bf16.msra.mxu0 %v2509
    %3040 = vmatprep.mubr.bf16.mxu0 %v304
    %3041 = vmatmul.mubr.bf16.gmra.mxu0 %v303
    %v3042 = vpop.f32.mrf.mxu0
    %v3043 = vadd.f32 %v3002, %v3042
    %v3044 = vpop.f32.mrf.mxu0
    %v3045 = vadd.f32 %v3004, %v3044
    %v3046 = vpop.f32.mrf.mxu0
    %v3047 = vpop.f32.mrf.mxu0
    %3048 = vdwg.mxu0
    %3049 = vmatprep.subr.bf16.mxu0 %v2570
    %3050 = vmatpush1.bf16.msra.mxu0 %v2569
    %3051 = vmatprep.subr.bf16.mxu0 %v2566
    %3052 = vmatpush1.bf16.msra.mxu0 %v2565
    %3053 = vmatprep.subr.bf16.mxu0 %v2562
    %3054 = vmatpush1.bf16.msra.mxu0 %v2561
    %3055 = vmatprep.subr.bf16.mxu0 %v2558
    %3056 = vmatpush1.bf16.msra.mxu0 %v2557
    %3057 = vmatprep.subr.bf16.mxu0 %v2554
    %3058 = vmatpush1.bf16.msra.mxu0 %v2553
    %3059 = vmatprep.subr.bf16.mxu0 %v2550
    %3060 = vmatpush1.bf16.msra.mxu0 %v2549
    %3061 = vmatprep.subr.bf16.mxu0 %v2546
    %3062 = vmatpush1.bf16.msra.mxu0 %v2545
    %3063 = vmatprep.subr.bf16.mxu0 %v2542
    %3064 = vmatpush1.bf16.msra.mxu0 %v2541
    %3065 = vmatprep.subr.bf16.mxu0 %v2602
    %3066 = vmatpush2.bf16.msra.mxu0 %v2601
    %3067 = vmatprep.subr.bf16.mxu0 %v2598
    %3068 = vmatpush2.bf16.msra.mxu0 %v2597
    %3069 = vmatprep.subr.bf16.mxu0 %v2594
    %3070 = vmatpush2.bf16.msra.mxu0 %v2593
    %3071 = vmatprep.subr.bf16.mxu0 %v2590
    %3072 = vmatpush2.bf16.msra.mxu0 %v2589
    %3073 = vmatprep.subr.bf16.mxu0 %v2586
    %3074 = vmatpush2.bf16.msra.mxu0 %v2585
    %3075 = vmatprep.subr.bf16.mxu0 %v2582
    %3076 = vmatpush2.bf16.msra.mxu0 %v2581
    %3077 = vmatprep.subr.bf16.mxu0 %v2578
    %3078 = vmatpush2.bf16.msra.mxu0 %v2577
    %3079 = vmatprep.subr.bf16.mxu0 %v2574
    %3080 = vmatpush2.bf16.msra.mxu0 %v2573
    %3081 = vmatprep.mubr.bf16.mxu0 %v306
    %3082 = vmatmul.mubr.bf16.gmra.mxu0 %v305
    %v3083 = vpop.f32.mrf.mxu0
    %v3084 = vadd.f32 %v3043, %v3083
    %v3085 = vpop.f32.mrf.mxu0
    %v3086 = vadd.f32 %v3045, %v3085
    %v3087 = vpop.f32.mrf.mxu0
    %v3088 = vpop.f32.mrf.mxu0
    %3089 = vdwg.mxu0
    %3090 = vmatprep.subr.bf16.mxu0 0
    %3091 = vmatpush1.bf16.msra.mxu0 0
    %3092 = vmatprep.subr.bf16.mxu0 0
    %3093 = vmatpush1.bf16.msra.mxu0 0
    %3094 = vmatprep.subr.bf16.mxu0 0
    %3095 = vmatpush1.bf16.msra.mxu0 0
    %3096 = vmatprep.subr.bf16.mxu0 0
    %3097 = vmatpush1.bf16.msra.mxu0 0
    %3098 = vmatprep.subr.bf16.mxu0 0
    %3099 = vmatpush1.bf16.msra.mxu0 0
    %3100 = vmatprep.subr.bf16.mxu0 0
    %3101 = vmatpush1.bf16.msra.mxu0 0
    %3102 = vmatprep.subr.bf16.mxu0 0
    %3103 = vmatpush1.bf16.msra.mxu0 0
    %3104 = vmatprep.subr.bf16.mxu0 %v2606
    %3105 = vmatpush1.bf16.msra.mxu0 %v2605
    %3106 = vmatprep.subr.bf16.mxu0 0
    %3107 = vmatpush2.bf16.msra.mxu0 0
    %3108 = vmatprep.subr.bf16.mxu0 0
    %3109 = vmatpush2.bf16.msra.mxu0 0
    %3110 = vmatprep.subr.bf16.mxu0 0
    %3111 = vmatpush2.bf16.msra.mxu0 0
    %3112 = vmatprep.subr.bf16.mxu0 0
    %3113 = vmatpush2.bf16.msra.mxu0 0
    %3114 = vmatprep.subr.bf16.mxu0 0
    %3115 = vmatpush2.bf16.msra.mxu0 0
    %3116 = vmatprep.subr.bf16.mxu0 0
    %3117 = vmatpush2.bf16.msra.mxu0 0
    %3118 = vmatprep.subr.bf16.mxu0 0
    %3119 = vmatpush2.bf16.msra.mxu0 0
    %3120 = vmatprep.subr.bf16.mxu0 0
    %3121 = vmatpush2.bf16.msra.mxu0 0
    %3122 = vmatprep.mubr.bf16.mxu0 0
    %3123 = vmatmul.mubr.bf16.gmra.mxu0 %v1296
    %v3124 = vpop.f32.mrf.mxu0
    %v3125 = vadd.f32 %v3084, %v3124
    %v3126 = vpop.f32.mrf.mxu0
    %v3127 = vadd.f32 %v3086, %v3126
    %v3128 = vpop.f32.mrf.mxu0
    %v3129 = vpop.f32.mrf.mxu0
    %3130 = vdwg.mxu0
    %v3131 = vmax.f32 %v1456, %v2961
    %v3132 = vmax.f32 %v1458, %v2963
    %v3133 = vmax.f32 %v1620, %v3125
    %v3134 = vmax.f32 %v1622, %v3127
    %s3135 = scalar_lea.vmem [#allocation2], 3136
    %v3136 = vld [vmem:[%s3135] sm:$0xff]
    %v3137 = vld [vmem:[%s3135 + $0x8] sm:$0xff]
    %v3138 = vld [vmem:[%s3135 + $0x10] sm:$0xff]
    %v3139 = vld [vmem:[%s3135 + $0x18] sm:$0xff]
    %v3140 = vld [vmem:[%s3135 + $0x20] sm:$0xff]
    %v3141 = vld [vmem:[%s3135 + $0x28] sm:$0xff]
    %v3142 = vld [vmem:[%s3135 + $0x30] sm:$0xff]
    %v3143 = vld [vmem:[%s3135 + $0x38] sm:$0xff]
    %v3144 = vld [vmem:[%s3135 + $0x40] sm:$0xff]
    %v3145 = vld [vmem:[%s3135 + $0x48] sm:$0xff]
    %v3146 = vld [vmem:[%s3135 + $0x50] sm:$0xff]
    %v3147 = vld [vmem:[%s3135 + $0x58] sm:$0xff]
    %v3148 = vld [vmem:[%s3135 + $0x60] sm:$0xff]
    %v3149 = vld [vmem:[%s3135 + $0x68] sm:$0xff]
    %v3150 = vld [vmem:[%s3135 + $0x70] sm:$0xff]
    %v3151 = vld [vmem:[%s3135 + $0x78] sm:$0xff]
    %v3152 = vld [vmem:[%s3135 + $0x80] sm:$0xff]
    %v3153 = vld [vmem:[%s3135 + $0x88] sm:$0xff]
    %v3154 = vld [vmem:[%s3135 + $0x90] sm:$0xff]
    %v3155 = vld [vmem:[%s3135 + $0x98] sm:$0xff]
    %v3156 = vld [vmem:[%s3135 + $0xa0] sm:$0xff]
    %v3157 = vld [vmem:[%s3135 + $0xa8] sm:$0xff]
    %v3158 = vld [vmem:[%s3135 + $0xb0] sm:$0xff]
    %v3159 = vld [vmem:[%s3135 + $0xb8] sm:$0xff]
    %v3160 = vld [vmem:[%s3135 + $0xc0] sm:$0xff]
    %v3161 = vld [vmem:[%s3135 + $0xc8] sm:$0xff]
    %v3162 = vld [vmem:[%s3135 + $0xd0] sm:$0xff]
    %v3163 = vld [vmem:[%s3135 + $0xd8] sm:$0xff]
    %v3164 = vld [vmem:[%s3135 + $0xe0] sm:$0xff]
    %v3165 = vld [vmem:[%s3135 + $0xe8] sm:$0xff]
    %v3166 = vld [vmem:[%s3135 + $0xf0] sm:$0xff]
    %v3167 = vld [vmem:[%s3135 + $0xf8] sm:$0xff]
    %v3168 = vld [vmem:[%s3135 + $0x100] sm:$0xff]
    %v3169 = vld [vmem:[%s3135 + $0x108] sm:$0xff]
    %v3170 = vld [vmem:[%s3135 + $0x110] sm:$0xff]
    %v3171 = vld [vmem:[%s3135 + $0x118] sm:$0xff]
    %v3172 = vld [vmem:[%s3135 + $0x120] sm:$0xff]
    %v3173 = vld [vmem:[%s3135 + $0x128] sm:$0xff]
    %v3174 = vld [vmem:[%s3135 + $0x130] sm:$0xff]
    %v3175 = vld [vmem:[%s3135 + $0x138] sm:$0xff]
    %v3176 = vld [vmem:[%s3135 + $0x140] sm:$0xff]
    %v3177 = vld [vmem:[%s3135 + $0x148] sm:$0xff]
    %v3178 = vld [vmem:[%s3135 + $0x150] sm:$0xff]
    %v3179 = vld [vmem:[%s3135 + $0x158] sm:$0xff]
    %v3180 = vld [vmem:[%s3135 + $0x160] sm:$0xff]
    %v3181 = vld [vmem:[%s3135 + $0x168] sm:$0xff]
    %v3182 = vld [vmem:[%s3135 + $0x170] sm:$0xff]
    %v3183 = vld [vmem:[%s3135 + $0x178] sm:$0xff]
    %v3184 = vld [vmem:[%s3135 + $0x180] sm:$0xff]
    %v3185 = vld [vmem:[%s3135 + $0x188] sm:$0xff]
    %v3186 = vld [vmem:[%s3135 + $0x190] sm:$0xff]
    %v3187 = vld [vmem:[%s3135 + $0x198] sm:$0xff]
    %v3188 = vld [vmem:[%s3135 + $0x1a0] sm:$0xff]
    %v3189 = vld [vmem:[%s3135 + $0x1a8] sm:$0xff]
    %v3190 = vld [vmem:[%s3135 + $0x1b0] sm:$0xff]
    %v3191 = vld [vmem:[%s3135 + $0x1b8] sm:$0xff]
    %v3192 = vld [vmem:[%s3135 + $0x1c0] sm:$0xff]
    %v3193 = vld [vmem:[%s3135 + $0x1c8] sm:$0xff]
    %v3194 = vld [vmem:[%s3135 + $0x1d0] sm:$0xff]
    %v3195 = vld [vmem:[%s3135 + $0x1d8] sm:$0xff]
    %v3196 = vld [vmem:[%s3135 + $0x1e0] sm:$0xff]
    %v3197 = vld [vmem:[%s3135 + $0x1e8] sm:$0xff]
    %v3198 = vld [vmem:[%s3135 + $0x1f0] sm:$0xff]
    %v3199 = vld [vmem:[%s3135 + $0x1f8] sm:$0xff]
    %v3200 = vld [vmem:[%s3135 + $0x200] sm:$0xff]
    %v3201 = vld [vmem:[%s3135 + $0x208] sm:$0xff]
    %v3202 = vld [vmem:[%s3135 + $0x210] sm:$0xff]
    %v3203 = vld [vmem:[%s3135 + $0x218] sm:$0xff]
    %v3204 = vld [vmem:[%s3135 + $0x220] sm:$0xff]
    %v3205 = vld [vmem:[%s3135 + $0x228] sm:$0xff]
    %v3206 = vld [vmem:[%s3135 + $0x230] sm:$0xff]
    %v3207 = vld [vmem:[%s3135 + $0x238] sm:$0xff]
    %v3208 = vld [vmem:[%s3135 + $0x240] sm:$0xff]
    %v3209 = vld [vmem:[%s3135 + $0x248] sm:$0xff]
    %v3210 = vld [vmem:[%s3135 + $0x250] sm:$0xff]
    %v3211 = vld [vmem:[%s3135 + $0x258] sm:$0xff]
    %v3212 = vld [vmem:[%s3135 + $0x260] sm:$0xff]
    %v3213 = vld [vmem:[%s3135 + $0x268] sm:$0xff]
    %v3214 = vld [vmem:[%s3135 + $0x270] sm:$0xff]
    %v3215 = vld [vmem:[%s3135 + $0x278] sm:$0xff]
    %v3216 = vld [vmem:[%s3135 + $0x280] sm:$0xff]
    %v3217 = vld [vmem:[%s3135 + $0x288] sm:$0xff]
    %v3218 = vld [vmem:[%s3135 + $0x290] sm:$0xff]
    %v3219 = vld [vmem:[%s3135 + $0x298] sm:$0xff]
    %v3220 = vld [vmem:[%s3135 + $0x2a0] sm:$0xff]
    %v3221 = vld [vmem:[%s3135 + $0x2a8] sm:$0xff]
    %v3222 = vld [vmem:[%s3135 + $0x2b0] sm:$0xff]
    %v3223 = vld [vmem:[%s3135 + $0x2b8] sm:$0xff]
    %v3224 = vld [vmem:[%s3135 + $0x2c0] sm:$0xff]
    %v3225 = vld [vmem:[%s3135 + $0x2c8] sm:$0xff]
    %v3226 = vld [vmem:[%s3135 + $0x2d0] sm:$0xff]
    %v3227 = vld [vmem:[%s3135 + $0x2d8] sm:$0xff]
    %v3228 = vld [vmem:[%s3135 + $0x2e0] sm:$0xff]
    %v3229 = vld [vmem:[%s3135 + $0x2e8] sm:$0xff]
    %v3230 = vld [vmem:[%s3135 + $0x2f0] sm:$0xff]
    %v3231 = vld [vmem:[%s3135 + $0x2f8] sm:$0xff]
    %v3232 = vld [vmem:[%s3135 + $0x300] sm:$0xff]
    %v3233 = vld [vmem:[%s3135 + $0x308] sm:$0xff]
    %v3234 = vld [vmem:[%s3135 + $0x310] sm:$0xff]
    %v3235 = vld [vmem:[%s3135 + $0x318] sm:$0xff]
    %v3236 = vld [vmem:[%s3135 + $0x320] sm:$0xff]
    %v3237 = vld [vmem:[%s3135 + $0x328] sm:$0xff]
    %v3238 = vld [vmem:[%s3135 + $0x330] sm:$0xff]
    %v3239 = vld [vmem:[%s3135 + $0x338] sm:$0xff]
    %v3240 = vld [vmem:[%s3135 + $0x340] sm:$0xff]
    %v3241 = vld [vmem:[%s3135 + $0x348] sm:$0xff]
    %v3242 = vld [vmem:[%s3135 + $0x350] sm:$0xff]
    %v3243 = vld [vmem:[%s3135 + $0x358] sm:$0xff]
    %v3244 = vld [vmem:[%s3135 + $0x360] sm:$0xff]
    %v3245 = vld [vmem:[%s3135 + $0x368] sm:$0xff]
    %v3246 = vld [vmem:[%s3135 + $0x370] sm:$0xff]
    %v3247 = vld [vmem:[%s3135 + $0x378] sm:$0xff]
    %v3248 = vld [vmem:[%s3135 + $0x380] sm:$0xff]
    %v3249 = vld [vmem:[%s3135 + $0x388] sm:$0xff]
    %v3250 = vld [vmem:[%s3135 + $0x390] sm:$0xff]
    %v3251 = vld [vmem:[%s3135 + $0x398] sm:$0xff]
    %v3252 = vld [vmem:[%s3135 + $0x3a0] sm:$0xff]
    %v3253 = vld [vmem:[%s3135 + $0x3a8] sm:$0xff]
    %v3254 = vld [vmem:[%s3135 + $0x3b0] sm:$0xff]
    %v3255 = vld [vmem:[%s3135 + $0x3b8] sm:$0xff]
    %v3256 = vld [vmem:[%s3135 + $0x3c0] sm:$0xff]
    %v3257 = vld [vmem:[%s3135 + $0x3c8] sm:$0xff]
    %v3258 = vld [vmem:[%s3135 + $0x3d0] sm:$0xff]
    %v3259 = vld [vmem:[%s3135 + $0x3d8] sm:$0xff]
    %v3260 = vld [vmem:[%s3135 + $0x3e0] sm:$0xff]
    %v3261 = vld [vmem:[%s3135 + $0x3e8] sm:$0xff]
    %v3262 = vld [vmem:[%s3135 + $0x3f0] sm:$0xff]
    %v3263 = vld [vmem:[%s3135 + $0x3f8] sm:$0xff]
    %v3264 = vld [vmem:[%s3135 + $0x400] sm:$0xff]
    %v3265 = vld [vmem:[%s3135 + $0x408] sm:$0xff]
    %v3266 = vld [vmem:[%s3135 + $0x410] sm:$0xff]
    %v3267 = vld [vmem:[%s3135 + $0x418] sm:$0xff]
    %v3268 = vld [vmem:[%s3135 + $0x420] sm:$0xff]
    %v3269 = vld [vmem:[%s3135 + $0x428] sm:$0xff]
    %v3270 = vld [vmem:[%s3135 + $0x430] sm:$0xff]
    %v3271 = vld [vmem:[%s3135 + $0x438] sm:$0xff]
    %v3272 = vld [vmem:[%s3135 + $0x440] sm:$0xff]
    %v3273 = vld [vmem:[%s3135 + $0x448] sm:$0xff]
    %v3274 = vld [vmem:[%s3135 + $0x450] sm:$0xff]
    %v3275 = vld [vmem:[%s3135 + $0x458] sm:$0xff]
    %v3276 = vld [vmem:[%s3135 + $0x460] sm:$0xff]
    %v3277 = vld [vmem:[%s3135 + $0x468] sm:$0xff]
    %v3278 = vld [vmem:[%s3135 + $0x470] sm:$0xff]
    %v3279 = vld [vmem:[%s3135 + $0x478] sm:$0xff]
    %v3280 = vld [vmem:[%s3135 + $0x480] sm:$0xff]
    %v3281 = vld [vmem:[%s3135 + $0x488] sm:$0xff]
    %v3282 = vld [vmem:[%s3135 + $0x490] sm:$0xff]
    %v3283 = vld [vmem:[%s3135 + $0x498] sm:$0xff]
    %v3284 = vld [vmem:[%s3135 + $0x4a0] sm:$0xff]
    %v3285 = vld [vmem:[%s3135 + $0x4a8] sm:$0xff]
    %v3286 = vld [vmem:[%s3135 + $0x4b0] sm:$0xff]
    %v3287 = vld [vmem:[%s3135 + $0x4b8] sm:$0xff]
    %v3288 = vld [vmem:[%s3135 + $0x4c0] sm:$0xff]
    %v3289 = vld [vmem:[%s3135 + $0x4c8] sm:$0xff]
    %v3290 = vld [vmem:[%s3135 + $0x4d0] sm:$0xff]
    %v3291 = vld [vmem:[%s3135 + $0x4d8] sm:$0xff]
    %v3292 = vld [vmem:[%s3135 + $0x4e0] sm:$0xff]
    %v3293 = vld [vmem:[%s3135 + $0x4e8] sm:$0xff]
    %v3294 = vld [vmem:[%s3135 + $0x4f0] sm:$0xff]
    %v3295 = vld [vmem:[%s3135 + $0x4f8] sm:$0xff]
    %v3296 = vld [vmem:[%s3135 + $0x500] sm:$0xff]
    %v3297 = vld [vmem:[%s3135 + $0x508] sm:$0xff]
    %v3298 = vld [vmem:[%s3135 + $0x510] sm:$0xff]
    %v3299 = vld [vmem:[%s3135 + $0x518] sm:$0xff]
    %v3300 = vld [vmem:[%s3135 + $0x520] sm:$0xff]
    %v3301 = vld [vmem:[%s3135 + $0x528] sm:$0xff]
    %v3302 = vld [vmem:[%s3135 + $0x530] sm:$0xff]
    %v3303 = vld [vmem:[%s3135 + $0x538] sm:$0xff]
    %v3304 = vld [vmem:[%s3135 + $0x540] sm:$0xff]
    %v3305 = vld [vmem:[%s3135 + $0x548] sm:$0xff]
    %v3306 = vld [vmem:[%s3135 + $0x550] sm:$0xff]
    %v3307 = vld [vmem:[%s3135 + $0x558] sm:$0xff]
    %v3308 = vld [vmem:[%s3135 + $0x560] sm:$0xff]
    %v3309 = vld [vmem:[%s3135 + $0x568] sm:$0xff]
    %v3310 = vld [vmem:[%s3135 + $0x570] sm:$0xff]
    %v3311 = vld [vmem:[%s3135 + $0x578] sm:$0xff]
    %v3312 = vld [vmem:[%s3135 + $0x580] sm:$0xff]
    %v3313 = vld [vmem:[%s3135 + $0x588] sm:$0xff]
    %v3314 = vld [vmem:[%s3135 + $0x590] sm:$0xff]
    %v3315 = vld [vmem:[%s3135 + $0x598] sm:$0xff]
    %v3316 = vld [vmem:[%s3135 + $0x5a0] sm:$0xff]
    %v3317 = vld [vmem:[%s3135 + $0x5a8] sm:$0xff]
    %v3318 = vld [vmem:[%s3135 + $0x5b0] sm:$0xff]
    %v3319 = vld [vmem:[%s3135 + $0x5b8] sm:$0xff]
    %v3320 = vld [vmem:[%s3135 + $0x5c0] sm:$0xff]
    %v3321 = vld [vmem:[%s3135 + $0x5c8] sm:$0xff]
    %v3322 = vld [vmem:[%s3135 + $0x5d0] sm:$0xff]
    %v3323 = vld [vmem:[%s3135 + $0x5d8] sm:$0xff]
    %v3324 = vld [vmem:[%s3135 + $0x5e0] sm:$0xff]
    %v3325 = vld [vmem:[%s3135 + $0x5e8] sm:$0xff]
    %v3326 = vld [vmem:[%s3135 + $0x5f0] sm:$0xff]
    %v3327 = vld [vmem:[%s3135 + $0x5f8] sm:$0xff]
    %v3328 = vld [vmem:[%s3135 + $0x600] sm:$0xff]
    %v3329 = vld [vmem:[%s3135 + $0x608] sm:$0xff]
    %v3330 = vld [vmem:[%s3135 + $0x610] sm:$0xff]
    %v3331 = vld [vmem:[%s3135 + $0x618] sm:$0xff]
    %v3528 = vunpack.c.l.b16 %v3136
    %v3529 = vunpack.c.h.b16 %v3136
    %v3530 = vunpack.c.l.b16 %v3137
    %v3531 = vunpack.c.h.b16 %v3137
    %v3532 = vunpack.c.l.b16 %v3138
    %v3533 = vunpack.c.h.b16 %v3138
    %v3534 = vunpack.c.l.b16 %v3139
    %v3535 = vunpack.c.h.b16 %v3139
    %v3536 = vunpack.c.l.b16 %v3140
    %v3537 = vunpack.c.h.b16 %v3140
    %v3538 = vunpack.c.l.b16 %v3141
    %v3539 = vunpack.c.h.b16 %v3141
    %v3540 = vunpack.c.l.b16 %v3142
    %v3541 = vunpack.c.h.b16 %v3142
    %v3542 = vunpack.c.l.b16 %v3143
    %v3543 = vunpack.c.h.b16 %v3143
    %v3544 = vunpack.c.l.b16 %v3144
    %v3545 = vunpack.c.h.b16 %v3144
    %v3546 = vunpack.c.l.b16 %v3145
    %v3547 = vunpack.c.h.b16 %v3145
    %v3548 = vunpack.c.l.b16 %v3146
    %v3549 = vunpack.c.h.b16 %v3146
    %v3550 = vunpack.c.l.b16 %v3147
    %v3551 = vunpack.c.h.b16 %v3147
    %v3552 = vunpack.c.l.b16 %v3148
    %v3553 = vunpack.c.h.b16 %v3148
    %v3554 = vunpack.c.l.b16 %v3149
    %v3555 = vunpack.c.h.b16 %v3149
    %v3556 = vunpack.c.l.b16 %v3150
    %v3557 = vunpack.c.h.b16 %v3150
    %v3558 = vunpack.c.l.b16 %v3151
    %v3559 = vunpack.c.h.b16 %v3151
    %v3560 = vunpack.c.l.b16 %v3152
    %v3561 = vunpack.c.h.b16 %v3152
    %v3562 = vunpack.c.l.b16 %v3153
    %v3563 = vunpack.c.h.b16 %v3153
    %v3564 = vunpack.c.l.b16 %v3154
    %v3565 = vunpack.c.h.b16 %v3154
    %v3566 = vunpack.c.l.b16 %v3155
    %v3567 = vunpack.c.h.b16 %v3155
    %v3568 = vunpack.c.l.b16 %v3156
    %v3569 = vunpack.c.h.b16 %v3156
    %v3570 = vunpack.c.l.b16 %v3157
    %v3571 = vunpack.c.h.b16 %v3157
    %v3572 = vunpack.c.l.b16 %v3158
    %v3573 = vunpack.c.h.b16 %v3158
    %v3574 = vunpack.c.l.b16 %v3159
    %v3575 = vunpack.c.h.b16 %v3159
    %v3576 = vunpack.c.l.b16 %v3160
    %v3577 = vunpack.c.h.b16 %v3160
    %v3578 = vunpack.c.l.b16 %v3161
    %v3579 = vunpack.c.h.b16 %v3161
    %v3580 = vunpack.c.l.b16 %v3162
    %v3581 = vunpack.c.h.b16 %v3162
    %v3582 = vunpack.c.l.b16 %v3163
    %v3583 = vunpack.c.h.b16 %v3163
    %v3584 = vunpack.c.l.b16 %v3164
    %v3585 = vunpack.c.h.b16 %v3164
    %v3586 = vunpack.c.l.b16 %v3165
    %v3587 = vunpack.c.h.b16 %v3165
    %v3588 = vunpack.c.l.b16 %v3166
    %v3589 = vunpack.c.h.b16 %v3166
    %v3590 = vunpack.c.l.b16 %v3167
    %v3591 = vunpack.c.h.b16 %v3167
    %v3592 = vunpack.c.l.b16 %v3168
    %v3593 = vunpack.c.h.b16 %v3168
    %v3594 = vunpack.c.l.b16 %v3169
    %v3595 = vunpack.c.h.b16 %v3169
    %v3596 = vunpack.c.l.b16 %v3170
    %v3597 = vunpack.c.h.b16 %v3170
    %v3598 = vunpack.c.l.b16 %v3171
    %v3599 = vunpack.c.h.b16 %v3171
    %v3600 = vunpack.c.l.b16 %v3172
    %v3601 = vunpack.c.h.b16 %v3172
    %v3602 = vunpack.c.l.b16 %v3173
    %v3603 = vunpack.c.h.b16 %v3173
    %v3604 = vunpack.c.l.b16 %v3174
    %v3605 = vunpack.c.h.b16 %v3174
    %v3606 = vunpack.c.l.b16 %v3175
    %v3607 = vunpack.c.h.b16 %v3175
    %v3608 = vunpack.c.l.b16 %v3176
    %v3609 = vunpack.c.h.b16 %v3176
    %v3610 = vunpack.c.l.b16 %v3177
    %v3611 = vunpack.c.h.b16 %v3177
    %v3612 = vunpack.c.l.b16 %v3178
    %v3613 = vunpack.c.h.b16 %v3178
    %v3614 = vunpack.c.l.b16 %v3179
    %v3615 = vunpack.c.h.b16 %v3179
    %v3616 = vunpack.c.l.b16 %v3180
    %v3617 = vunpack.c.h.b16 %v3180
    %v3618 = vunpack.c.l.b16 %v3181
    %v3619 = vunpack.c.h.b16 %v3181
    %v3620 = vunpack.c.l.b16 %v3182
    %v3621 = vunpack.c.h.b16 %v3182
    %v3622 = vunpack.c.l.b16 %v3183
    %v3623 = vunpack.c.h.b16 %v3183
    %v3624 = vunpack.c.l.b16 %v3184
    %v3625 = vunpack.c.h.b16 %v3184
    %v3626 = vunpack.c.l.b16 %v3185
    %v3627 = vunpack.c.h.b16 %v3185
    %v3628 = vunpack.c.l.b16 %v3186
    %v3629 = vunpack.c.h.b16 %v3186
    %v3630 = vunpack.c.l.b16 %v3187
    %v3631 = vunpack.c.h.b16 %v3187
    %v3632 = vunpack.c.l.b16 %v3188
    %v3633 = vunpack.c.h.b16 %v3188
    %v3634 = vunpack.c.l.b16 %v3189
    %v3635 = vunpack.c.h.b16 %v3189
    %v3636 = vunpack.c.l.b16 %v3190
    %v3637 = vunpack.c.h.b16 %v3190
    %v3638 = vunpack.c.l.b16 %v3191
    %v3639 = vunpack.c.h.b16 %v3191
    %v3640 = vunpack.c.l.b16 %v3192
    %v3641 = vunpack.c.h.b16 %v3192
    %v3642 = vunpack.c.l.b16 %v3193
    %v3643 = vunpack.c.h.b16 %v3193
    %v3644 = vunpack.c.l.b16 %v3194
    %v3645 = vunpack.c.h.b16 %v3194
    %v3646 = vunpack.c.l.b16 %v3195
    %v3647 = vunpack.c.h.b16 %v3195
    %v3648 = vunpack.c.l.b16 %v3196
    %v3649 = vunpack.c.h.b16 %v3196
    %v3650 = vunpack.c.l.b16 %v3197
    %v3651 = vunpack.c.h.b16 %v3197
    %v3652 = vunpack.c.l.b16 %v3198
    %v3653 = vunpack.c.h.b16 %v3198
    %v3654 = vunpack.c.l.b16 %v3199
    %v3655 = vunpack.c.h.b16 %v3199
    %v3656 = vunpack.c.l.b16 %v3200
    %v3657 = vunpack.c.h.b16 %v3200
    %v3658 = vunpack.c.l.b16 %v3201
    %v3659 = vunpack.c.h.b16 %v3201
    %v3660 = vunpack.c.l.b16 %v3202
    %v3661 = vunpack.c.h.b16 %v3202
    %v3662 = vunpack.c.l.b16 %v3203
    %v3663 = vunpack.c.h.b16 %v3203
    %v3664 = vunpack.c.l.b16 %v3204
    %v3665 = vunpack.c.h.b16 %v3204
    %v3666 = vunpack.c.l.b16 %v3205
    %v3667 = vunpack.c.h.b16 %v3205
    %v3668 = vunpack.c.l.b16 %v3206
    %v3669 = vunpack.c.h.b16 %v3206
    %v3670 = vunpack.c.l.b16 %v3207
    %v3671 = vunpack.c.h.b16 %v3207
    %v3672 = vunpack.c.l.b16 %v3208
    %v3673 = vunpack.c.h.b16 %v3208
    %v3674 = vunpack.c.l.b16 %v3209
    %v3675 = vunpack.c.h.b16 %v3209
    %v3676 = vunpack.c.l.b16 %v3210
    %v3677 = vunpack.c.h.b16 %v3210
    %v3678 = vunpack.c.l.b16 %v3211
    %v3679 = vunpack.c.h.b16 %v3211
    %v3680 = vunpack.c.l.b16 %v3212
    %v3681 = vunpack.c.h.b16 %v3212
    %v3682 = vunpack.c.l.b16 %v3213
    %v3683 = vunpack.c.h.b16 %v3213
    %v3684 = vunpack.c.l.b16 %v3214
    %v3685 = vunpack.c.h.b16 %v3214
    %v3686 = vunpack.c.l.b16 %v3215
    %v3687 = vunpack.c.h.b16 %v3215
    %v3688 = vunpack.c.l.b16 %v3216
    %v3689 = vunpack.c.h.b16 %v3216
    %v3690 = vunpack.c.l.b16 %v3217
    %v3691 = vunpack.c.h.b16 %v3217
    %v3692 = vunpack.c.l.b16 %v3218
    %v3693 = vunpack.c.h.b16 %v3218
    %v3694 = vunpack.c.l.b16 %v3219
    %v3695 = vunpack.c.h.b16 %v3219
    %v3696 = vunpack.c.l.b16 %v3220
    %v3697 = vunpack.c.h.b16 %v3220
    %v3698 = vunpack.c.l.b16 %v3221
    %v3699 = vunpack.c.h.b16 %v3221
    %v3700 = vunpack.c.l.b16 %v3222
    %v3701 = vunpack.c.h.b16 %v3222
    %v3702 = vunpack.c.l.b16 %v3223
    %v3703 = vunpack.c.h.b16 %v3223
    %v3704 = vunpack.c.l.b16 %v3224
    %v3705 = vunpack.c.h.b16 %v3224
    %v3706 = vunpack.c.l.b16 %v3225
    %v3707 = vunpack.c.h.b16 %v3225
    %v3708 = vunpack.c.l.b16 %v3226
    %v3709 = vunpack.c.h.b16 %v3226
    %v3710 = vunpack.c.l.b16 %v3227
    %v3711 = vunpack.c.h.b16 %v3227
    %v3712 = vunpack.c.l.b16 %v3228
    %v3713 = vunpack.c.h.b16 %v3228
    %v3714 = vunpack.c.l.b16 %v3229
    %v3715 = vunpack.c.h.b16 %v3229
    %v3716 = vunpack.c.l.b16 %v3230
    %v3717 = vunpack.c.h.b16 %v3230
    %v3718 = vunpack.c.l.b16 %v3231
    %v3719 = vunpack.c.h.b16 %v3231
    %v3720 = vunpack.c.l.b16 %v3232
    %v3721 = vunpack.c.h.b16 %v3232
    %v3722 = vunpack.c.l.b16 %v3233
    %v3723 = vunpack.c.h.b16 %v3233
    %v3724 = vunpack.c.l.b16 %v3234
    %v3725 = vunpack.c.h.b16 %v3234
    %v3726 = vunpack.c.l.b16 %v3235
    %v3727 = vunpack.c.h.b16 %v3235
    %v3728 = vunpack.c.l.b16 %v3236
    %v3729 = vunpack.c.h.b16 %v3236
    %v3730 = vunpack.c.l.b16 %v3237
    %v3731 = vunpack.c.h.b16 %v3237
    %v3732 = vunpack.c.l.b16 %v3238
    %v3733 = vunpack.c.h.b16 %v3238
    %v3734 = vunpack.c.l.b16 %v3239
    %v3735 = vunpack.c.h.b16 %v3239
    %v3736 = vunpack.c.l.b16 %v3240
    %v3737 = vunpack.c.h.b16 %v3240
    %v3738 = vunpack.c.l.b16 %v3241
    %v3739 = vunpack.c.h.b16 %v3241
    %v3740 = vunpack.c.l.b16 %v3242
    %v3741 = vunpack.c.h.b16 %v3242
    %v3742 = vunpack.c.l.b16 %v3243
    %v3743 = vunpack.c.h.b16 %v3243
    %v3744 = vunpack.c.l.b16 %v3244
    %v3745 = vunpack.c.h.b16 %v3244
    %v3746 = vunpack.c.l.b16 %v3245
    %v3747 = vunpack.c.h.b16 %v3245
    %v3748 = vunpack.c.l.b16 %v3246
    %v3749 = vunpack.c.h.b16 %v3246
    %v3750 = vunpack.c.l.b16 %v3247
    %v3751 = vunpack.c.h.b16 %v3247
    %v3752 = vunpack.c.l.b16 %v3248
    %v3753 = vunpack.c.h.b16 %v3248
    %v3754 = vunpack.c.l.b16 %v3249
    %v3755 = vunpack.c.h.b16 %v3249
    %v3756 = vunpack.c.l.b16 %v3250
    %v3757 = vunpack.c.h.b16 %v3250
    %v3758 = vunpack.c.l.b16 %v3251
    %v3759 = vunpack.c.h.b16 %v3251
    %v3760 = vunpack.c.l.b16 %v3252
    %v3761 = vunpack.c.h.b16 %v3252
    %v3762 = vunpack.c.l.b16 %v3253
    %v3763 = vunpack.c.h.b16 %v3253
    %v3764 = vunpack.c.l.b16 %v3254
    %v3765 = vunpack.c.h.b16 %v3254
    %v3766 = vunpack.c.l.b16 %v3255
    %v3767 = vunpack.c.h.b16 %v3255
    %v3768 = vunpack.c.l.b16 %v3256
    %v3769 = vunpack.c.h.b16 %v3256
    %v3770 = vunpack.c.l.b16 %v3257
    %v3771 = vunpack.c.h.b16 %v3257
    %v3772 = vunpack.c.l.b16 %v3258
    %v3773 = vunpack.c.h.b16 %v3258
    %v3774 = vunpack.c.l.b16 %v3259
    %v3775 = vunpack.c.h.b16 %v3259
    %v3776 = vunpack.c.l.b16 %v3260
    %v3777 = vunpack.c.h.b16 %v3260
    %v3778 = vunpack.c.l.b16 %v3261
    %v3779 = vunpack.c.h.b16 %v3261
    %v3780 = vunpack.c.l.b16 %v3262
    %v3781 = vunpack.c.h.b16 %v3262
    %v3782 = vunpack.c.l.b16 %v3263
    %v3783 = vunpack.c.h.b16 %v3263
    %v3784 = vunpack.c.l.b16 %v3264
    %v3785 = vunpack.c.h.b16 %v3264
    %v3786 = vunpack.c.l.b16 %v3265
    %v3787 = vunpack.c.h.b16 %v3265
    %v3788 = vunpack.c.l.b16 %v3266
    %v3789 = vunpack.c.h.b16 %v3266
    %v3790 = vunpack.c.l.b16 %v3267
    %v3791 = vunpack.c.h.b16 %v3267
    %v3792 = vunpack.c.l.b16 %v3268
    %v3793 = vunpack.c.h.b16 %v3268
    %v3794 = vunpack.c.l.b16 %v3269
    %v3795 = vunpack.c.h.b16 %v3269
    %v3796 = vunpack.c.l.b16 %v3270
    %v3797 = vunpack.c.h.b16 %v3270
    %v3798 = vunpack.c.l.b16 %v3271
    %v3799 = vunpack.c.h.b16 %v3271
    %v3800 = vunpack.c.l.b16 %v3272
    %v3801 = vunpack.c.h.b16 %v3272
    %v3802 = vunpack.c.l.b16 %v3273
    %v3803 = vunpack.c.h.b16 %v3273
    %v3804 = vunpack.c.l.b16 %v3274
    %v3805 = vunpack.c.h.b16 %v3274
    %v3806 = vunpack.c.l.b16 %v3275
    %v3807 = vunpack.c.h.b16 %v3275
    %v3808 = vunpack.c.l.b16 %v3276
    %v3809 = vunpack.c.h.b16 %v3276
    %v3810 = vunpack.c.l.b16 %v3277
    %v3811 = vunpack.c.h.b16 %v3277
    %v3812 = vunpack.c.l.b16 %v3278
    %v3813 = vunpack.c.h.b16 %v3278
    %v3814 = vunpack.c.l.b16 %v3279
    %v3815 = vunpack.c.h.b16 %v3279
    %v3816 = vunpack.c.l.b16 %v3280
    %v3817 = vunpack.c.h.b16 %v3280
    %v3818 = vunpack.c.l.b16 %v3281
    %v3819 = vunpack.c.h.b16 %v3281
    %v3820 = vunpack.c.l.b16 %v3282
    %v3821 = vunpack.c.h.b16 %v3282
    %v3822 = vunpack.c.l.b16 %v3283
    %v3823 = vunpack.c.h.b16 %v3283
    %v3824 = vunpack.c.l.b16 %v3284
    %v3825 = vunpack.c.h.b16 %v3284
    %v3826 = vunpack.c.l.b16 %v3285
    %v3827 = vunpack.c.h.b16 %v3285
    %v3828 = vunpack.c.l.b16 %v3286
    %v3829 = vunpack.c.h.b16 %v3286
    %v3830 = vunpack.c.l.b16 %v3287
    %v3831 = vunpack.c.h.b16 %v3287
    %v3832 = vunpack.c.l.b16 %v3288
    %v3833 = vunpack.c.h.b16 %v3288
    %v3834 = vunpack.c.l.b16 %v3289
    %v3835 = vunpack.c.h.b16 %v3289
    %v3836 = vunpack.c.l.b16 %v3290
    %v3837 = vunpack.c.h.b16 %v3290
    %v3838 = vunpack.c.l.b16 %v3291
    %v3839 = vunpack.c.h.b16 %v3291
    %v3840 = vunpack.c.l.b16 %v3292
    %v3841 = vunpack.c.h.b16 %v3292
    %v3842 = vunpack.c.l.b16 %v3293
    %v3843 = vunpack.c.h.b16 %v3293
    %v3844 = vunpack.c.l.b16 %v3294
    %v3845 = vunpack.c.h.b16 %v3294
    %v3846 = vunpack.c.l.b16 %v3295
    %v3847 = vunpack.c.h.b16 %v3295
    %v3848 = vunpack.c.l.b16 %v3296
    %v3849 = vunpack.c.h.b16 %v3296
    %v3850 = vunpack.c.l.b16 %v3297
    %v3851 = vunpack.c.h.b16 %v3297
    %v3852 = vunpack.c.l.b16 %v3298
    %v3853 = vunpack.c.h.b16 %v3298
    %v3854 = vunpack.c.l.b16 %v3299
    %v3855 = vunpack.c.h.b16 %v3299
    %v3856 = vunpack.c.l.b16 %v3300
    %v3857 = vunpack.c.h.b16 %v3300
    %v3858 = vunpack.c.l.b16 %v3301
    %v3859 = vunpack.c.h.b16 %v3301
    %v3860 = vunpack.c.l.b16 %v3302
    %v3861 = vunpack.c.h.b16 %v3302
    %v3862 = vunpack.c.l.b16 %v3303
    %v3863 = vunpack.c.h.b16 %v3303
    %v3864 = vunpack.c.l.b16 %v3304
    %v3865 = vunpack.c.h.b16 %v3304
    %v3866 = vunpack.c.l.b16 %v3305
    %v3867 = vunpack.c.h.b16 %v3305
    %v3868 = vunpack.c.l.b16 %v3306
    %v3869 = vunpack.c.h.b16 %v3306
    %v3870 = vunpack.c.l.b16 %v3307
    %v3871 = vunpack.c.h.b16 %v3307
    %v3872 = vunpack.c.l.b16 %v3308
    %v3873 = vunpack.c.h.b16 %v3308
    %v3874 = vunpack.c.l.b16 %v3309
    %v3875 = vunpack.c.h.b16 %v3309
    %v3876 = vunpack.c.l.b16 %v3310
    %v3877 = vunpack.c.h.b16 %v3310
    %v3878 = vunpack.c.l.b16 %v3311
    %v3879 = vunpack.c.h.b16 %v3311
    %v3880 = vunpack.c.l.b16 %v3312
    %v3881 = vunpack.c.h.b16 %v3312
    %v3882 = vunpack.c.l.b16 %v3313
    %v3883 = vunpack.c.h.b16 %v3313
    %v3884 = vunpack.c.l.b16 %v3314
    %v3885 = vunpack.c.h.b16 %v3314
    %v3886 = vunpack.c.l.b16 %v3315
    %v3887 = vunpack.c.h.b16 %v3315
    %v3888 = vunpack.c.l.b16 %v3316
    %v3889 = vunpack.c.h.b16 %v3316
    %v3890 = vunpack.c.l.b16 %v3317
    %v3891 = vunpack.c.h.b16 %v3317
    %v3892 = vunpack.c.l.b16 %v3318
    %v3893 = vunpack.c.h.b16 %v3318
    %v3894 = vunpack.c.l.b16 %v3319
    %v3895 = vunpack.c.h.b16 %v3319
    %v3896 = vunpack.c.l.b16 %v3320
    %v3897 = vunpack.c.h.b16 %v3320
    %v3898 = vunpack.c.l.b16 %v3321
    %v3899 = vunpack.c.h.b16 %v3321
    %v3900 = vunpack.c.l.b16 %v3322
    %v3901 = vunpack.c.h.b16 %v3322
    %v3902 = vunpack.c.l.b16 %v3323
    %v3903 = vunpack.c.h.b16 %v3323
    %v3904 = vunpack.c.l.b16 %v3324
    %v3905 = vunpack.c.h.b16 %v3324
    %v3906 = vunpack.c.l.b16 %v3325
    %v3907 = vunpack.c.h.b16 %v3325
    %v3908 = vunpack.c.l.b16 %v3326
    %v3909 = vunpack.c.h.b16 %v3326
    %v3910 = vunpack.c.l.b16 %v3327
    %v3911 = vunpack.c.h.b16 %v3327
    %v3912 = vunpack.c.l.b16 %v3328
    %v3913 = vunpack.c.h.b16 %v3328
    %v3914 = vunpack.c.l.b16 %v3329
    %v3915 = vunpack.c.h.b16 %v3329
    %v3916 = vunpack.c.l.b16 %v3330
    %v3917 = vunpack.c.h.b16 %v3330
    %v3918 = vunpack.c.l.b16 %v3331
    %v3919 = vunpack.c.h.b16 %v3331
    %v3920 = vpack.c.b16 %v3532, %v3528
    %v3921 = vpack.c.b16 %v3533, %v3529
    %v3922 = vpack.c.b16 %v3534, %v3530
    %v3923 = vpack.c.b16 %v3535, %v3531
    %v3924 = vpack.c.b16 %v3540, %v3536
    %v3925 = vpack.c.b16 %v3541, %v3537
    %v3926 = vpack.c.b16 %v3542, %v3538
    %v3927 = vpack.c.b16 %v3543, %v3539
    %v3928 = vpack.c.b16 %v3548, %v3544
    %v3929 = vpack.c.b16 %v3549, %v3545
    %v3930 = vpack.c.b16 %v3550, %v3546
    %v3931 = vpack.c.b16 %v3551, %v3547
    %v3932 = vpack.c.b16 %v3556, %v3552
    %v3933 = vpack.c.b16 %v3557, %v3553
    %v3934 = vpack.c.b16 %v3558, %v3554
    %v3935 = vpack.c.b16 %v3559, %v3555
    %v3936 = vpack.c.b16 %v3564, %v3560
    %v3937 = vpack.c.b16 %v3565, %v3561
    %v3938 = vpack.c.b16 %v3566, %v3562
    %v3939 = vpack.c.b16 %v3567, %v3563
    %v3940 = vpack.c.b16 %v3572, %v3568
    %v3941 = vpack.c.b16 %v3573, %v3569
    %v3942 = vpack.c.b16 %v3574, %v3570
    %v3943 = vpack.c.b16 %v3575, %v3571
    %v3944 = vpack.c.b16 %v3580, %v3576
    %v3945 = vpack.c.b16 %v3581, %v3577
    %v3946 = vpack.c.b16 %v3582, %v3578
    %v3947 = vpack.c.b16 %v3583, %v3579
    %v3948 = vpack.c.b16 %v3588, %v3584
    %v3949 = vpack.c.b16 %v3589, %v3585
    %v3950 = vpack.c.b16 %v3590, %v3586
    %v3951 = vpack.c.b16 %v3591, %v3587
    %v3952 = vpack.c.b16 %v3596, %v3592
    %v3953 = vpack.c.b16 %v3597, %v3593
    %v3954 = vpack.c.b16 %v3598, %v3594
    %v3955 = vpack.c.b16 %v3599, %v3595
    %v3956 = vpack.c.b16 %v3604, %v3600
    %v3957 = vpack.c.b16 %v3605, %v3601
    %v3958 = vpack.c.b16 %v3606, %v3602
    %v3959 = vpack.c.b16 %v3607, %v3603
    %v3960 = vpack.c.b16 %v3612, %v3608
    %v3961 = vpack.c.b16 %v3613, %v3609
    %v3962 = vpack.c.b16 %v3614, %v3610
    %v3963 = vpack.c.b16 %v3615, %v3611
    %v3964 = vpack.c.b16 %v3620, %v3616
    %v3965 = vpack.c.b16 %v3621, %v3617
    %v3966 = vpack.c.b16 %v3622, %v3618
    %v3967 = vpack.c.b16 %v3623, %v3619
    %v3968 = vpack.c.b16 %v3628, %v3624
    %v3969 = vpack.c.b16 %v3629, %v3625
    %v3970 = vpack.c.b16 %v3630, %v3626
    %v3971 = vpack.c.b16 %v3631, %v3627
    %v3972 = vpack.c.b16 %v3636, %v3632
    %v3973 = vpack.c.b16 %v3637, %v3633
    %v3974 = vpack.c.b16 %v3638, %v3634
    %v3975 = vpack.c.b16 %v3639, %v3635
    %v3976 = vpack.c.b16 %v3644, %v3640
    %v3977 = vpack.c.b16 %v3645, %v3641
    %v3978 = vpack.c.b16 %v3646, %v3642
    %v3979 = vpack.c.b16 %v3647, %v3643
    %v3980 = vpack.c.b16 %v3652, %v3648
    %v3981 = vpack.c.b16 %v3653, %v3649
    %v3982 = vpack.c.b16 %v3654, %v3650
    %v3983 = vpack.c.b16 %v3655, %v3651
    %v3984 = vpack.c.b16 %v3660, %v3656
    %v3985 = vpack.c.b16 %v3661, %v3657
    %v3986 = vpack.c.b16 %v3662, %v3658
    %v3987 = vpack.c.b16 %v3663, %v3659
    %v3988 = vpack.c.b16 %v3668, %v3664
    %v3989 = vpack.c.b16 %v3669, %v3665
    %v3990 = vpack.c.b16 %v3670, %v3666
    %v3991 = vpack.c.b16 %v3671, %v3667
    %v3992 = vpack.c.b16 %v3676, %v3672
    %v3993 = vpack.c.b16 %v3677, %v3673
    %v3994 = vpack.c.b16 %v3678, %v3674
    %v3995 = vpack.c.b16 %v3679, %v3675
    %v3996 = vpack.c.b16 %v3684, %v3680
    %v3997 = vpack.c.b16 %v3685, %v3681
    %v3998 = vpack.c.b16 %v3686, %v3682
    %v3999 = vpack.c.b16 %v3687, %v3683
    %v4000 = vpack.c.b16 %v3692, %v3688
    %v4001 = vpack.c.b16 %v3693, %v3689
    %v4002 = vpack.c.b16 %v3694, %v3690
    %v4003 = vpack.c.b16 %v3695, %v3691
    %v4004 = vpack.c.b16 %v3700, %v3696
    %v4005 = vpack.c.b16 %v3701, %v3697
    %v4006 = vpack.c.b16 %v3702, %v3698
    %v4007 = vpack.c.b16 %v3703, %v3699
    %v4008 = vpack.c.b16 %v3708, %v3704
    %v4009 = vpack.c.b16 %v3709, %v3705
    %v4010 = vpack.c.b16 %v3710, %v3706
    %v4011 = vpack.c.b16 %v3711, %v3707
    %v4012 = vpack.c.b16 %v3716, %v3712
    %v4013 = vpack.c.b16 %v3717, %v3713
    %v4014 = vpack.c.b16 %v3718, %v3714
    %v4015 = vpack.c.b16 %v3719, %v3715
    %v4016 = vpack.c.b16 %v3724, %v3720
    %v4017 = vpack.c.b16 %v3725, %v3721
    %v4018 = vpack.c.b16 %v3726, %v3722
    %v4019 = vpack.c.b16 %v3727, %v3723
    %v4020 = vpack.c.b16 %v3732, %v3728
    %v4021 = vpack.c.b16 %v3733, %v3729
    %v4022 = vpack.c.b16 %v3734, %v3730
    %v4023 = vpack.c.b16 %v3735, %v3731
    %v4024 = vpack.c.b16 %v3740, %v3736
    %v4025 = vpack.c.b16 %v3741, %v3737
    %v4026 = vpack.c.b16 %v3742, %v3738
    %v4027 = vpack.c.b16 %v3743, %v3739
    %v4028 = vpack.c.b16 %v3748, %v3744
    %v4029 = vpack.c.b16 %v3749, %v3745
    %v4030 = vpack.c.b16 %v3750, %v3746
    %v4031 = vpack.c.b16 %v3751, %v3747
    %v4032 = vpack.c.b16 %v3756, %v3752
    %v4033 = vpack.c.b16 %v3757, %v3753
    %v4034 = vpack.c.b16 %v3758, %v3754
    %v4035 = vpack.c.b16 %v3759, %v3755
    %v4036 = vpack.c.b16 %v3764, %v3760
    %v4037 = vpack.c.b16 %v3765, %v3761
    %v4038 = vpack.c.b16 %v3766, %v3762
    %v4039 = vpack.c.b16 %v3767, %v3763
    %v4040 = vpack.c.b16 %v3772, %v3768
    %v4041 = vpack.c.b16 %v3773, %v3769
    %v4042 = vpack.c.b16 %v3774, %v3770
    %v4043 = vpack.c.b16 %v3775, %v3771
    %v4044 = vpack.c.b16 %v3780, %v3776
    %v4045 = vpack.c.b16 %v3781, %v3777
    %v4046 = vpack.c.b16 %v3782, %v3778
    %v4047 = vpack.c.b16 %v3783, %v3779
    %v4048 = vpack.c.b16 %v3788, %v3784
    %v4049 = vpack.c.b16 %v3789, %v3785
    %v4050 = vpack.c.b16 %v3790, %v3786
    %v4051 = vpack.c.b16 %v3791, %v3787
    %v4052 = vpack.c.b16 %v3796, %v3792
    %v4053 = vpack.c.b16 %v3797, %v3793
    %v4054 = vpack.c.b16 %v3798, %v3794
    %v4055 = vpack.c.b16 %v3799, %v3795
    %v4056 = vpack.c.b16 %v3804, %v3800
    %v4057 = vpack.c.b16 %v3805, %v3801
    %v4058 = vpack.c.b16 %v3806, %v3802
    %v4059 = vpack.c.b16 %v3807, %v3803
    %v4060 = vpack.c.b16 %v3812, %v3808
    %v4061 = vpack.c.b16 %v3813, %v3809
    %v4062 = vpack.c.b16 %v3814, %v3810
    %v4063 = vpack.c.b16 %v3815, %v3811
    %v4064 = vpack.c.b16 %v3820, %v3816
    %v4065 = vpack.c.b16 %v3821, %v3817
    %v4066 = vpack.c.b16 %v3822, %v3818
    %v4067 = vpack.c.b16 %v3823, %v3819
    %v4068 = vpack.c.b16 %v3828, %v3824
    %v4069 = vpack.c.b16 %v3829, %v3825
    %v4070 = vpack.c.b16 %v3830, %v3826
    %v4071 = vpack.c.b16 %v3831, %v3827
    %v4072 = vpack.c.b16 %v3836, %v3832
    %v4073 = vpack.c.b16 %v3837, %v3833
    %v4074 = vpack.c.b16 %v3838, %v3834
    %v4075 = vpack.c.b16 %v3839, %v3835
    %v4076 = vpack.c.b16 %v3844, %v3840
    %v4077 = vpack.c.b16 %v3845, %v3841
    %v4078 = vpack.c.b16 %v3846, %v3842
    %v4079 = vpack.c.b16 %v3847, %v3843
    %v4080 = vpack.c.b16 %v3852, %v3848
    %v4081 = vpack.c.b16 %v3853, %v3849
    %v4082 = vpack.c.b16 %v3854, %v3850
    %v4083 = vpack.c.b16 %v3855, %v3851
    %v4084 = vpack.c.b16 %v3860, %v3856
    %v4085 = vpack.c.b16 %v3861, %v3857
    %v4086 = vpack.c.b16 %v3862, %v3858
    %v4087 = vpack.c.b16 %v3863, %v3859
    %v4088 = vpack.c.b16 %v3868, %v3864
    %v4089 = vpack.c.b16 %v3869, %v3865
    %v4090 = vpack.c.b16 %v3870, %v3866
    %v4091 = vpack.c.b16 %v3871, %v3867
    %v4092 = vpack.c.b16 %v3876, %v3872
    %v4093 = vpack.c.b16 %v3877, %v3873
    %v4094 = vpack.c.b16 %v3878, %v3874
    %v4095 = vpack.c.b16 %v3879, %v3875
    %v4096 = vpack.c.b16 %v3884, %v3880
    %v4097 = vpack.c.b16 %v3885, %v3881
    %v4098 = vpack.c.b16 %v3886, %v3882
    %v4099 = vpack.c.b16 %v3887, %v3883
    %v4100 = vpack.c.b16 %v3892, %v3888
    %v4101 = vpack.c.b16 %v3893, %v3889
    %v4102 = vpack.c.b16 %v3894, %v3890
    %v4103 = vpack.c.b16 %v3895, %v3891
    %v4104 = vpack.c.b16 %v3900, %v3896
    %v4105 = vpack.c.b16 %v3901, %v3897
    %v4106 = vpack.c.b16 %v3902, %v3898
    %v4107 = vpack.c.b16 %v3903, %v3899
    %v4108 = vpack.c.b16 %v3908, %v3904
    %v4109 = vpack.c.b16 %v3909, %v3905
    %v4110 = vpack.c.b16 %v3910, %v3906
    %v4111 = vpack.c.b16 %v3911, %v3907
    %v4112 = vpack.c.b16 %v3916, %v3912
    %v4113 = vpack.c.b16 %v3917, %v3913
    %v4114 = vpack.c.b16 %v3918, %v3914
    %v4115 = vpack.c.b16 %v3919, %v3915
    %4312 = vmatprep.subr.bf16.mxu0 %v3949
    %4313 = vmatpush1.bf16.msra.mxu0 %v3948
    %4314 = vmatprep.subr.bf16.mxu0 %v3945
    %4315 = vmatpush1.bf16.msra.mxu0 %v3944
    %4316 = vmatprep.subr.bf16.mxu0 %v3941
    %4317 = vmatpush1.bf16.msra.mxu0 %v3940
    %4318 = vmatprep.subr.bf16.mxu0 %v3937
    %4319 = vmatpush1.bf16.msra.mxu0 %v3936
    %4320 = vmatprep.subr.bf16.mxu0 %v3933
    %4321 = vmatpush1.bf16.msra.mxu0 %v3932
    %4322 = vmatprep.subr.bf16.mxu0 %v3929
    %4323 = vmatpush1.bf16.msra.mxu0 %v3928
    %4324 = vmatprep.subr.bf16.mxu0 %v3925
    %4325 = vmatpush1.bf16.msra.mxu0 %v3924
    %4326 = vmatprep.subr.bf16.mxu0 %v3921
    %4327 = vmatpush1.bf16.msra.mxu0 %v3920
    %4328 = vmatprep.subr.bf16.mxu0 %v3981
    %4329 = vmatpush2.bf16.msra.mxu0 %v3980
    %4330 = vmatprep.subr.bf16.mxu0 %v3977
    %4331 = vmatpush2.bf16.msra.mxu0 %v3976
    %4332 = vmatprep.subr.bf16.mxu0 %v3973
    %4333 = vmatpush2.bf16.msra.mxu0 %v3972
    %4334 = vmatprep.subr.bf16.mxu0 %v3969
    %4335 = vmatpush2.bf16.msra.mxu0 %v3968
    %4336 = vmatprep.subr.bf16.mxu0 %v3965
    %4337 = vmatpush2.bf16.msra.mxu0 %v3964
    %4338 = vmatprep.subr.bf16.mxu0 %v3961
    %4339 = vmatpush2.bf16.msra.mxu0 %v3960
    %4340 = vmatprep.subr.bf16.mxu0 %v3957
    %4341 = vmatpush2.bf16.msra.mxu0 %v3956
    %4342 = vmatprep.subr.bf16.mxu0 %v3953
    %4343 = vmatpush2.bf16.msra.mxu0 %v3952
    %4344 = vmatprep.mubr.bf16.mxu0 %v302
    %4345 = vmatmul.mubr.bf16.gmra.mxu0 %v301
    %v4346 = vpop.f32.mrf.mxu0
    %v4347 = vadd.f32 0.0, %v4346
    %v4348 = vpop.f32.mrf.mxu0
    %v4349 = vadd.f32 0.0, %v4348
    %v4350 = vpop.f32.mrf.mxu0
    %v4351 = vpop.f32.mrf.mxu0
    %4352 = vdwg.mxu0
    %4353 = vmatprep.subr.bf16.mxu0 %v4013
    %4354 = vmatpush1.bf16.msra.mxu0 %v4012
    %4355 = vmatprep.subr.bf16.mxu0 %v4009
    %4356 = vmatpush1.bf16.msra.mxu0 %v4008
    %4357 = vmatprep.subr.bf16.mxu0 %v4005
    %4358 = vmatpush1.bf16.msra.mxu0 %v4004
    %4359 = vmatprep.subr.bf16.mxu0 %v4001
    %4360 = vmatpush1.bf16.msra.mxu0 %v4000
    %4361 = vmatprep.subr.bf16.mxu0 %v3997
    %4362 = vmatpush1.bf16.msra.mxu0 %v3996
    %4363 = vmatprep.subr.bf16.mxu0 %v3993
    %4364 = vmatpush1.bf16.msra.mxu0 %v3992
    %4365 = vmatprep.subr.bf16.mxu0 %v3989
    %4366 = vmatpush1.bf16.msra.mxu0 %v3988
    %4367 = vmatprep.subr.bf16.mxu0 %v3985
    %4368 = vmatpush1.bf16.msra.mxu0 %v3984
    %4369 = vmatprep.subr.bf16.mxu0 %v4045
    %4370 = vmatpush2.bf16.msra.mxu0 %v4044
    %4371 = vmatprep.subr.bf16.mxu0 %v4041
    %4372 = vmatpush2.bf16.msra.mxu0 %v4040
    %4373 = vmatprep.subr.bf16.mxu0 %v4037
    %4374 = vmatpush2.bf16.msra.mxu0 %v4036
    %4375 = vmatprep.subr.bf16.mxu0 %v4033
    %4376 = vmatpush2.bf16.msra.mxu0 %v4032
    %4377 = vmatprep.subr.bf16.mxu0 %v4029
    %4378 = vmatpush2.bf16.msra.mxu0 %v4028
    %4379 = vmatprep.subr.bf16.mxu0 %v4025
    %4380 = vmatpush2.bf16.msra.mxu0 %v4024
    %4381 = vmatprep.subr.bf16.mxu0 %v4021
    %4382 = vmatpush2.bf16.msra.mxu0 %v4020
    %4383 = vmatprep.subr.bf16.mxu0 %v4017
    %4384 = vmatpush2.bf16.msra.mxu0 %v4016
    %4385 = vmatprep.mubr.bf16.mxu0 %v304
    %4386 = vmatmul.mubr.bf16.gmra.mxu0 %v303
    %v4387 = vpop.f32.mrf.mxu0
    %v4388 = vadd.f32 %v4347, %v4387
    %v4389 = vpop.f32.mrf.mxu0
    %v4390 = vadd.f32 %v4349, %v4389
    %v4391 = vpop.f32.mrf.mxu0
    %v4392 = vpop.f32.mrf.mxu0
    %4393 = vdwg.mxu0
    %4394 = vmatprep.subr.bf16.mxu0 %v4077
    %4395 = vmatpush1.bf16.msra.mxu0 %v4076
    %4396 = vmatprep.subr.bf16.mxu0 %v4073
    %4397 = vmatpush1.bf16.msra.mxu0 %v4072
    %4398 = vmatprep.subr.bf16.mxu0 %v4069
    %4399 = vmatpush1.bf16.msra.mxu0 %v4068
    %4400 = vmatprep.subr.bf16.mxu0 %v4065
    %4401 = vmatpush1.bf16.msra.mxu0 %v4064
    %4402 = vmatprep.subr.bf16.mxu0 %v4061
    %4403 = vmatpush1.bf16.msra.mxu0 %v4060
    %4404 = vmatprep.subr.bf16.mxu0 %v4057
    %4405 = vmatpush1.bf16.msra.mxu0 %v4056
    %4406 = vmatprep.subr.bf16.mxu0 %v4053
    %4407 = vmatpush1.bf16.msra.mxu0 %v4052
    %4408 = vmatprep.subr.bf16.mxu0 %v4049
    %4409 = vmatpush1.bf16.msra.mxu0 %v4048
    %4410 = vmatprep.subr.bf16.mxu0 %v4109
    %4411 = vmatpush2.bf16.msra.mxu0 %v4108
    %4412 = vmatprep.subr.bf16.mxu0 %v4105
    %4413 = vmatpush2.bf16.msra.mxu0 %v4104
    %4414 = vmatprep.subr.bf16.mxu0 %v4101
    %4415 = vmatpush2.bf16.msra.mxu0 %v4100
    %4416 = vmatprep.subr.bf16.mxu0 %v4097
    %4417 = vmatpush2.bf16.msra.mxu0 %v4096
    %4418 = vmatprep.subr.bf16.mxu0 %v4093
    %4419 = vmatpush2.bf16.msra.mxu0 %v4092
    %4420 = vmatprep.subr.bf16.mxu0 %v4089
    %4421 = vmatpush2.bf16.msra.mxu0 %v4088
    %4422 = vmatprep.subr.bf16.mxu0 %v4085
    %4423 = vmatpush2.bf16.msra.mxu0 %v4084
    %4424 = vmatprep.subr.bf16.mxu0 %v4081
    %4425 = vmatpush2.bf16.msra.mxu0 %v4080
    %4426 = vmatprep.mubr.bf16.mxu0 %v306
    %4427 = vmatmul.mubr.bf16.gmra.mxu0 %v305
    %v4428 = vpop.f32.mrf.mxu0
    %v4429 = vadd.f32 %v4388, %v4428
    %v4430 = vpop.f32.mrf.mxu0
    %v4431 = vadd.f32 %v4390, %v4430
    %v4432 = vpop.f32.mrf.mxu0
    %v4433 = vpop.f32.mrf.mxu0
    %4434 = vdwg.mxu0
    %4435 = vmatprep.subr.bf16.mxu0 0
    %4436 = vmatpush1.bf16.msra.mxu0 0
    %4437 = vmatprep.subr.bf16.mxu0 0
    %4438 = vmatpush1.bf16.msra.mxu0 0
    %4439 = vmatprep.subr.bf16.mxu0 0
    %4440 = vmatpush1.bf16.msra.mxu0 0
    %4441 = vmatprep.subr.bf16.mxu0 0
    %4442 = vmatpush1.bf16.msra.mxu0 0
    %4443 = vmatprep.subr.bf16.mxu0 0
    %4444 = vmatpush1.bf16.msra.mxu0 0
    %4445 = vmatprep.subr.bf16.mxu0 0
    %4446 = vmatpush1.bf16.msra.mxu0 0
    %4447 = vmatprep.subr.bf16.mxu0 0
    %4448 = vmatpush1.bf16.msra.mxu0 0
    %4449 = vmatprep.subr.bf16.mxu0 %v4113
    %4450 = vmatpush1.bf16.msra.mxu0 %v4112
    %4451 = vmatprep.subr.bf16.mxu0 0
    %4452 = vmatpush2.bf16.msra.mxu0 0
    %4453 = vmatprep.subr.bf16.mxu0 0
    %4454 = vmatpush2.bf16.msra.mxu0 0
    %4455 = vmatprep.subr.bf16.mxu0 0
    %4456 = vmatpush2.bf16.msra.mxu0 0
    %4457 = vmatprep.subr.bf16.mxu0 0
    %4458 = vmatpush2.bf16.msra.mxu0 0
    %4459 = vmatprep.subr.bf16.mxu0 0
    %4460 = vmatpush2.bf16.msra.mxu0 0
    %4461 = vmatprep.subr.bf16.mxu0 0
    %4462 = vmatpush2.bf16.msra.mxu0 0
    %4463 = vmatprep.subr.bf16.mxu0 0
    %4464 = vmatpush2.bf16.msra.mxu0 0
    %4465 = vmatprep.subr.bf16.mxu0 0
    %4466 = vmatpush2.bf16.msra.mxu0 0
    %4467 = vmatprep.mubr.bf16.mxu0 0
    %4468 = vmatmul.mubr.bf16.gmra.mxu0 %v1296
    %v4469 = vpop.f32.mrf.mxu0
    %v4470 = vadd.f32 %v4429, %v4469
    %v4471 = vpop.f32.mrf.mxu0
    %v4472 = vadd.f32 %v4431, %v4471
    %v4473 = vpop.f32.mrf.mxu0
    %v4474 = vpop.f32.mrf.mxu0
    %4475 = vdwg.mxu0
    %4476 = vmatprep.subr.bf16.mxu0 %v3951
    %4477 = vmatpush1.bf16.msra.mxu0 %v3950
    %4478 = vmatprep.subr.bf16.mxu0 %v3947
    %4479 = vmatpush1.bf16.msra.mxu0 %v3946
    %4480 = vmatprep.subr.bf16.mxu0 %v3943
    %4481 = vmatpush1.bf16.msra.mxu0 %v3942
    %4482 = vmatprep.subr.bf16.mxu0 %v3939
    %4483 = vmatpush1.bf16.msra.mxu0 %v3938
    %4484 = vmatprep.subr.bf16.mxu0 %v3935
    %4485 = vmatpush1.bf16.msra.mxu0 %v3934
    %4486 = vmatprep.subr.bf16.mxu0 %v3931
    %4487 = vmatpush1.bf16.msra.mxu0 %v3930
    %4488 = vmatprep.subr.bf16.mxu0 %v3927
    %4489 = vmatpush1.bf16.msra.mxu0 %v3926
    %4490 = vmatprep.subr.bf16.mxu0 %v3923
    %4491 = vmatpush1.bf16.msra.mxu0 %v3922
    %4492 = vmatprep.subr.bf16.mxu0 %v3983
    %4493 = vmatpush2.bf16.msra.mxu0 %v3982
    %4494 = vmatprep.subr.bf16.mxu0 %v3979
    %4495 = vmatpush2.bf16.msra.mxu0 %v3978
    %4496 = vmatprep.subr.bf16.mxu0 %v3975
    %4497 = vmatpush2.bf16.msra.mxu0 %v3974
    %4498 = vmatprep.subr.bf16.mxu0 %v3971
    %4499 = vmatpush2.bf16.msra.mxu0 %v3970
    %4500 = vmatprep.subr.bf16.mxu0 %v3967
    %4501 = vmatpush2.bf16.msra.mxu0 %v3966
    %4502 = vmatprep.subr.bf16.mxu0 %v3963
    %4503 = vmatpush2.bf16.msra.mxu0 %v3962
    %4504 = vmatprep.subr.bf16.mxu0 %v3959
    %4505 = vmatpush2.bf16.msra.mxu0 %v3958
    %4506 = vmatprep.subr.bf16.mxu0 %v3955
    %4507 = vmatpush2.bf16.msra.mxu0 %v3954
    %4508 = vmatprep.mubr.bf16.mxu0 %v302
    %4509 = vmatmul.mubr.bf16.gmra.mxu0 %v301
    %v4510 = vpop.f32.mrf.mxu0
    %v4511 = vadd.f32 0.0, %v4510
    %v4512 = vpop.f32.mrf.mxu0
    %v4513 = vadd.f32 0.0, %v4512
    %v4514 = vpop.f32.mrf.mxu0
    %v4515 = vpop.f32.mrf.mxu0
    %4516 = vdwg.mxu0
    %4517 = vmatprep.subr.bf16.mxu0 %v4015
    %4518 = vmatpush1.bf16.msra.mxu0 %v4014
    %4519 = vmatprep.subr.bf16.mxu0 %v4011
    %4520 = vmatpush1.bf16.msra.mxu0 %v4010
    %4521 = vmatprep.subr.bf16.mxu0 %v4007
    %4522 = vmatpush1.bf16.msra.mxu0 %v4006
    %4523 = vmatprep.subr.bf16.mxu0 %v4003
    %4524 = vmatpush1.bf16.msra.mxu0 %v4002
    %4525 = vmatprep.subr.bf16.mxu0 %v3999
    %4526 = vmatpush1.bf16.msra.mxu0 %v3998
    %4527 = vmatprep.subr.bf16.mxu0 %v3995
    %4528 = vmatpush1.bf16.msra.mxu0 %v3994
    %4529 = vmatprep.subr.bf16.mxu0 %v3991
    %4530 = vmatpush1.bf16.msra.mxu0 %v3990
    %4531 = vmatprep.subr.bf16.mxu0 %v3987
    %4532 = vmatpush1.bf16.msra.mxu0 %v3986
    %4533 = vmatprep.subr.bf16.mxu0 %v4047
    %4534 = vmatpush2.bf16.msra.mxu0 %v4046
    %4535 = vmatprep.subr.bf16.mxu0 %v4043
    %4536 = vmatpush2.bf16.msra.mxu0 %v4042
    %4537 = vmatprep.subr.bf16.mxu0 %v4039
    %4538 = vmatpush2.bf16.msra.mxu0 %v4038
    %4539 = vmatprep.subr.bf16.mxu0 %v4035
    %4540 = vmatpush2.bf16.msra.mxu0 %v4034
    %4541 = vmatprep.subr.bf16.mxu0 %v4031
    %4542 = vmatpush2.bf16.msra.mxu0 %v4030
    %4543 = vmatprep.subr.bf16.mxu0 %v4027
    %4544 = vmatpush2.bf16.msra.mxu0 %v4026
    %4545 = vmatprep.subr.bf16.mxu0 %v4023
    %4546 = vmatpush2.bf16.msra.mxu0 %v4022
    %4547 = vmatprep.subr.bf16.mxu0 %v4019
    %4548 = vmatpush2.bf16.msra.mxu0 %v4018
    %4549 = vmatprep.mubr.bf16.mxu0 %v304
    %4550 = vmatmul.mubr.bf16.gmra.mxu0 %v303
    %v4551 = vpop.f32.mrf.mxu0
    %v4552 = vadd.f32 %v4511, %v4551
    %v4553 = vpop.f32.mrf.mxu0
    %v4554 = vadd.f32 %v4513, %v4553
    %v4555 = vpop.f32.mrf.mxu0
    %v4556 = vpop.f32.mrf.mxu0
    %4557 = vdwg.mxu0
    %4558 = vmatprep.subr.bf16.mxu0 %v4079
    %4559 = vmatpush1.bf16.msra.mxu0 %v4078
    %4560 = vmatprep.subr.bf16.mxu0 %v4075
    %4561 = vmatpush1.bf16.msra.mxu0 %v4074
    %4562 = vmatprep.subr.bf16.mxu0 %v4071
    %4563 = vmatpush1.bf16.msra.mxu0 %v4070
    %4564 = vmatprep.subr.bf16.mxu0 %v4067
    %4565 = vmatpush1.bf16.msra.mxu0 %v4066
    %4566 = vmatprep.subr.bf16.mxu0 %v4063
    %4567 = vmatpush1.bf16.msra.mxu0 %v4062
    %4568 = vmatprep.subr.bf16.mxu0 %v4059
    %4569 = vmatpush1.bf16.msra.mxu0 %v4058
    %4570 = vmatprep.subr.bf16.mxu0 %v4055
    %4571 = vmatpush1.bf16.msra.mxu0 %v4054
    %4572 = vmatprep.subr.bf16.mxu0 %v4051
    %4573 = vmatpush1.bf16.msra.mxu0 %v4050
    %4574 = vmatprep.subr.bf16.mxu0 %v4111
    %4575 = vmatpush2.bf16.msra.mxu0 %v4110
    %4576 = vmatprep.subr.bf16.mxu0 %v4107
    %4577 = vmatpush2.bf16.msra.mxu0 %v4106
    %4578 = vmatprep.subr.bf16.mxu0 %v4103
    %4579 = vmatpush2.bf16.msra.mxu0 %v4102
    %4580 = vmatprep.subr.bf16.mxu0 %v4099
    %4581 = vmatpush2.bf16.msra.mxu0 %v4098
    %4582 = vmatprep.subr.bf16.mxu0 %v4095
    %4583 = vmatpush2.bf16.msra.mxu0 %v4094
    %4584 = vmatprep.subr.bf16.mxu0 %v4091
    %4585 = vmatpush2.bf16.msra.mxu0 %v4090
    %4586 = vmatprep.subr.bf16.mxu0 %v4087
    %4587 = vmatpush2.bf16.msra.mxu0 %v4086
    %4588 = vmatprep.subr.bf16.mxu0 %v4083
    %4589 = vmatpush2.bf16.msra.mxu0 %v4082
    %4590 = vmatprep.mubr.bf16.mxu0 %v306
    %4591 = vmatmul.mubr.bf16.gmra.mxu0 %v305
    %v4592 = vpop.f32.mrf.mxu0
    %v4593 = vadd.f32 %v4552, %v4592
    %v4594 = vpop.f32.mrf.mxu0
    %v4595 = vadd.f32 %v4554, %v4594
    %v4596 = vpop.f32.mrf.mxu0
    %v4597 = vpop.f32.mrf.mxu0
    %4598 = vdwg.mxu0
    %4599 = vmatprep.subr.bf16.mxu0 0
    %4600 = vmatpush1.bf16.msra.mxu0 0
    %4601 = vmatprep.subr.bf16.mxu0 0
    %4602 = vmatpush1.bf16.msra.mxu0 0
    %4603 = vmatprep.subr.bf16.mxu0 0
    %4604 = vmatpush1.bf16.msra.mxu0 0
    %4605 = vmatprep.subr.bf16.mxu0 0
    %4606 = vmatpush1.bf16.msra.mxu0 0
    %4607 = vmatprep.subr.bf16.mxu0 0
    %4608 = vmatpush1.bf16.msra.mxu0 0
    %4609 = vmatprep.subr.bf16.mxu0 0
    %4610 = vmatpush1.bf16.msra.mxu0 0
    %4611 = vmatprep.subr.bf16.mxu0 0
    %4612 = vmatpush1.bf16.msra.mxu0 0
    %4613 = vmatprep.subr.bf16.mxu0 %v4115
    %4614 = vmatpush1.bf16.msra.mxu0 %v4114
    %4615 = vmatprep.subr.bf16.mxu0 0
    %4616 = vmatpush2.bf16.msra.mxu0 0
    %4617 = vmatprep.subr.bf16.mxu0 0
    %4618 = vmatpush2.bf16.msra.mxu0 0
    %4619 = vmatprep.subr.bf16.mxu0 0
    %4620 = vmatpush2.bf16.msra.mxu0 0
    %4621 = vmatprep.subr.bf16.mxu0 0
    %4622 = vmatpush2.bf16.msra.mxu0 0
    %4623 = vmatprep.subr.bf16.mxu0 0
    %4624 = vmatpush2.bf16.msra.mxu0 0
    %4625 = vmatprep.subr.bf16.mxu0 0
    %4626 = vmatpush2.bf16.msra.mxu0 0
    %4627 = vmatprep.subr.bf16.mxu0 0
    %4628 = vmatpush2.bf16.msra.mxu0 0
    %4629 = vmatprep.subr.bf16.mxu0 0
    %4630 = vmatpush2.bf16.msra.mxu0 0
    %4631 = vmatprep.mubr.bf16.mxu0 0
    %4632 = vmatmul.mubr.bf16.gmra.mxu0 %v1296
    %v4633 = vpop.f32.mrf.mxu0
    %v4634 = vadd.f32 %v4593, %v4633
    %v4635 = vpop.f32.mrf.mxu0
    %v4636 = vadd.f32 %v4595, %v4635
    %v4637 = vpop.f32.mrf.mxu0
    %v4638 = vpop.f32.mrf.mxu0
    %4639 = vdwg.mxu0
    %v4640 = vmax.f32 %v3131, %v4470
    %v4641 = vmax.f32 %v3132, %v4472
    %v4642 = vmax.f32 %v3133, %v4634
    %v4643 = vmax.f32 %v3134, %v4636
    %s4644 = scalar_lea.vmem [#allocation2], 4704
    %v4645 = vld [vmem:[%s4644] sm:$0xff]
    %v4646 = vld [vmem:[%s4644 + $0x8] sm:$0xff]
    %v4647 = vld [vmem:[%s4644 + $0x10] sm:$0xff]
    %v4648 = vld [vmem:[%s4644 + $0x18] sm:$0xff]
    %v4649 = vld [vmem:[%s4644 + $0x20] sm:$0xff]
    %v4650 = vld [vmem:[%s4644 + $0x28] sm:$0xff]
    %v4651 = vld [vmem:[%s4644 + $0x30] sm:$0xff]
    %v4652 = vld [vmem:[%s4644 + $0x38] sm:$0xff]
    %v4653 = vld [vmem:[%s4644 + $0x40] sm:$0xff]
    %v4654 = vld [vmem:[%s4644 + $0x48] sm:$0xff]
    %v4655 = vld [vmem:[%s4644 + $0x50] sm:$0xff]
    %v4656 = vld [vmem:[%s4644 + $0x58] sm:$0xff]
    %v4657 = vld [vmem:[%s4644 + $0x60] sm:$0xff]
    %v4658 = vld [vmem:[%s4644 + $0x68] sm:$0xff]
    %v4659 = vld [vmem:[%s4644 + $0x70] sm:$0xff]
    %v4660 = vld [vmem:[%s4644 + $0x78] sm:$0xff]
    %v4661 = vld [vmem:[%s4644 + $0x80] sm:$0xff]
    %v4662 = vld [vmem:[%s4644 + $0x88] sm:$0xff]
    %v4663 = vld [vmem:[%s4644 + $0x90] sm:$0xff]
    %v4664 = vld [vmem:[%s4644 + $0x98] sm:$0xff]
    %v4665 = vld [vmem:[%s4644 + $0xa0] sm:$0xff]
    %v4666 = vld [vmem:[%s4644 + $0xa8] sm:$0xff]
    %v4667 = vld [vmem:[%s4644 + $0xb0] sm:$0xff]
    %v4668 = vld [vmem:[%s4644 + $0xb8] sm:$0xff]
    %v4669 = vld [vmem:[%s4644 + $0xc0] sm:$0xff]
    %v4670 = vld [vmem:[%s4644 + $0xc8] sm:$0xff]
    %v4671 = vld [vmem:[%s4644 + $0xd0] sm:$0xff]
    %v4672 = vld [vmem:[%s4644 + $0xd8] sm:$0xff]
    %v4673 = vld [vmem:[%s4644 + $0xe0] sm:$0xff]
    %v4674 = vld [vmem:[%s4644 + $0xe8] sm:$0xff]
    %v4675 = vld [vmem:[%s4644 + $0xf0] sm:$0xff]
    %v4676 = vld [vmem:[%s4644 + $0xf8] sm:$0xff]
    %v4677 = vld [vmem:[%s4644 + $0x100] sm:$0xff]
    %v4678 = vld [vmem:[%s4644 + $0x108] sm:$0xff]
    %v4679 = vld [vmem:[%s4644 + $0x110] sm:$0xff]
    %v4680 = vld [vmem:[%s4644 + $0x118] sm:$0xff]
    %v4681 = vld [vmem:[%s4644 + $0x120] sm:$0xff]
    %v4682 = vld [vmem:[%s4644 + $0x128] sm:$0xff]
    %v4683 = vld [vmem:[%s4644 + $0x130] sm:$0xff]
    %v4684 = vld [vmem:[%s4644 + $0x138] sm:$0xff]
    %v4685 = vld [vmem:[%s4644 + $0x140] sm:$0xff]
    %v4686 = vld [vmem:[%s4644 + $0x148] sm:$0xff]
    %v4687 = vld [vmem:[%s4644 + $0x150] sm:$0xff]
    %v4688 = vld [vmem:[%s4644 + $0x158] sm:$0xff]
    %v4689 = vld [vmem:[%s4644 + $0x160] sm:$0xff]
    %v4690 = vld [vmem:[%s4644 + $0x168] sm:$0xff]
    %v4691 = vld [vmem:[%s4644 + $0x170] sm:$0xff]
    %v4692 = vld [vmem:[%s4644 + $0x178] sm:$0xff]
    %v4693 = vld [vmem:[%s4644 + $0x180] sm:$0xff]
    %v4694 = vld [vmem:[%s4644 + $0x188] sm:$0xff]
    %v4695 = vld [vmem:[%s4644 + $0x190] sm:$0xff]
    %v4696 = vld [vmem:[%s4644 + $0x198] sm:$0xff]
    %v4697 = vld [vmem:[%s4644 + $0x1a0] sm:$0xff]
    %v4698 = vld [vmem:[%s4644 + $0x1a8] sm:$0xff]
    %v4699 = vld [vmem:[%s4644 + $0x1b0] sm:$0xff]
    %v4700 = vld [vmem:[%s4644 + $0x1b8] sm:$0xff]
    %v4701 = vld [vmem:[%s4644 + $0x1c0] sm:$0xff]
    %v4702 = vld [vmem:[%s4644 + $0x1c8] sm:$0xff]
    %v4703 = vld [vmem:[%s4644 + $0x1d0] sm:$0xff]
    %v4704 = vld [vmem:[%s4644 + $0x1d8] sm:$0xff]
    %v4705 = vld [vmem:[%s4644 + $0x1e0] sm:$0xff]
    %v4706 = vld [vmem:[%s4644 + $0x1e8] sm:$0xff]
    %v4707 = vld [vmem:[%s4644 + $0x1f0] sm:$0xff]
    %v4708 = vld [vmem:[%s4644 + $0x1f8] sm:$0xff]
    %v4709 = vld [vmem:[%s4644 + $0x200] sm:$0xff]
    %v4710 = vld [vmem:[%s4644 + $0x208] sm:$0xff]
    %v4711 = vld [vmem:[%s4644 + $0x210] sm:$0xff]
    %v4712 = vld [vmem:[%s4644 + $0x218] sm:$0xff]
    %v4713 = vld [vmem:[%s4644 + $0x220] sm:$0xff]
    %v4714 = vld [vmem:[%s4644 + $0x228] sm:$0xff]
    %v4715 = vld [vmem:[%s4644 + $0x230] sm:$0xff]
    %v4716 = vld [vmem:[%s4644 + $0x238] sm:$0xff]
    %v4717 = vld [vmem:[%s4644 + $0x240] sm:$0xff]
    %v4718 = vld [vmem:[%s4644 + $0x248] sm:$0xff]
    %v4719 = vld [vmem:[%s4644 + $0x250] sm:$0xff]
    %v4720 = vld [vmem:[%s4644 + $0x258] sm:$0xff]
    %v4721 = vld [vmem:[%s4644 + $0x260] sm:$0xff]
    %v4722 = vld [vmem:[%s4644 + $0x268] sm:$0xff]
    %v4723 = vld [vmem:[%s4644 + $0x270] sm:$0xff]
    %v4724 = vld [vmem:[%s4644 + $0x278] sm:$0xff]
    %v4725 = vld [vmem:[%s4644 + $0x280] sm:$0xff]
    %v4726 = vld [vmem:[%s4644 + $0x288] sm:$0xff]
    %v4727 = vld [vmem:[%s4644 + $0x290] sm:$0xff]
    %v4728 = vld [vmem:[%s4644 + $0x298] sm:$0xff]
    %v4729 = vld [vmem:[%s4644 + $0x2a0] sm:$0xff]
    %v4730 = vld [vmem:[%s4644 + $0x2a8] sm:$0xff]
    %v4731 = vld [vmem:[%s4644 + $0x2b0] sm:$0xff]
    %v4732 = vld [vmem:[%s4644 + $0x2b8] sm:$0xff]
    %v4733 = vld [vmem:[%s4644 + $0x2c0] sm:$0xff]
    %v4734 = vld [vmem:[%s4644 + $0x2c8] sm:$0xff]
    %v4735 = vld [vmem:[%s4644 + $0x2d0] sm:$0xff]
    %v4736 = vld [vmem:[%s4644 + $0x2d8] sm:$0xff]
    %v4737 = vld [vmem:[%s4644 + $0x2e0] sm:$0xff]
    %v4738 = vld [vmem:[%s4644 + $0x2e8] sm:$0xff]
    %v4739 = vld [vmem:[%s4644 + $0x2f0] sm:$0xff]
    %v4740 = vld [vmem:[%s4644 + $0x2f8] sm:$0xff]
    %v4741 = vld [vmem:[%s4644 + $0x300] sm:$0xff]
    %v4742 = vld [vmem:[%s4644 + $0x308] sm:$0xff]
    %v4743 = vld [vmem:[%s4644 + $0x310] sm:$0xff]
    %v4744 = vld [vmem:[%s4644 + $0x318] sm:$0xff]
    %v4745 = vld [vmem:[%s4644 + $0x320] sm:$0xff]
    %v4746 = vld [vmem:[%s4644 + $0x328] sm:$0xff]
    %v4747 = vld [vmem:[%s4644 + $0x330] sm:$0xff]
    %v4748 = vld [vmem:[%s4644 + $0x338] sm:$0xff]
    %v4749 = vld [vmem:[%s4644 + $0x340] sm:$0xff]
    %v4750 = vld [vmem:[%s4644 + $0x348] sm:$0xff]
    %v4751 = vld [vmem:[%s4644 + $0x350] sm:$0xff]
    %v4752 = vld [vmem:[%s4644 + $0x358] sm:$0xff]
    %v4753 = vld [vmem:[%s4644 + $0x360] sm:$0xff]
    %v4754 = vld [vmem:[%s4644 + $0x368] sm:$0xff]
    %v4755 = vld [vmem:[%s4644 + $0x370] sm:$0xff]
    %v4756 = vld [vmem:[%s4644 + $0x378] sm:$0xff]
    %v4757 = vld [vmem:[%s4644 + $0x380] sm:$0xff]
    %v4758 = vld [vmem:[%s4644 + $0x388] sm:$0xff]
    %v4759 = vld [vmem:[%s4644 + $0x390] sm:$0xff]
    %v4760 = vld [vmem:[%s4644 + $0x398] sm:$0xff]
    %v4761 = vld [vmem:[%s4644 + $0x3a0] sm:$0xff]
    %v4762 = vld [vmem:[%s4644 + $0x3a8] sm:$0xff]
    %v4763 = vld [vmem:[%s4644 + $0x3b0] sm:$0xff]
    %v4764 = vld [vmem:[%s4644 + $0x3b8] sm:$0xff]
    %v4765 = vld [vmem:[%s4644 + $0x3c0] sm:$0xff]
    %v4766 = vld [vmem:[%s4644 + $0x3c8] sm:$0xff]
    %v4767 = vld [vmem:[%s4644 + $0x3d0] sm:$0xff]
    %v4768 = vld [vmem:[%s4644 + $0x3d8] sm:$0xff]
    %v4769 = vld [vmem:[%s4644 + $0x3e0] sm:$0xff]
    %v4770 = vld [vmem:[%s4644 + $0x3e8] sm:$0xff]
    %v4771 = vld [vmem:[%s4644 + $0x3f0] sm:$0xff]
    %v4772 = vld [vmem:[%s4644 + $0x3f8] sm:$0xff]
    %v4773 = vld [vmem:[%s4644 + $0x400] sm:$0xff]
    %v4774 = vld [vmem:[%s4644 + $0x408] sm:$0xff]
    %v4775 = vld [vmem:[%s4644 + $0x410] sm:$0xff]
    %v4776 = vld [vmem:[%s4644 + $0x418] sm:$0xff]
    %v4777 = vld [vmem:[%s4644 + $0x420] sm:$0xff]
    %v4778 = vld [vmem:[%s4644 + $0x428] sm:$0xff]
    %v4779 = vld [vmem:[%s4644 + $0x430] sm:$0xff]
    %v4780 = vld [vmem:[%s4644 + $0x438] sm:$0xff]
    %v4781 = vld [vmem:[%s4644 + $0x440] sm:$0xff]
    %v4782 = vld [vmem:[%s4644 + $0x448] sm:$0xff]
    %v4783 = vld [vmem:[%s4644 + $0x450] sm:$0xff]
    %v4784 = vld [vmem:[%s4644 + $0x458] sm:$0xff]
    %v4785 = vld [vmem:[%s4644 + $0x460] sm:$0xff]
    %v4786 = vld [vmem:[%s4644 + $0x468] sm:$0xff]
    %v4787 = vld [vmem:[%s4644 + $0x470] sm:$0xff]
    %v4788 = vld [vmem:[%s4644 + $0x478] sm:$0xff]
    %v4789 = vld [vmem:[%s4644 + $0x480] sm:$0xff]
    %v4790 = vld [vmem:[%s4644 + $0x488] sm:$0xff]
    %v4791 = vld [vmem:[%s4644 + $0x490] sm:$0xff]
    %v4792 = vld [vmem:[%s4644 + $0x498] sm:$0xff]
    %v4793 = vld [vmem:[%s4644 + $0x4a0] sm:$0xff]
    %v4794 = vld [vmem:[%s4644 + $0x4a8] sm:$0xff]
    %v4795 = vld [vmem:[%s4644 + $0x4b0] sm:$0xff]
    %v4796 = vld [vmem:[%s4644 + $0x4b8] sm:$0xff]
    %v4797 = vld [vmem:[%s4644 + $0x4c0] sm:$0xff]
    %v4798 = vld [vmem:[%s4644 + $0x4c8] sm:$0xff]
    %v4799 = vld [vmem:[%s4644 + $0x4d0] sm:$0xff]
    %v4800 = vld [vmem:[%s4644 + $0x4d8] sm:$0xff]
    %v4801 = vld [vmem:[%s4644 + $0x4e0] sm:$0xff]
    %v4802 = vld [vmem:[%s4644 + $0x4e8] sm:$0xff]
    %v4803 = vld [vmem:[%s4644 + $0x4f0] sm:$0xff]
    %v4804 = vld [vmem:[%s4644 + $0x4f8] sm:$0xff]
    %v4805 = vld [vmem:[%s4644 + $0x500] sm:$0xff]
    %v4806 = vld [vmem:[%s4644 + $0x508] sm:$0xff]
    %v4807 = vld [vmem:[%s4644 + $0x510] sm:$0xff]
    %v4808 = vld [vmem:[%s4644 + $0x518] sm:$0xff]
    %v4809 = vld [vmem:[%s4644 + $0x520] sm:$0xff]
    %v4810 = vld [vmem:[%s4644 + $0x528] sm:$0xff]
    %v4811 = vld [vmem:[%s4644 + $0x530] sm:$0xff]
    %v4812 = vld [vmem:[%s4644 + $0x538] sm:$0xff]
    %v4813 = vld [vmem:[%s4644 + $0x540] sm:$0xff]
    %v4814 = vld [vmem:[%s4644 + $0x548] sm:$0xff]
    %v4815 = vld [vmem:[%s4644 + $0x550] sm:$0xff]
    %v4816 = vld [vmem:[%s4644 + $0x558] sm:$0xff]
    %v4817 = vld [vmem:[%s4644 + $0x560] sm:$0xff]
    %v4818 = vld [vmem:[%s4644 + $0x568] sm:$0xff]
    %v4819 = vld [vmem:[%s4644 + $0x570] sm:$0xff]
    %v4820 = vld [vmem:[%s4644 + $0x578] sm:$0xff]
    %v4821 = vld [vmem:[%s4644 + $0x580] sm:$0xff]
    %v4822 = vld [vmem:[%s4644 + $0x588] sm:$0xff]
    %v4823 = vld [vmem:[%s4644 + $0x590] sm:$0xff]
    %v4824 = vld [vmem:[%s4644 + $0x598] sm:$0xff]
    %v4825 = vld [vmem:[%s4644 + $0x5a0] sm:$0xff]
    %v4826 = vld [vmem:[%s4644 + $0x5a8] sm:$0xff]
    %v4827 = vld [vmem:[%s4644 + $0x5b0] sm:$0xff]
    %v4828 = vld [vmem:[%s4644 + $0x5b8] sm:$0xff]
    %v4829 = vld [vmem:[%s4644 + $0x5c0] sm:$0xff]
    %v4830 = vld [vmem:[%s4644 + $0x5c8] sm:$0xff]
    %v4831 = vld [vmem:[%s4644 + $0x5d0] sm:$0xff]
    %v4832 = vld [vmem:[%s4644 + $0x5d8] sm:$0xff]
    %v4833 = vld [vmem:[%s4644 + $0x5e0] sm:$0xff]
    %v4834 = vld [vmem:[%s4644 + $0x5e8] sm:$0xff]
    %v4835 = vld [vmem:[%s4644 + $0x5f0] sm:$0xff]
    %v4836 = vld [vmem:[%s4644 + $0x5f8] sm:$0xff]
    %v4837 = vld [vmem:[%s4644 + $0x600] sm:$0xff]
    %v4838 = vld [vmem:[%s4644 + $0x608] sm:$0xff]
    %v4839 = vld [vmem:[%s4644 + $0x610] sm:$0xff]
    %v4840 = vld [vmem:[%s4644 + $0x618] sm:$0xff]
    %v5037 = vunpack.c.l.b16 %v4645
    %v5038 = vunpack.c.h.b16 %v4645
    %v5039 = vunpack.c.l.b16 %v4646
    %v5040 = vunpack.c.h.b16 %v4646
    %v5041 = vunpack.c.l.b16 %v4647
    %v5042 = vunpack.c.h.b16 %v4647
    %v5043 = vunpack.c.l.b16 %v4648
    %v5044 = vunpack.c.h.b16 %v4648
    %v5045 = vunpack.c.l.b16 %v4649
    %v5046 = vunpack.c.h.b16 %v4649
    %v5047 = vunpack.c.l.b16 %v4650
    %v5048 = vunpack.c.h.b16 %v4650
    %v5049 = vunpack.c.l.b16 %v4651
    %v5050 = vunpack.c.h.b16 %v4651
    %v5051 = vunpack.c.l.b16 %v4652
    %v5052 = vunpack.c.h.b16 %v4652
    %v5053 = vunpack.c.l.b16 %v4653
    %v5054 = vunpack.c.h.b16 %v4653
    %v5055 = vunpack.c.l.b16 %v4654
    %v5056 = vunpack.c.h.b16 %v4654
    %v5057 = vunpack.c.l.b16 %v4655
    %v5058 = vunpack.c.h.b16 %v4655
    %v5059 = vunpack.c.l.b16 %v4656
    %v5060 = vunpack.c.h.b16 %v4656
    %v5061 = vunpack.c.l.b16 %v4657
    %v5062 = vunpack.c.h.b16 %v4657
    %v5063 = vunpack.c.l.b16 %v4658
    %v5064 = vunpack.c.h.b16 %v4658
    %v5065 = vunpack.c.l.b16 %v4659
    %v5066 = vunpack.c.h.b16 %v4659
    %v5067 = vunpack.c.l.b16 %v4660
    %v5068 = vunpack.c.h.b16 %v4660
    %v5069 = vunpack.c.l.b16 %v4661
    %v5070 = vunpack.c.h.b16 %v4661
    %v5071 = vunpack.c.l.b16 %v4662
    %v5072 = vunpack.c.h.b16 %v4662
    %v5073 = vunpack.c.l.b16 %v4663
    %v5074 = vunpack.c.h.b16 %v4663
    %v5075 = vunpack.c.l.b16 %v4664
    %v5076 = vunpack.c.h.b16 %v4664
    %v5077 = vunpack.c.l.b16 %v4665
    %v5078 = vunpack.c.h.b16 %v4665
    %v5079 = vunpack.c.l.b16 %v4666
    %v5080 = vunpack.c.h.b16 %v4666
    %v5081 = vunpack.c.l.b16 %v4667
    %v5082 = vunpack.c.h.b16 %v4667
    %v5083 = vunpack.c.l.b16 %v4668
    %v5084 = vunpack.c.h.b16 %v4668
    %v5085 = vunpack.c.l.b16 %v4669
    %v5086 = vunpack.c.h.b16 %v4669
    %v5087 = vunpack.c.l.b16 %v4670
    %v5088 = vunpack.c.h.b16 %v4670
    %v5089 = vunpack.c.l.b16 %v4671
    %v5090 = vunpack.c.h.b16 %v4671
    %v5091 = vunpack.c.l.b16 %v4672
    %v5092 = vunpack.c.h.b16 %v4672
    %v5093 = vunpack.c.l.b16 %v4673
    %v5094 = vunpack.c.h.b16 %v4673
    %v5095 = vunpack.c.l.b16 %v4674
    %v5096 = vunpack.c.h.b16 %v4674
    %v5097 = vunpack.c.l.b16 %v4675
    %v5098 = vunpack.c.h.b16 %v4675
    %v5099 = vunpack.c.l.b16 %v4676
    %v5100 = vunpack.c.h.b16 %v4676
    %v5101 = vunpack.c.l.b16 %v4677
    %v5102 = vunpack.c.h.b16 %v4677
    %v5103 = vunpack.c.l.b16 %v4678
    %v5104 = vunpack.c.h.b16 %v4678
    %v5105 = vunpack.c.l.b16 %v4679
    %v5106 = vunpack.c.h.b16 %v4679
    %v5107 = vunpack.c.l.b16 %v4680
    %v5108 = vunpack.c.h.b16 %v4680
    %v5109 = vunpack.c.l.b16 %v4681
    %v5110 = vunpack.c.h.b16 %v4681
    %v5111 = vunpack.c.l.b16 %v4682
    %v5112 = vunpack.c.h.b16 %v4682
    %v5113 = vunpack.c.l.b16 %v4683
    %v5114 = vunpack.c.h.b16 %v4683
    %v5115 = vunpack.c.l.b16 %v4684
    %v5116 = vunpack.c.h.b16 %v4684
    %v5117 = vunpack.c.l.b16 %v4685
    %v5118 = vunpack.c.h.b16 %v4685
    %v5119 = vunpack.c.l.b16 %v4686
    %v5120 = vunpack.c.h.b16 %v4686
    %v5121 = vunpack.c.l.b16 %v4687
    %v5122 = vunpack.c.h.b16 %v4687
    %v5123 = vunpack.c.l.b16 %v4688
    %v5124 = vunpack.c.h.b16 %v4688
    %v5125 = vunpack.c.l.b16 %v4689
    %v5126 = vunpack.c.h.b16 %v4689
    %v5127 = vunpack.c.l.b16 %v4690
    %v5128 = vunpack.c.h.b16 %v4690
    %v5129 = vunpack.c.l.b16 %v4691
    %v5130 = vunpack.c.h.b16 %v4691
    %v5131 = vunpack.c.l.b16 %v4692
    %v5132 = vunpack.c.h.b16 %v4692
    %v5133 = vunpack.c.l.b16 %v4693
    %v5134 = vunpack.c.h.b16 %v4693
    %v5135 = vunpack.c.l.b16 %v4694
    %v5136 = vunpack.c.h.b16 %v4694
    %v5137 = vunpack.c.l.b16 %v4695
    %v5138 = vunpack.c.h.b16 %v4695
    %v5139 = vunpack.c.l.b16 %v4696
    %v5140 = vunpack.c.h.b16 %v4696
    %v5141 = vunpack.c.l.b16 %v4697
    %v5142 = vunpack.c.h.b16 %v4697
    %v5143 = vunpack.c.l.b16 %v4698
    %v5144 = vunpack.c.h.b16 %v4698
    %v5145 = vunpack.c.l.b16 %v4699
    %v5146 = vunpack.c.h.b16 %v4699
    %v5147 = vunpack.c.l.b16 %v4700
    %v5148 = vunpack.c.h.b16 %v4700
    %v5149 = vunpack.c.l.b16 %v4701
    %v5150 = vunpack.c.h.b16 %v4701
    %v5151 = vunpack.c.l.b16 %v4702
    %v5152 = vunpack.c.h.b16 %v4702
    %v5153 = vunpack.c.l.b16 %v4703
    %v5154 = vunpack.c.h.b16 %v4703
    %v5155 = vunpack.c.l.b16 %v4704
    %v5156 = vunpack.c.h.b16 %v4704
    %v5157 = vunpack.c.l.b16 %v4705
    %v5158 = vunpack.c.h.b16 %v4705
    %v5159 = vunpack.c.l.b16 %v4706
    %v5160 = vunpack.c.h.b16 %v4706
    %v5161 = vunpack.c.l.b16 %v4707
    %v5162 = vunpack.c.h.b16 %v4707
    %v5163 = vunpack.c.l.b16 %v4708
    %v5164 = vunpack.c.h.b16 %v4708
    %v5165 = vunpack.c.l.b16 %v4709
    %v5166 = vunpack.c.h.b16 %v4709
    %v5167 = vunpack.c.l.b16 %v4710
    %v5168 = vunpack.c.h.b16 %v4710
    %v5169 = vunpack.c.l.b16 %v4711
    %v5170 = vunpack.c.h.b16 %v4711
    %v5171 = vunpack.c.l.b16 %v4712
    %v5172 = vunpack.c.h.b16 %v4712
    %v5173 = vunpack.c.l.b16 %v4713
    %v5174 = vunpack.c.h.b16 %v4713
    %v5175 = vunpack.c.l.b16 %v4714
    %v5176 = vunpack.c.h.b16 %v4714
    %v5177 = vunpack.c.l.b16 %v4715
    %v5178 = vunpack.c.h.b16 %v4715
    %v5179 = vunpack.c.l.b16 %v4716
    %v5180 = vunpack.c.h.b16 %v4716
    %v5181 = vunpack.c.l.b16 %v4717
    %v5182 = vunpack.c.h.b16 %v4717
    %v5183 = vunpack.c.l.b16 %v4718
    %v5184 = vunpack.c.h.b16 %v4718
    %v5185 = vunpack.c.l.b16 %v4719
    %v5186 = vunpack.c.h.b16 %v4719
    %v5187 = vunpack.c.l.b16 %v4720
    %v5188 = vunpack.c.h.b16 %v4720
    %v5189 = vunpack.c.l.b16 %v4721
    %v5190 = vunpack.c.h.b16 %v4721
    %v5191 = vunpack.c.l.b16 %v4722
    %v5192 = vunpack.c.h.b16 %v4722
    %v5193 = vunpack.c.l.b16 %v4723
    %v5194 = vunpack.c.h.b16 %v4723
    %v5195 = vunpack.c.l.b16 %v4724
    %v5196 = vunpack.c.h.b16 %v4724
    %v5197 = vunpack.c.l.b16 %v4725
    %v5198 = vunpack.c.h.b16 %v4725
    %v5199 = vunpack.c.l.b16 %v4726
    %v5200 = vunpack.c.h.b16 %v4726
    %v5201 = vunpack.c.l.b16 %v4727
    %v5202 = vunpack.c.h.b16 %v4727
    %v5203 = vunpack.c.l.b16 %v4728
    %v5204 = vunpack.c.h.b16 %v4728
    %v5205 = vunpack.c.l.b16 %v4729
    %v5206 = vunpack.c.h.b16 %v4729
    %v5207 = vunpack.c.l.b16 %v4730
    %v5208 = vunpack.c.h.b16 %v4730
    %v5209 = vunpack.c.l.b16 %v4731
    %v5210 = vunpack.c.h.b16 %v4731
    %v5211 = vunpack.c.l.b16 %v4732
    %v5212 = vunpack.c.h.b16 %v4732
    %v5213 = vunpack.c.l.b16 %v4733
    %v5214 = vunpack.c.h.b16 %v4733
    %v5215 = vunpack.c.l.b16 %v4734
    %v5216 = vunpack.c.h.b16 %v4734
    %v5217 = vunpack.c.l.b16 %v4735
    %v5218 = vunpack.c.h.b16 %v4735
    %v5219 = vunpack.c.l.b16 %v4736
    %v5220 = vunpack.c.h.b16 %v4736
    %v5221 = vunpack.c.l.b16 %v4737
    %v5222 = vunpack.c.h.b16 %v4737
    %v5223 = vunpack.c.l.b16 %v4738
    %v5224 = vunpack.c.h.b16 %v4738
    %v5225 = vunpack.c.l.b16 %v4739
    %v5226 = vunpack.c.h.b16 %v4739
    %v5227 = vunpack.c.l.b16 %v4740
    %v5228 = vunpack.c.h.b16 %v4740
    %v5229 = vunpack.c.l.b16 %v4741
    %v5230 = vunpack.c.h.b16 %v4741
    %v5231 = vunpack.c.l.b16 %v4742
    %v5232 = vunpack.c.h.b16 %v4742
    %v5233 = vunpack.c.l.b16 %v4743
    %v5234 = vunpack.c.h.b16 %v4743
    %v5235 = vunpack.c.l.b16 %v4744
    %v5236 = vunpack.c.h.b16 %v4744
    %v5237 = vunpack.c.l.b16 %v4745
    %v5238 = vunpack.c.h.b16 %v4745
    %v5239 = vunpack.c.l.b16 %v4746
    %v5240 = vunpack.c.h.b16 %v4746
    %v5241 = vunpack.c.l.b16 %v4747
    %v5242 = vunpack.c.h.b16 %v4747
    %v5243 = vunpack.c.l.b16 %v4748
    %v5244 = vunpack.c.h.b16 %v4748
    %v5245 = vunpack.c.l.b16 %v4749
    %v5246 = vunpack.c.h.b16 %v4749
    %v5247 = vunpack.c.l.b16 %v4750
    %v5248 = vunpack.c.h.b16 %v4750
    %v5249 = vunpack.c.l.b16 %v4751
    %v5250 = vunpack.c.h.b16 %v4751
    %v5251 = vunpack.c.l.b16 %v4752
    %v5252 = vunpack.c.h.b16 %v4752
    %v5253 = vunpack.c.l.b16 %v4753
    %v5254 = vunpack.c.h.b16 %v4753
    %v5255 = vunpack.c.l.b16 %v4754
    %v5256 = vunpack.c.h.b16 %v4754
    %v5257 = vunpack.c.l.b16 %v4755
    %v5258 = vunpack.c.h.b16 %v4755
    %v5259 = vunpack.c.l.b16 %v4756
    %v5260 = vunpack.c.h.b16 %v4756
    %v5261 = vunpack.c.l.b16 %v4757
    %v5262 = vunpack.c.h.b16 %v4757
    %v5263 = vunpack.c.l.b16 %v4758
    %v5264 = vunpack.c.h.b16 %v4758
    %v5265 = vunpack.c.l.b16 %v4759
    %v5266 = vunpack.c.h.b16 %v4759
    %v5267 = vunpack.c.l.b16 %v4760
    %v5268 = vunpack.c.h.b16 %v4760
    %v5269 = vunpack.c.l.b16 %v4761
    %v5270 = vunpack.c.h.b16 %v4761
    %v5271 = vunpack.c.l.b16 %v4762
    %v5272 = vunpack.c.h.b16 %v4762
    %v5273 = vunpack.c.l.b16 %v4763
    %v5274 = vunpack.c.h.b16 %v4763
    %v5275 = vunpack.c.l.b16 %v4764
    %v5276 = vunpack.c.h.b16 %v4764
    %v5277 = vunpack.c.l.b16 %v4765
    %v5278 = vunpack.c.h.b16 %v4765
    %v5279 = vunpack.c.l.b16 %v4766
    %v5280 = vunpack.c.h.b16 %v4766
    %v5281 = vunpack.c.l.b16 %v4767
    %v5282 = vunpack.c.h.b16 %v4767
    %v5283 = vunpack.c.l.b16 %v4768
    %v5284 = vunpack.c.h.b16 %v4768
    %v5285 = vunpack.c.l.b16 %v4769
    %v5286 = vunpack.c.h.b16 %v4769
    %v5287 = vunpack.c.l.b16 %v4770
    %v5288 = vunpack.c.h.b16 %v4770
    %v5289 = vunpack.c.l.b16 %v4771
    %v5290 = vunpack.c.h.b16 %v4771
    %v5291 = vunpack.c.l.b16 %v4772
    %v5292 = vunpack.c.h.b16 %v4772
    %v5293 = vunpack.c.l.b16 %v4773
    %v5294 = vunpack.c.h.b16 %v4773
    %v5295 = vunpack.c.l.b16 %v4774
    %v5296 = vunpack.c.h.b16 %v4774
    %v5297 = vunpack.c.l.b16 %v4775
    %v5298 = vunpack.c.h.b16 %v4775
    %v5299 = vunpack.c.l.b16 %v4776
    %v5300 = vunpack.c.h.b16 %v4776
    %v5301 = vunpack.c.l.b16 %v4777
    %v5302 = vunpack.c.h.b16 %v4777
    %v5303 = vunpack.c.l.b16 %v4778
    %v5304 = vunpack.c.h.b16 %v4778
    %v5305 = vunpack.c.l.b16 %v4779
    %v5306 = vunpack.c.h.b16 %v4779
    %v5307 = vunpack.c.l.b16 %v4780
    %v5308 = vunpack.c.h.b16 %v4780
    %v5309 = vunpack.c.l.b16 %v4781
    %v5310 = vunpack.c.h.b16 %v4781
    %v5311 = vunpack.c.l.b16 %v4782
    %v5312 = vunpack.c.h.b16 %v4782
    %v5313 = vunpack.c.l.b16 %v4783
    %v5314 = vunpack.c.h.b16 %v4783
    %v5315 = vunpack.c.l.b16 %v4784
    %v5316 = vunpack.c.h.b16 %v4784
    %v5317 = vunpack.c.l.b16 %v4785
    %v5318 = vunpack.c.h.b16 %v4785
    %v5319 = vunpack.c.l.b16 %v4786
    %v5320 = vunpack.c.h.b16 %v4786
    %v5321 = vunpack.c.l.b16 %v4787
    %v5322 = vunpack.c.h.b16 %v4787
    %v5323 = vunpack.c.l.b16 %v4788
    %v5324 = vunpack.c.h.b16 %v4788
    %v5325 = vunpack.c.l.b16 %v4789
    %v5326 = vunpack.c.h.b16 %v4789
    %v5327 = vunpack.c.l.b16 %v4790
    %v5328 = vunpack.c.h.b16 %v4790
    %v5329 = vunpack.c.l.b16 %v4791
    %v5330 = vunpack.c.h.b16 %v4791
    %v5331 = vunpack.c.l.b16 %v4792
    %v5332 = vunpack.c.h.b16 %v4792
    %v5333 = vunpack.c.l.b16 %v4793
    %v5334 = vunpack.c.h.b16 %v4793
    %v5335 = vunpack.c.l.b16 %v4794
    %v5336 = vunpack.c.h.b16 %v4794
    %v5337 = vunpack.c.l.b16 %v4795
    %v5338 = vunpack.c.h.b16 %v4795
    %v5339 = vunpack.c.l.b16 %v4796
    %v5340 = vunpack.c.h.b16 %v4796
    %v5341 = vunpack.c.l.b16 %v4797
    %v5342 = vunpack.c.h.b16 %v4797
    %v5343 = vunpack.c.l.b16 %v4798
    %v5344 = vunpack.c.h.b16 %v4798
    %v5345 = vunpack.c.l.b16 %v4799
    %v5346 = vunpack.c.h.b16 %v4799
    %v5347 = vunpack.c.l.b16 %v4800
    %v5348 = vunpack.c.h.b16 %v4800
    %v5349 = vunpack.c.l.b16 %v4801
    %v5350 = vunpack.c.h.b16 %v4801
    %v5351 = vunpack.c.l.b16 %v4802
    %v5352 = vunpack.c.h.b16 %v4802
    %v5353 = vunpack.c.l.b16 %v4803
    %v5354 = vunpack.c.h.b16 %v4803
    %v5355 = vunpack.c.l.b16 %v4804
    %v5356 = vunpack.c.h.b16 %v4804
    %v5357 = vunpack.c.l.b16 %v4805
    %v5358 = vunpack.c.h.b16 %v4805
    %v5359 = vunpack.c.l.b16 %v4806
    %v5360 = vunpack.c.h.b16 %v4806
    %v5361 = vunpack.c.l.b16 %v4807
    %v5362 = vunpack.c.h.b16 %v4807
    %v5363 = vunpack.c.l.b16 %v4808
    %v5364 = vunpack.c.h.b16 %v4808
    %v5365 = vunpack.c.l.b16 %v4809
    %v5366 = vunpack.c.h.b16 %v4809
    %v5367 = vunpack.c.l.b16 %v4810
    %v5368 = vunpack.c.h.b16 %v4810
    %v5369 = vunpack.c.l.b16 %v4811
    %v5370 = vunpack.c.h.b16 %v4811
    %v5371 = vunpack.c.l.b16 %v4812
    %v5372 = vunpack.c.h.b16 %v4812
    %v5373 = vunpack.c.l.b16 %v4813
    %v5374 = vunpack.c.h.b16 %v4813
    %v5375 = vunpack.c.l.b16 %v4814
    %v5376 = vunpack.c.h.b16 %v4814
    %v5377 = vunpack.c.l.b16 %v4815
    %v5378 = vunpack.c.h.b16 %v4815
    %v5379 = vunpack.c.l.b16 %v4816
    %v5380 = vunpack.c.h.b16 %v4816
    %v5381 = vunpack.c.l.b16 %v4817
    %v5382 = vunpack.c.h.b16 %v4817
    %v5383 = vunpack.c.l.b16 %v4818
    %v5384 = vunpack.c.h.b16 %v4818
    %v5385 = vunpack.c.l.b16 %v4819
    %v5386 = vunpack.c.h.b16 %v4819
    %v5387 = vunpack.c.l.b16 %v4820
    %v5388 = vunpack.c.h.b16 %v4820
    %v5389 = vunpack.c.l.b16 %v4821
    %v5390 = vunpack.c.h.b16 %v4821
    %v5391 = vunpack.c.l.b16 %v4822
    %v5392 = vunpack.c.h.b16 %v4822
    %v5393 = vunpack.c.l.b16 %v4823
    %v5394 = vunpack.c.h.b16 %v4823
    %v5395 = vunpack.c.l.b16 %v4824
    %v5396 = vunpack.c.h.b16 %v4824
    %v5397 = vunpack.c.l.b16 %v4825
    %v5398 = vunpack.c.h.b16 %v4825
    %v5399 = vunpack.c.l.b16 %v4826
    %v5400 = vunpack.c.h.b16 %v4826
    %v5401 = vunpack.c.l.b16 %v4827
    %v5402 = vunpack.c.h.b16 %v4827
    %v5403 = vunpack.c.l.b16 %v4828
    %v5404 = vunpack.c.h.b16 %v4828
    %v5405 = vunpack.c.l.b16 %v4829
    %v5406 = vunpack.c.h.b16 %v4829
    %v5407 = vunpack.c.l.b16 %v4830
    %v5408 = vunpack.c.h.b16 %v4830
    %v5409 = vunpack.c.l.b16 %v4831
    %v5410 = vunpack.c.h.b16 %v4831
    %v5411 = vunpack.c.l.b16 %v4832
    %v5412 = vunpack.c.h.b16 %v4832
    %v5413 = vunpack.c.l.b16 %v4833
    %v5414 = vunpack.c.h.b16 %v4833
    %v5415 = vunpack.c.l.b16 %v4834
    %v5416 = vunpack.c.h.b16 %v4834
    %v5417 = vunpack.c.l.b16 %v4835
    %v5418 = vunpack.c.h.b16 %v4835
    %v5419 = vunpack.c.l.b16 %v4836
    %v5420 = vunpack.c.h.b16 %v4836
    %v5421 = vunpack.c.l.b16 %v4837
    %v5422 = vunpack.c.h.b16 %v4837
    %v5423 = vunpack.c.l.b16 %v4838
    %v5424 = vunpack.c.h.b16 %v4838
    %v5425 = vunpack.c.l.b16 %v4839
    %v5426 = vunpack.c.h.b16 %v4839
    %v5427 = vunpack.c.l.b16 %v4840
    %v5428 = vunpack.c.h.b16 %v4840
    %v5429 = vpack.c.b16 %v5041, %v5037
    %v5430 = vpack.c.b16 %v5042, %v5038
    %v5431 = vpack.c.b16 %v5043, %v5039
    %v5432 = vpack.c.b16 %v5044, %v5040
    %v5433 = vpack.c.b16 %v5049, %v5045
    %v5434 = vpack.c.b16 %v5050, %v5046
    %v5435 = vpack.c.b16 %v5051, %v5047
    %v5436 = vpack.c.b16 %v5052, %v5048
    %v5437 = vpack.c.b16 %v5057, %v5053
    %v5438 = vpack.c.b16 %v5058, %v5054
    %v5439 = vpack.c.b16 %v5059, %v5055
    %v5440 = vpack.c.b16 %v5060, %v5056
    %v5441 = vpack.c.b16 %v5065, %v5061
    %v5442 = vpack.c.b16 %v5066, %v5062
    %v5443 = vpack.c.b16 %v5067, %v5063
    %v5444 = vpack.c.b16 %v5068, %v5064
    %v5445 = vpack.c.b16 %v5073, %v5069
    %v5446 = vpack.c.b16 %v5074, %v5070
    %v5447 = vpack.c.b16 %v5075, %v5071
    %v5448 = vpack.c.b16 %v5076, %v5072
    %v5449 = vpack.c.b16 %v5081, %v5077
    %v5450 = vpack.c.b16 %v5082, %v5078
    %v5451 = vpack.c.b16 %v5083, %v5079
    %v5452 = vpack.c.b16 %v5084, %v5080
    %v5453 = vpack.c.b16 %v5089, %v5085
    %v5454 = vpack.c.b16 %v5090, %v5086
    %v5455 = vpack.c.b16 %v5091, %v5087
    %v5456 = vpack.c.b16 %v5092, %v5088
    %v5457 = vpack.c.b16 %v5097, %v5093
    %v5458 = vpack.c.b16 %v5098, %v5094
    %v5459 = vpack.c.b16 %v5099, %v5095
    %v5460 = vpack.c.b16 %v5100, %v5096
    %v5461 = vpack.c.b16 %v5105, %v5101
    %v5462 = vpack.c.b16 %v5106, %v5102
    %v5463 = vpack.c.b16 %v5107, %v5103
    %v5464 = vpack.c.b16 %v5108, %v5104
    %v5465 = vpack.c.b16 %v5113, %v5109
    %v5466 = vpack.c.b16 %v5114, %v5110
    %v5467 = vpack.c.b16 %v5115, %v5111
    %v5468 = vpack.c.b16 %v5116, %v5112
    %v5469 = vpack.c.b16 %v5121, %v5117
    %v5470 = vpack.c.b16 %v5122, %v5118
    %v5471 = vpack.c.b16 %v5123, %v5119
    %v5472 = vpack.c.b16 %v5124, %v5120
    %v5473 = vpack.c.b16 %v5129, %v5125
    %v5474 = vpack.c.b16 %v5130, %v5126
    %v5475 = vpack.c.b16 %v5131, %v5127
    %v5476 = vpack.c.b16 %v5132, %v5128
    %v5477 = vpack.c.b16 %v5137, %v5133
    %v5478 = vpack.c.b16 %v5138, %v5134
    %v5479 = vpack.c.b16 %v5139, %v5135
    %v5480 = vpack.c.b16 %v5140, %v5136
    %v5481 = vpack.c.b16 %v5145, %v5141
    %v5482 = vpack.c.b16 %v5146, %v5142
    %v5483 = vpack.c.b16 %v5147, %v5143
    %v5484 = vpack.c.b16 %v5148, %v5144
    %v5485 = vpack.c.b16 %v5153, %v5149
    %v5486 = vpack.c.b16 %v5154, %v5150
    %v5487 = vpack.c.b16 %v5155, %v5151
    %v5488 = vpack.c.b16 %v5156, %v5152
    %v5489 = vpack.c.b16 %v5161, %v5157
    %v5490 = vpack.c.b16 %v5162, %v5158
    %v5491 = vpack.c.b16 %v5163, %v5159
    %v5492 = vpack.c.b16 %v5164, %v5160
    %v5493 = vpack.c.b16 %v5169, %v5165
    %v5494 = vpack.c.b16 %v5170, %v5166
    %v5495 = vpack.c.b16 %v5171, %v5167
    %v5496 = vpack.c.b16 %v5172, %v5168
    %v5497 = vpack.c.b16 %v5177, %v5173
    %v5498 = vpack.c.b16 %v5178, %v5174
    %v5499 = vpack.c.b16 %v5179, %v5175
    %v5500 = vpack.c.b16 %v5180, %v5176
    %v5501 = vpack.c.b16 %v5185, %v5181
    %v5502 = vpack.c.b16 %v5186, %v5182
    %v5503 = vpack.c.b16 %v5187, %v5183
    %v5504 = vpack.c.b16 %v5188, %v5184
    %v5505 = vpack.c.b16 %v5193, %v5189
    %v5506 = vpack.c.b16 %v5194, %v5190
    %v5507 = vpack.c.b16 %v5195, %v5191
    %v5508 = vpack.c.b16 %v5196, %v5192
    %v5509 = vpack.c.b16 %v5201, %v5197
    %v5510 = vpack.c.b16 %v5202, %v5198
    %v5511 = vpack.c.b16 %v5203, %v5199
    %v5512 = vpack.c.b16 %v5204, %v5200
    %v5513 = vpack.c.b16 %v5209, %v5205
    %v5514 = vpack.c.b16 %v5210, %v5206
    %v5515 = vpack.c.b16 %v5211, %v5207
    %v5516 = vpack.c.b16 %v5212, %v5208
    %v5517 = vpack.c.b16 %v5217, %v5213
    %v5518 = vpack.c.b16 %v5218, %v5214
    %v5519 = vpack.c.b16 %v5219, %v5215
    %v5520 = vpack.c.b16 %v5220, %v5216
    %v5521 = vpack.c.b16 %v5225, %v5221
    %v5522 = vpack.c.b16 %v5226, %v5222
    %v5523 = vpack.c.b16 %v5227, %v5223
    %v5524 = vpack.c.b16 %v5228, %v5224
    %v5525 = vpack.c.b16 %v5233, %v5229
    %v5526 = vpack.c.b16 %v5234, %v5230
    %v5527 = vpack.c.b16 %v5235, %v5231
    %v5528 = vpack.c.b16 %v5236, %v5232
    %v5529 = vpack.c.b16 %v5241, %v5237
    %v5530 = vpack.c.b16 %v5242, %v5238
    %v5531 = vpack.c.b16 %v5243, %v5239
    %v5532 = vpack.c.b16 %v5244, %v5240
    %v5533 = vpack.c.b16 %v5249, %v5245
    %v5534 = vpack.c.b16 %v5250, %v5246
    %v5535 = vpack.c.b16 %v5251, %v5247
    %v5536 = vpack.c.b16 %v5252, %v5248
    %v5537 = vpack.c.b16 %v5257, %v5253
    %v5538 = vpack.c.b16 %v5258, %v5254
    %v5539 = vpack.c.b16 %v5259, %v5255
    %v5540 = vpack.c.b16 %v5260, %v5256
    %v5541 = vpack.c.b16 %v5265, %v5261
    %v5542 = vpack.c.b16 %v5266, %v5262
    %v5543 = vpack.c.b16 %v5267, %v5263
    %v5544 = vpack.c.b16 %v5268, %v5264
    %v5545 = vpack.c.b16 %v5273, %v5269
    %v5546 = vpack.c.b16 %v5274, %v5270
    %v5547 = vpack.c.b16 %v5275, %v5271
    %v5548 = vpack.c.b16 %v5276, %v5272
    %v5549 = vpack.c.b16 %v5281, %v5277
    %v5550 = vpack.c.b16 %v5282, %v5278
    %v5551 = vpack.c.b16 %v5283, %v5279
    %v5552 = vpack.c.b16 %v5284, %v5280
    %v5553 = vpack.c.b16 %v5289, %v5285
    %v5554 = vpack.c.b16 %v5290, %v5286
    %v5555 = vpack.c.b16 %v5291, %v5287
    %v5556 = vpack.c.b16 %v5292, %v5288
    %v5557 = vpack.c.b16 %v5297, %v5293
    %v5558 = vpack.c.b16 %v5298, %v5294
    %v5559 = vpack.c.b16 %v5299, %v5295
    %v5560 = vpack.c.b16 %v5300, %v5296
    %v5561 = vpack.c.b16 %v5305, %v5301
    %v5562 = vpack.c.b16 %v5306, %v5302
    %v5563 = vpack.c.b16 %v5307, %v5303
    %v5564 = vpack.c.b16 %v5308, %v5304
    %v5565 = vpack.c.b16 %v5313, %v5309
    %v5566 = vpack.c.b16 %v5314, %v5310
    %v5567 = vpack.c.b16 %v5315, %v5311
    %v5568 = vpack.c.b16 %v5316, %v5312
    %v5569 = vpack.c.b16 %v5321, %v5317
    %v5570 = vpack.c.b16 %v5322, %v5318
    %v5571 = vpack.c.b16 %v5323, %v5319
    %v5572 = vpack.c.b16 %v5324, %v5320
    %v5573 = vpack.c.b16 %v5329, %v5325
    %v5574 = vpack.c.b16 %v5330, %v5326
    %v5575 = vpack.c.b16 %v5331, %v5327
    %v5576 = vpack.c.b16 %v5332, %v5328
    %v5577 = vpack.c.b16 %v5337, %v5333
    %v5578 = vpack.c.b16 %v5338, %v5334
    %v5579 = vpack.c.b16 %v5339, %v5335
    %v5580 = vpack.c.b16 %v5340, %v5336
    %v5581 = vpack.c.b16 %v5345, %v5341
    %v5582 = vpack.c.b16 %v5346, %v5342
    %v5583 = vpack.c.b16 %v5347, %v5343
    %v5584 = vpack.c.b16 %v5348, %v5344
    %v5585 = vpack.c.b16 %v5353, %v5349
    %v5586 = vpack.c.b16 %v5354, %v5350
    %v5587 = vpack.c.b16 %v5355, %v5351
    %v5588 = vpack.c.b16 %v5356, %v5352
    %v5589 = vpack.c.b16 %v5361, %v5357
    %v5590 = vpack.c.b16 %v5362, %v5358
    %v5591 = vpack.c.b16 %v5363, %v5359
    %v5592 = vpack.c.b16 %v5364, %v5360
    %v5593 = vpack.c.b16 %v5369, %v5365
    %v5594 = vpack.c.b16 %v5370, %v5366
    %v5595 = vpack.c.b16 %v5371, %v5367
    %v5596 = vpack.c.b16 %v5372, %v5368
    %v5597 = vpack.c.b16 %v5377, %v5373
    %v5598 = vpack.c.b16 %v5378, %v5374
    %v5599 = vpack.c.b16 %v5379, %v5375
    %v5600 = vpack.c.b16 %v5380, %v5376
    %v5601 = vpack.c.b16 %v5385, %v5381
    %v5602 = vpack.c.b16 %v5386, %v5382
    %v5603 = vpack.c.b16 %v5387, %v5383
    %v5604 = vpack.c.b16 %v5388, %v5384
    %v5605 = vpack.c.b16 %v5393, %v5389
    %v5606 = vpack.c.b16 %v5394, %v5390
    %v5607 = vpack.c.b16 %v5395, %v5391
    %v5608 = vpack.c.b16 %v5396, %v5392
    %v5609 = vpack.c.b16 %v5401, %v5397
    %v5610 = vpack.c.b16 %v5402, %v5398
    %v5611 = vpack.c.b16 %v5403, %v5399
    %v5612 = vpack.c.b16 %v5404, %v5400
    %v5613 = vpack.c.b16 %v5409, %v5405
    %v5614 = vpack.c.b16 %v5410, %v5406
    %v5615 = vpack.c.b16 %v5411, %v5407
    %v5616 = vpack.c.b16 %v5412, %v5408
    %v5617 = vpack.c.b16 %v5417, %v5413
    %v5618 = vpack.c.b16 %v5418, %v5414
    %v5619 = vpack.c.b16 %v5419, %v5415
    %v5620 = vpack.c.b16 %v5420, %v5416
    %v5621 = vpack.c.b16 %v5425, %v5421
    %v5622 = vpack.c.b16 %v5426, %v5422
    %v5623 = vpack.c.b16 %v5427, %v5423
    %v5624 = vpack.c.b16 %v5428, %v5424
    %5821 = vmatprep.subr.bf16.mxu0 %v5458
    %5822 = vmatpush1.bf16.msra.mxu0 %v5457
    %5823 = vmatprep.subr.bf16.mxu0 %v5454
    %5824 = vmatpush1.bf16.msra.mxu0 %v5453
    %5825 = vmatprep.subr.bf16.mxu0 %v5450
    %5826 = vmatpush1.bf16.msra.mxu0 %v5449
    %5827 = vmatprep.subr.bf16.mxu0 %v5446
    %5828 = vmatpush1.bf16.msra.mxu0 %v5445
    %5829 = vmatprep.subr.bf16.mxu0 %v5442
    %5830 = vmatpush1.bf16.msra.mxu0 %v5441
    %5831 = vmatprep.subr.bf16.mxu0 %v5438
    %5832 = vmatpush1.bf16.msra.mxu0 %v5437
    %5833 = vmatprep.subr.bf16.mxu0 %v5434
    %5834 = vmatpush1.bf16.msra.mxu0 %v5433
    %5835 = vmatprep.subr.bf16.mxu0 %v5430
    %5836 = vmatpush1.bf16.msra.mxu0 %v5429
    %5837 = vmatprep.subr.bf16.mxu0 %v5490
    %5838 = vmatpush2.bf16.msra.mxu0 %v5489
    %5839 = vmatprep.subr.bf16.mxu0 %v5486
    %5840 = vmatpush2.bf16.msra.mxu0 %v5485
    %5841 = vmatprep.subr.bf16.mxu0 %v5482
    %5842 = vmatpush2.bf16.msra.mxu0 %v5481
    %5843 = vmatprep.subr.bf16.mxu0 %v5478
    %5844 = vmatpush2.bf16.msra.mxu0 %v5477
    %5845 = vmatprep.subr.bf16.mxu0 %v5474
    %5846 = vmatpush2.bf16.msra.mxu0 %v5473
    %5847 = vmatprep.subr.bf16.mxu0 %v5470
    %5848 = vmatpush2.bf16.msra.mxu0 %v5469
    %5849 = vmatprep.subr.bf16.mxu0 %v5466
    %5850 = vmatpush2.bf16.msra.mxu0 %v5465
    %5851 = vmatprep.subr.bf16.mxu0 %v5462
    %5852 = vmatpush2.bf16.msra.mxu0 %v5461
    %5853 = vmatprep.mubr.bf16.mxu0 %v302
    %5854 = vmatmul.mubr.bf16.gmra.mxu0 %v301
    %v5855 = vpop.f32.mrf.mxu0
    %v5856 = vadd.f32 0.0, %v5855
    %v5857 = vpop.f32.mrf.mxu0
    %v5858 = vadd.f32 0.0, %v5857
    %v5859 = vpop.f32.mrf.mxu0
    %v5860 = vpop.f32.mrf.mxu0
    %5861 = vdwg.mxu0
    %5862 = vmatprep.subr.bf16.mxu0 %v5522
    %5863 = vmatpush1.bf16.msra.mxu0 %v5521
    %5864 = vmatprep.subr.bf16.mxu0 %v5518
    %5865 = vmatpush1.bf16.msra.mxu0 %v5517
    %5866 = vmatprep.subr.bf16.mxu0 %v5514
    %5867 = vmatpush1.bf16.msra.mxu0 %v5513
    %5868 = vmatprep.subr.bf16.mxu0 %v5510
    %5869 = vmatpush1.bf16.msra.mxu0 %v5509
    %5870 = vmatprep.subr.bf16.mxu0 %v5506
    %5871 = vmatpush1.bf16.msra.mxu0 %v5505
    %5872 = vmatprep.subr.bf16.mxu0 %v5502
    %5873 = vmatpush1.bf16.msra.mxu0 %v5501
    %5874 = vmatprep.subr.bf16.mxu0 %v5498
    %5875 = vmatpush1.bf16.msra.mxu0 %v5497
    %5876 = vmatprep.subr.bf16.mxu0 %v5494
    %5877 = vmatpush1.bf16.msra.mxu0 %v5493
    %5878 = vmatprep.subr.bf16.mxu0 %v5554
    %5879 = vmatpush2.bf16.msra.mxu0 %v5553
    %5880 = vmatprep.subr.bf16.mxu0 %v5550
    %5881 = vmatpush2.bf16.msra.mxu0 %v5549
    %5882 = vmatprep.subr.bf16.mxu0 %v5546
    %5883 = vmatpush2.bf16.msra.mxu0 %v5545
    %5884 = vmatprep.subr.bf16.mxu0 %v5542
    %5885 = vmatpush2.bf16.msra.mxu0 %v5541
    %5886 = vmatprep.subr.bf16.mxu0 %v5538
    %5887 = vmatpush2.bf16.msra.mxu0 %v5537
    %5888 = vmatprep.subr.bf16.mxu0 %v5534
    %5889 = vmatpush2.bf16.msra.mxu0 %v5533
    %5890 = vmatprep.subr.bf16.mxu0 %v5530
    %5891 = vmatpush2.bf16.msra.mxu0 %v5529
    %5892 = vmatprep.subr.bf16.mxu0 %v5526
    %5893 = vmatpush2.bf16.msra.mxu0 %v5525
    %5894 = vmatprep.mubr.bf16.mxu0 %v304
    %5895 = vmatmul.mubr.bf16.gmra.mxu0 %v303
    %v5896 = vpop.f32.mrf.mxu0
    %v5897 = vadd.f32 %v5856, %v5896
    %v5898 = vpop.f32.mrf.mxu0
    %v5899 = vadd.f32 %v5858, %v5898
    %v5900 = vpop.f32.mrf.mxu0
    %v5901 = vpop.f32.mrf.mxu0
    %5902 = vdwg.mxu0
    %5903 = vmatprep.subr.bf16.mxu0 %v5586
    %5904 = vmatpush1.bf16.msra.mxu0 %v5585
    %5905 = vmatprep.subr.bf16.mxu0 %v5582
    %5906 = vmatpush1.bf16.msra.mxu0 %v5581
    %5907 = vmatprep.subr.bf16.mxu0 %v5578
    %5908 = vmatpush1.bf16.msra.mxu0 %v5577
    %5909 = vmatprep.subr.bf16.mxu0 %v5574
    %5910 = vmatpush1.bf16.msra.mxu0 %v5573
    %5911 = vmatprep.subr.bf16.mxu0 %v5570
    %5912 = vmatpush1.bf16.msra.mxu0 %v5569
    %5913 = vmatprep.subr.bf16.mxu0 %v5566
    %5914 = vmatpush1.bf16.msra.mxu0 %v5565
    %5915 = vmatprep.subr.bf16.mxu0 %v5562
    %5916 = vmatpush1.bf16.msra.mxu0 %v5561
    %5917 = vmatprep.subr.bf16.mxu0 %v5558
    %5918 = vmatpush1.bf16.msra.mxu0 %v5557
    %5919 = vmatprep.subr.bf16.mxu0 %v5618
    %5920 = vmatpush2.bf16.msra.mxu0 %v5617
    %5921 = vmatprep.subr.bf16.mxu0 %v5614
    %5922 = vmatpush2.bf16.msra.mxu0 %v5613
    %5923 = vmatprep.subr.bf16.mxu0 %v5610
    %5924 = vmatpush2.bf16.msra.mxu0 %v5609
    %5925 = vmatprep.subr.bf16.mxu0 %v5606
    %5926 = vmatpush2.bf16.msra.mxu0 %v5605
    %5927 = vmatprep.subr.bf16.mxu0 %v5602
    %5928 = vmatpush2.bf16.msra.mxu0 %v5601
    %5929 = vmatprep.subr.bf16.mxu0 %v5598
    %5930 = vmatpush2.bf16.msra.mxu0 %v5597
    %5931 = vmatprep.subr.bf16.mxu0 %v5594
    %5932 = vmatpush2.bf16.msra.mxu0 %v5593
    %5933 = vmatprep.subr.bf16.mxu0 %v5590
    %5934 = vmatpush2.bf16.msra.mxu0 %v5589
    %5935 = vmatprep.mubr.bf16.mxu0 %v306
    %5936 = vmatmul.mubr.bf16.gmra.mxu0 %v305
    %v5937 = vpop.f32.mrf.mxu0
    %v5938 = vadd.f32 %v5897, %v5937
    %v5939 = vpop.f32.mrf.mxu0
    %v5940 = vadd.f32 %v5899, %v5939
    %v5941 = vpop.f32.mrf.mxu0
    %v5942 = vpop.f32.mrf.mxu0
    %5943 = vdwg.mxu0
    %5944 = vmatprep.subr.bf16.mxu0 0
    %5945 = vmatpush1.bf16.msra.mxu0 0
    %5946 = vmatprep.subr.bf16.mxu0 0
    %5947 = vmatpush1.bf16.msra.mxu0 0
    %5948 = vmatprep.subr.bf16.mxu0 0
    %5949 = vmatpush1.bf16.msra.mxu0 0
    %5950 = vmatprep.subr.bf16.mxu0 0
    %5951 = vmatpush1.bf16.msra.mxu0 0
    %5952 = vmatprep.subr.bf16.mxu0 0
    %5953 = vmatpush1.bf16.msra.mxu0 0
    %5954 = vmatprep.subr.bf16.mxu0 0
    %5955 = vmatpush1.bf16.msra.mxu0 0
    %5956 = vmatprep.subr.bf16.mxu0 0
    %5957 = vmatpush1.bf16.msra.mxu0 0
    %5958 = vmatprep.subr.bf16.mxu0 %v5622
    %5959 = vmatpush1.bf16.msra.mxu0 %v5621
    %5960 = vmatprep.subr.bf16.mxu0 0
    %5961 = vmatpush2.bf16.msra.mxu0 0
    %5962 = vmatprep.subr.bf16.mxu0 0
    %5963 = vmatpush2.bf16.msra.mxu0 0
    %5964 = vmatprep.subr.bf16.mxu0 0
    %5965 = vmatpush2.bf16.msra.mxu0 0
    %5966 = vmatprep.subr.bf16.mxu0 0
    %5967 = vmatpush2.bf16.msra.mxu0 0
    %5968 = vmatprep.subr.bf16.mxu0 0
    %5969 = vmatpush2.bf16.msra.mxu0 0
    %5970 = vmatprep.subr.bf16.mxu0 0
    %5971 = vmatpush2.bf16.msra.mxu0 0
    %5972 = vmatprep.subr.bf16.mxu0 0
    %5973 = vmatpush2.bf16.msra.mxu0 0
    %5974 = vmatprep.subr.bf16.mxu0 0
    %5975 = vmatpush2.bf16.msra.mxu0 0
    %5976 = vmatprep.mubr.bf16.mxu0 0
    %5977 = vmatmul.mubr.bf16.gmra.mxu0 %v1296
    %v5978 = vpop.f32.mrf.mxu0
    %v5979 = vadd.f32 %v5938, %v5978
    %v5980 = vpop.f32.mrf.mxu0
    %v5981 = vadd.f32 %v5940, %v5980
    %v5982 = vpop.f32.mrf.mxu0
    %v5983 = vpop.f32.mrf.mxu0
    %5984 = vdwg.mxu0
    %5985 = vmatprep.subr.bf16.mxu0 %v5460
    %5986 = vmatpush1.bf16.msra.mxu0 %v5459
    %5987 = vmatprep.subr.bf16.mxu0 %v5456
    %5988 = vmatpush1.bf16.msra.mxu0 %v5455
    %5989 = vmatprep.subr.bf16.mxu0 %v5452
    %5990 = vmatpush1.bf16.msra.mxu0 %v5451
    %5991 = vmatprep.subr.bf16.mxu0 %v5448
    %5992 = vmatpush1.bf16.msra.mxu0 %v5447
    %5993 = vmatprep.subr.bf16.mxu0 %v5444
    %5994 = vmatpush1.bf16.msra.mxu0 %v5443
    %5995 = vmatprep.subr.bf16.mxu0 %v5440
    %5996 = vmatpush1.bf16.msra.mxu0 %v5439
    %5997 = vmatprep.subr.bf16.mxu0 %v5436
    %5998 = vmatpush1.bf16.msra.mxu0 %v5435
    %5999 = vmatprep.subr.bf16.mxu0 %v5432
    %6000 = vmatpush1.bf16.msra.mxu0 %v5431
    %6001 = vmatprep.subr.bf16.mxu0 %v5492
    %6002 = vmatpush2.bf16.msra.mxu0 %v5491
    %6003 = vmatprep.subr.bf16.mxu0 %v5488
    %6004 = vmatpush2.bf16.msra.mxu0 %v5487
    %6005 = vmatprep.subr.bf16.mxu0 %v5484
    %6006 = vmatpush2.bf16.msra.mxu0 %v5483
    %6007 = vmatprep.subr.bf16.mxu0 %v5480
    %6008 = vmatpush2.bf16.msra.mxu0 %v5479
    %6009 = vmatprep.subr.bf16.mxu0 %v5476
    %6010 = vmatpush2.bf16.msra.mxu0 %v5475
    %6011 = vmatprep.subr.bf16.mxu0 %v5472
    %6012 = vmatpush2.bf16.msra.mxu0 %v5471
    %6013 = vmatprep.subr.bf16.mxu0 %v5468
    %6014 = vmatpush2.bf16.msra.mxu0 %v5467
    %6015 = vmatprep.subr.bf16.mxu0 %v5464
    %6016 = vmatpush2.bf16.msra.mxu0 %v5463
    %6017 = vmatprep.mubr.bf16.mxu0 %v302
    %6018 = vmatmul.mubr.bf16.gmra.mxu0 %v301
    %v6019 = vpop.f32.mrf.mxu0
    %v6020 = vadd.f32 0.0, %v6019
    %v6021 = vpop.f32.mrf.mxu0
    %v6022 = vadd.f32 0.0, %v6021
    %v6023 = vpop.f32.mrf.mxu0
    %v6024 = vpop.f32.mrf.mxu0
    %6025 = vdwg.mxu0
    %6026 = vmatprep.subr.bf16.mxu0 %v5524
    %6027 = vmatpush1.bf16.msra.mxu0 %v5523
    %6028 = vmatprep.subr.bf16.mxu0 %v5520
    %6029 = vmatpush1.bf16.msra.mxu0 %v5519
    %6030 = vmatprep.subr.bf16.mxu0 %v5516
    %6031 = vmatpush1.bf16.msra.mxu0 %v5515
    %6032 = vmatprep.subr.bf16.mxu0 %v5512
    %6033 = vmatpush1.bf16.msra.mxu0 %v5511
    %6034 = vmatprep.subr.bf16.mxu0 %v5508
    %6035 = vmatpush1.bf16.msra.mxu0 %v5507
    %6036 = vmatprep.subr.bf16.mxu0 %v5504
    %6037 = vmatpush1.bf16.msra.mxu0 %v5503
    %6038 = vmatprep.subr.bf16.mxu0 %v5500
    %6039 = vmatpush1.bf16.msra.mxu0 %v5499
    %6040 = vmatprep.subr.bf16.mxu0 %v5496
    %6041 = vmatpush1.bf16.msra.mxu0 %v5495
    %6042 = vmatprep.subr.bf16.mxu0 %v5556
    %6043 = vmatpush2.bf16.msra.mxu0 %v5555
    %6044 = vmatprep.subr.bf16.mxu0 %v5552
    %6045 = vmatpush2.bf16.msra.mxu0 %v5551
    %6046 = vmatprep.subr.bf16.mxu0 %v5548
    %6047 = vmatpush2.bf16.msra.mxu0 %v5547
    %6048 = vmatprep.subr.bf16.mxu0 %v5544
    %6049 = vmatpush2.bf16.msra.mxu0 %v5543
    %6050 = vmatprep.subr.bf16.mxu0 %v5540
    %6051 = vmatpush2.bf16.msra.mxu0 %v5539
    %6052 = vmatprep.subr.bf16.mxu0 %v5536
    %6053 = vmatpush2.bf16.msra.mxu0 %v5535
    %6054 = vmatprep.subr.bf16.mxu0 %v5532
    %6055 = vmatpush2.bf16.msra.mxu0 %v5531
    %6056 = vmatprep.subr.bf16.mxu0 %v5528
    %6057 = vmatpush2.bf16.msra.mxu0 %v5527
    %6058 = vmatprep.mubr.bf16.mxu0 %v304
    %6059 = vmatmul.mubr.bf16.gmra.mxu0 %v303
    %v6060 = vpop.f32.mrf.mxu0
    %v6061 = vadd.f32 %v6020, %v6060
    %v6062 = vpop.f32.mrf.mxu0
    %v6063 = vadd.f32 %v6022, %v6062
    %v6064 = vpop.f32.mrf.mxu0
    %v6065 = vpop.f32.mrf.mxu0
    %6066 = vdwg.mxu0
    %6067 = vmatprep.subr.bf16.mxu0 %v5588
    %6068 = vmatpush1.bf16.msra.mxu0 %v5587
    %6069 = vmatprep.subr.bf16.mxu0 %v5584
    %6070 = vmatpush1.bf16.msra.mxu0 %v5583
    %6071 = vmatprep.subr.bf16.mxu0 %v5580
    %6072 = vmatpush1.bf16.msra.mxu0 %v5579
    %6073 = vmatprep.subr.bf16.mxu0 %v5576
    %6074 = vmatpush1.bf16.msra.mxu0 %v5575
    %6075 = vmatprep.subr.bf16.mxu0 %v5572
    %6076 = vmatpush1.bf16.msra.mxu0 %v5571
    %6077 = vmatprep.subr.bf16.mxu0 %v5568
    %6078 = vmatpush1.bf16.msra.mxu0 %v5567
    %6079 = vmatprep.subr.bf16.mxu0 %v5564
    %6080 = vmatpush1.bf16.msra.mxu0 %v5563
    %6081 = vmatprep.subr.bf16.mxu0 %v5560
    %6082 = vmatpush1.bf16.msra.mxu0 %v5559
    %6083 = vmatprep.subr.bf16.mxu0 %v5620
    %6084 = vmatpush2.bf16.msra.mxu0 %v5619
    %6085 = vmatprep.subr.bf16.mxu0 %v5616
    %6086 = vmatpush2.bf16.msra.mxu0 %v5615
    %6087 = vmatprep.subr.bf16.mxu0 %v5612
    %6088 = vmatpush2.bf16.msra.mxu0 %v5611
    %6089 = vmatprep.subr.bf16.mxu0 %v5608
    %6090 = vmatpush2.bf16.msra.mxu0 %v5607
    %6091 = vmatprep.subr.bf16.mxu0 %v5604
    %6092 = vmatpush2.bf16.msra.mxu0 %v5603
    %6093 = vmatprep.subr.bf16.mxu0 %v5600
    %6094 = vmatpush2.bf16.msra.mxu0 %v5599
    %6095 = vmatprep.subr.bf16.mxu0 %v5596
    %6096 = vmatpush2.bf16.msra.mxu0 %v5595
    %6097 = vmatprep.subr.bf16.mxu0 %v5592
    %6098 = vmatpush2.bf16.msra.mxu0 %v5591
    %6099 = vmatprep.mubr.bf16.mxu0 %v306
    %6100 = vmatmul.mubr.bf16.gmra.mxu0 %v305
    %v6101 = vpop.f32.mrf.mxu0
    %v6102 = vadd.f32 %v6061, %v6101
    %v6103 = vpop.f32.mrf.mxu0
    %v6104 = vadd.f32 %v6063, %v6103
    %v6105 = vpop.f32.mrf.mxu0
    %v6106 = vpop.f32.mrf.mxu0
    %6107 = vdwg.mxu0
    %6108 = vmatprep.subr.bf16.mxu0 0
    %6109 = vmatpush1.bf16.msra.mxu0 0
    %6110 = vmatprep.subr.bf16.mxu0 0
    %6111 = vmatpush1.bf16.msra.mxu0 0
    %6112 = vmatprep.subr.bf16.mxu0 0
    %6113 = vmatpush1.bf16.msra.mxu0 0
    %6114 = vmatprep.subr.bf16.mxu0 0
    %6115 = vmatpush1.bf16.msra.mxu0 0
    %6116 = vmatprep.subr.bf16.mxu0 0
    %6117 = vmatpush1.bf16.msra.mxu0 0
    %6118 = vmatprep.subr.bf16.mxu0 0
    %6119 = vmatpush1.bf16.msra.mxu0 0
    %6120 = vmatprep.subr.bf16.mxu0 0
    %6121 = vmatpush1.bf16.msra.mxu0 0
    %6122 = vmatprep.subr.bf16.mxu0 %v5624
    %6123 = vmatpush1.bf16.msra.mxu0 %v5623
    %6124 = vmatprep.subr.bf16.mxu0 0
    %6125 = vmatpush2.bf16.msra.mxu0 0
    %6126 = vmatprep.subr.bf16.mxu0 0
    %6127 = vmatpush2.bf16.msra.mxu0 0
    %6128 = vmatprep.subr.bf16.mxu0 0
    %6129 = vmatpush2.bf16.msra.mxu0 0
    %6130 = vmatprep.subr.bf16.mxu0 0
    %6131 = vmatpush2.bf16.msra.mxu0 0
    %6132 = vmatprep.subr.bf16.mxu0 0
    %6133 = vmatpush2.bf16.msra.mxu0 0
    %6134 = vmatprep.subr.bf16.mxu0 0
    %6135 = vmatpush2.bf16.msra.mxu0 0
    %6136 = vmatprep.subr.bf16.mxu0 0
    %6137 = vmatpush2.bf16.msra.mxu0 0
    %6138 = vmatprep.subr.bf16.mxu0 0
    %6139 = vmatpush2.bf16.msra.mxu0 0
    %6140 = vmatprep.mubr.bf16.mxu0 0
    %6141 = vmatmul.mubr.bf16.gmra.mxu0 %v1296
    %v6142 = vpop.f32.mrf.mxu0
    %v6143 = vadd.f32 %v6102, %v6142
    %v6144 = vpop.f32.mrf.mxu0
    %v6145 = vadd.f32 %v6104, %v6144
    %v6146 = vpop.f32.mrf.mxu0
    %v6147 = vpop.f32.mrf.mxu0
    %6148 = vdwg.mxu0
    %v6149 = vmax.f32 %v4640, %v5979
    %v6150 = vmax.f32 %v4641, %v5981
    %v6151 = vmax.f32 %v4642, %v6143
    %v6152 = vmax.f32 %v4643, %v6145
    %v6154 = vlaneseq
    %v6155 = vshrl.u32 %v6154, 7
    %v6156 = vsub.s32 0, %v6155
    %v6157 = vrot.slane %v93, %v6156
    %v6158 = vlaneseq
    %v6159 = vshrl.u32 %v6158, 7
    %v6160 = vsub.s32 1, %v6159
    %v6161 = vrot.slane %v93, %v6160
    %v6162 = vlaneseq
    %v6163 = vshrl.u32 %v6162, 7
    %v6164 = vsub.s32 2, %v6163
    %v6165 = vrot.slane %v93, %v6164
    %v6166 = vlaneseq
    %v6167 = vshrl.u32 %v6166, 7
    %v6168 = vsub.s32 3, %v6167
    %v6169 = vrot.slane %v93, %v6168
    %v6174 = vadd.f32 %v6149, %v6157
    %v6175 = vadd.f32 %v6150, %v6161
    %v6176 = vadd.f32 %v6151, %v6165
    %v6177 = vadd.f32 %v6152, %v6169
    %v6178 = vmax.f32 %v6174, 0.0
    %v6179 = vmax.f32 %v6175, 0.0
    %v6180 = vmax.f32 %v6176, 0.0
    %v6181 = vmax.f32 %v6177, 0.0
    %v6182 = vpack.c.bf16 %v6178, %v6178
    %v6183 = vpack.c.bf16 %v6179, %v6179
    %v6184 = vpack.c.bf16 %v6180, %v6180
    %v6185 = vpack.c.bf16 %v6181, %v6181
    %v6186 = vld [vmem:[#allocation7] sm:$0x1]
    %v6187 = vld [vmem:[#allocation6] sm:$0xf]
    %v6188 = vld [vmem:[#allocation6 + $0x4] sm:$0xf]
    %v6189 = vld [vmem:[#allocation6 + $0x8] sm:$0xf]
    %v6190 = vld [vmem:[#allocation6 + $0xc] sm:$0xf]
    %v6191 = vld [vmem:[#allocation6 + $0x10] sm:$0xf]
    %v6192 = vld [vmem:[#allocation6 + $0x14] sm:$0xf]
    %v6193 = vld [vmem:[#allocation6 + $0x18] sm:$0xf]
    %v6194 = vld [vmem:[#allocation6 + $0x1c] sm:$0xf]
    %v6195 = vld [vmem:[#allocation6 + $0x20] sm:$0xf]
    %v6196 = vld [vmem:[#allocation6 + $0x24] sm:$0xf]
    %v6197 = vld [vmem:[#allocation6 + $0x28] sm:$0xf]
    %v6198 = vld [vmem:[#allocation6 + $0x2c] sm:$0xf]
    %v6199 = vld [vmem:[#allocation6 + $0x30] sm:$0xf]
    %v6200 = vld [vmem:[#allocation6 + $0x34] sm:$0xf]
    %v6201 = vld [vmem:[#allocation6 + $0x38] sm:$0xf]
    %v6202 = vld [vmem:[#allocation6 + $0x3c] sm:$0xf]
    %v6203 = vld [vmem:[#allocation6 + $0x40] sm:$0xf]
    %v6204 = vld [vmem:[#allocation6 + $0x44] sm:$0xf]
    %v6205 = vld [vmem:[#allocation6 + $0x48] sm:$0xf]
    %v6206 = vld [vmem:[#allocation6 + $0x4c] sm:$0xf]
    %v6207 = vld [vmem:[#allocation6 + $0x50] sm:$0xf]
    %v6208 = vld [vmem:[#allocation6 + $0x54] sm:$0xf]
    %v6209 = vld [vmem:[#allocation6 + $0x58] sm:$0xf]
    %v6210 = vld [vmem:[#allocation6 + $0x5c] sm:$0xf]
    %v6211 = vld [vmem:[#allocation6 + $0x60] sm:$0xf]
    %v6212 = vld [vmem:[#allocation6 + $0x64] sm:$0xf]
    %v6213 = vld [vmem:[#allocation6 + $0x68] sm:$0xf]
    %v6214 = vld [vmem:[#allocation6 + $0x6c] sm:$0xf]
    %v6215 = vld [vmem:[#allocation6 + $0x70] sm:$0xf]
    %v6216 = vld [vmem:[#allocation6 + $0x74] sm:$0xf]
    %v6217 = vld [vmem:[#allocation6 + $0x78] sm:$0xf]
    %v6218 = vld [vmem:[#allocation6 + $0x7c] sm:$0xf]
    %v6219 = vld [vmem:[#allocation6 + $0x80] sm:$0xf]
    %v6220 = vld [vmem:[#allocation6 + $0x84] sm:$0xf]
    %v6221 = vld [vmem:[#allocation6 + $0x88] sm:$0xf]
    %v6222 = vld [vmem:[#allocation6 + $0x8c] sm:$0xf]
    %v6223 = vld [vmem:[#allocation6 + $0x90] sm:$0xf]
    %v6224 = vld [vmem:[#allocation6 + $0x94] sm:$0xf]
    %v6225 = vld [vmem:[#allocation6 + $0x98] sm:$0xf]
    %v6226 = vld [vmem:[#allocation6 + $0x9c] sm:$0xf]
    %v6227 = vld [vmem:[#allocation6 + $0xa0] sm:$0xf]
    %v6228 = vld [vmem:[#allocation6 + $0xa4] sm:$0xf]
    %v6229 = vld [vmem:[#allocation6 + $0xa8] sm:$0xf]
    %v6230 = vld [vmem:[#allocation6 + $0xac] sm:$0xf]
    %v6231 = vld [vmem:[#allocation6 + $0xb0] sm:$0xf]
    %v6232 = vld [vmem:[#allocation6 + $0xb4] sm:$0xf]
    %v6233 = vld [vmem:[#allocation6 + $0xb8] sm:$0xf]
    %v6234 = vld [vmem:[#allocation6 + $0xbc] sm:$0xf]
    %v6235 = vld [vmem:[#allocation6 + $0xc0] sm:$0xf]
    %v6236 = vld [vmem:[#allocation6 + $0xc4] sm:$0xf]
    %v6237 = vld [vmem:[#allocation6 + $0xc8] sm:$0xf]
    %v6238 = vld [vmem:[#allocation6 + $0xcc] sm:$0xf]
    %v6239 = vld [vmem:[#allocation6 + $0xd0] sm:$0xf]
    %v6240 = vld [vmem:[#allocation6 + $0xd4] sm:$0xf]
    %v6241 = vld [vmem:[#allocation6 + $0xd8] sm:$0xf]
    %v6242 = vld [vmem:[#allocation6 + $0xdc] sm:$0xf]
    %v6243 = vld [vmem:[#allocation6 + $0xe0] sm:$0xf]
    %v6244 = vld [vmem:[#allocation6 + $0xe4] sm:$0xf]
    %v6245 = vld [vmem:[#allocation6 + $0xe8] sm:$0xf]
    %v6246 = vld [vmem:[#allocation6 + $0xec] sm:$0xf]
    %v6247 = vld [vmem:[#allocation6 + $0xf0] sm:$0xf]
    %v6248 = vld [vmem:[#allocation6 + $0xf4] sm:$0xf]
    %v6249 = vld [vmem:[#allocation6 + $0xf8] sm:$0xf]
    %v6250 = vld [vmem:[#allocation6 + $0xfc] sm:$0xf]
    %v6315 = vunpack.c.l.b16 %v6187
    %v6316 = vunpack.c.l.b16 %v6188
    %v6317 = vunpack.c.l.b16 %v6189
    %v6318 = vunpack.c.l.b16 %v6190
    %v6319 = vunpack.c.l.b16 %v6191
    %v6320 = vunpack.c.l.b16 %v6192
    %v6321 = vunpack.c.l.b16 %v6193
    %v6322 = vunpack.c.l.b16 %v6194
    %v6323 = vunpack.c.l.b16 %v6195
    %v6324 = vunpack.c.l.b16 %v6196
    %v6325 = vunpack.c.l.b16 %v6197
    %v6326 = vunpack.c.l.b16 %v6198
    %v6327 = vunpack.c.l.b16 %v6199
    %v6328 = vunpack.c.l.b16 %v6200
    %v6329 = vunpack.c.l.b16 %v6201
    %v6330 = vunpack.c.l.b16 %v6202
    %v6331 = vunpack.c.l.b16 %v6203
    %v6332 = vunpack.c.l.b16 %v6204
    %v6333 = vunpack.c.l.b16 %v6205
    %v6334 = vunpack.c.l.b16 %v6206
    %v6335 = vunpack.c.l.b16 %v6207
    %v6336 = vunpack.c.l.b16 %v6208
    %v6337 = vunpack.c.l.b16 %v6209
    %v6338 = vunpack.c.l.b16 %v6210
    %v6339 = vunpack.c.l.b16 %v6211
    %v6340 = vunpack.c.l.b16 %v6212
    %v6341 = vunpack.c.l.b16 %v6213
    %v6342 = vunpack.c.l.b16 %v6214
    %v6343 = vunpack.c.l.b16 %v6215
    %v6344 = vunpack.c.l.b16 %v6216
    %v6345 = vunpack.c.l.b16 %v6217
    %v6346 = vunpack.c.l.b16 %v6218
    %v6347 = vunpack.c.l.b16 %v6219
    %v6348 = vunpack.c.l.b16 %v6220
    %v6349 = vunpack.c.l.b16 %v6221
    %v6350 = vunpack.c.l.b16 %v6222
    %v6351 = vunpack.c.l.b16 %v6223
    %v6352 = vunpack.c.l.b16 %v6224
    %v6353 = vunpack.c.l.b16 %v6225
    %v6354 = vunpack.c.l.b16 %v6226
    %v6355 = vunpack.c.l.b16 %v6227
    %v6356 = vunpack.c.l.b16 %v6228
    %v6357 = vunpack.c.l.b16 %v6229
    %v6358 = vunpack.c.l.b16 %v6230
    %v6359 = vunpack.c.l.b16 %v6231
    %v6360 = vunpack.c.l.b16 %v6232
    %v6361 = vunpack.c.l.b16 %v6233
    %v6362 = vunpack.c.l.b16 %v6234
    %v6363 = vunpack.c.l.b16 %v6235
    %v6364 = vunpack.c.l.b16 %v6236
    %v6365 = vunpack.c.l.b16 %v6237
    %v6366 = vunpack.c.l.b16 %v6238
    %v6367 = vunpack.c.l.b16 %v6239
    %v6368 = vunpack.c.l.b16 %v6240
    %v6369 = vunpack.c.l.b16 %v6241
    %v6370 = vunpack.c.l.b16 %v6242
    %v6371 = vunpack.c.l.b16 %v6243
    %v6372 = vunpack.c.l.b16 %v6244
    %v6373 = vunpack.c.l.b16 %v6245
    %v6374 = vunpack.c.l.b16 %v6246
    %v6375 = vunpack.c.l.b16 %v6247
    %v6376 = vunpack.c.l.b16 %v6248
    %v6377 = vunpack.c.l.b16 %v6249
    %v6378 = vunpack.c.l.b16 %v6250
    %v6379 = vpack.c.b16 %v6316, %v6315
    %v6380 = vpack.c.b16 %v6318, %v6317
    %v6381 = vpack.c.b16 %v6320, %v6319
    %v6382 = vpack.c.b16 %v6322, %v6321
    %v6383 = vpack.c.b16 %v6324, %v6323
    %v6384 = vpack.c.b16 %v6326, %v6325
    %v6385 = vpack.c.b16 %v6328, %v6327
    %v6386 = vpack.c.b16 %v6330, %v6329
    %v6387 = vpack.c.b16 %v6332, %v6331
    %v6388 = vpack.c.b16 %v6334, %v6333
    %v6389 = vpack.c.b16 %v6336, %v6335
    %v6390 = vpack.c.b16 %v6338, %v6337
    %v6391 = vpack.c.b16 %v6340, %v6339
    %v6392 = vpack.c.b16 %v6342, %v6341
    %v6393 = vpack.c.b16 %v6344, %v6343
    %v6394 = vpack.c.b16 %v6346, %v6345
    %v6395 = vpack.c.b16 %v6348, %v6347
    %v6396 = vpack.c.b16 %v6350, %v6349
    %v6397 = vpack.c.b16 %v6352, %v6351
    %v6398 = vpack.c.b16 %v6354, %v6353
    %v6399 = vpack.c.b16 %v6356, %v6355
    %v6400 = vpack.c.b16 %v6358, %v6357
    %v6401 = vpack.c.b16 %v6360, %v6359
    %v6402 = vpack.c.b16 %v6362, %v6361
    %v6403 = vpack.c.b16 %v6364, %v6363
    %v6404 = vpack.c.b16 %v6366, %v6365
    %v6405 = vpack.c.b16 %v6368, %v6367
    %v6406 = vpack.c.b16 %v6370, %v6369
    %v6407 = vpack.c.b16 %v6372, %v6371
    %v6408 = vpack.c.b16 %v6374, %v6373
    %v6409 = vpack.c.b16 %v6376, %v6375
    %v6410 = vpack.c.b16 %v6378, %v6377
    %6443 = vmatprep.subr.bf16.mxu0 0
    %6444 = vmatpush1.bf16.msra.mxu0 %v6386
    %6445 = vmatprep.subr.bf16.mxu0 0
    %6446 = vmatpush1.bf16.msra.mxu0 %v6385
    %6447 = vmatprep.subr.bf16.mxu0 0
    %6448 = vmatpush1.bf16.msra.mxu0 %v6384
    %6449 = vmatprep.subr.bf16.mxu0 0
    %6450 = vmatpush1.bf16.msra.mxu0 %v6383
    %6451 = vmatprep.subr.bf16.mxu0 0
    %6452 = vmatpush1.bf16.msra.mxu0 %v6382
    %6453 = vmatprep.subr.bf16.mxu0 0
    %6454 = vmatpush1.bf16.msra.mxu0 %v6381
    %6455 = vmatprep.subr.bf16.mxu0 0
    %6456 = vmatpush1.bf16.msra.mxu0 %v6380
    %6457 = vmatprep.subr.bf16.mxu0 0
    %6458 = vmatpush1.bf16.msra.mxu0 %v6379
    %6459 = vmatprep.subr.bf16.mxu0 0
    %6460 = vmatpush2.bf16.msra.mxu0 %v6394
    %6461 = vmatprep.subr.bf16.mxu0 0
    %6462 = vmatpush2.bf16.msra.mxu0 %v6393
    %6463 = vmatprep.subr.bf16.mxu0 0
    %6464 = vmatpush2.bf16.msra.mxu0 %v6392
    %6465 = vmatprep.subr.bf16.mxu0 0
    %6466 = vmatpush2.bf16.msra.mxu0 %v6391
    %6467 = vmatprep.subr.bf16.mxu0 0
    %6468 = vmatpush2.bf16.msra.mxu0 %v6390
    %6469 = vmatprep.subr.bf16.mxu0 0
    %6470 = vmatpush2.bf16.msra.mxu0 %v6389
    %6471 = vmatprep.subr.bf16.mxu0 0
    %6472 = vmatpush2.bf16.msra.mxu0 %v6388
    %6473 = vmatprep.subr.bf16.mxu0 0
    %6474 = vmatpush2.bf16.msra.mxu0 %v6387
    %6475 = vmatprep.mubr.bf16.mxu0 %v6183
    %6476 = vmatmul.mubr.bf16.gmra.mxu0 %v6182
    %v6477 = vpop.f32.mrf.mxu0
    %v6478 = vadd.f32 0.0, %v6477
    %v6479 = vpop.f32.mrf.mxu0
    %v6480 = vpop.f32.mrf.mxu0
    %v6481 = vpop.f32.mrf.mxu0
    %6482 = vdwg.mxu0
    %6483 = vmatprep.subr.bf16.mxu0 0
    %6484 = vmatpush1.bf16.msra.mxu0 %v6402
    %6485 = vmatprep.subr.bf16.mxu0 0
    %6486 = vmatpush1.bf16.msra.mxu0 %v6401
    %6487 = vmatprep.subr.bf16.mxu0 0
    %6488 = vmatpush1.bf16.msra.mxu0 %v6400
    %6489 = vmatprep.subr.bf16.mxu0 0
    %6490 = vmatpush1.bf16.msra.mxu0 %v6399
    %6491 = vmatprep.subr.bf16.mxu0 0
    %6492 = vmatpush1.bf16.msra.mxu0 %v6398
    %6493 = vmatprep.subr.bf16.mxu0 0
    %6494 = vmatpush1.bf16.msra.mxu0 %v6397
    %6495 = vmatprep.subr.bf16.mxu0 0
    %6496 = vmatpush1.bf16.msra.mxu0 %v6396
    %6497 = vmatprep.subr.bf16.mxu0 0
    %6498 = vmatpush1.bf16.msra.mxu0 %v6395
    %6499 = vmatprep.subr.bf16.mxu0 0
    %6500 = vmatpush2.bf16.msra.mxu0 %v6410
    %6501 = vmatprep.subr.bf16.mxu0 0
    %6502 = vmatpush2.bf16.msra.mxu0 %v6409
    %6503 = vmatprep.subr.bf16.mxu0 0
    %6504 = vmatpush2.bf16.msra.mxu0 %v6408
    %6505 = vmatprep.subr.bf16.mxu0 0
    %6506 = vmatpush2.bf16.msra.mxu0 %v6407
    %6507 = vmatprep.subr.bf16.mxu0 0
    %6508 = vmatpush2.bf16.msra.mxu0 %v6406
    %6509 = vmatprep.subr.bf16.mxu0 0
    %6510 = vmatpush2.bf16.msra.mxu0 %v6405
    %6511 = vmatprep.subr.bf16.mxu0 0
    %6512 = vmatpush2.bf16.msra.mxu0 %v6404
    %6513 = vmatprep.subr.bf16.mxu0 0
    %6514 = vmatpush2.bf16.msra.mxu0 %v6403
    %6515 = vmatprep.mubr.bf16.mxu0 %v6185
    %6516 = vmatmul.mubr.bf16.gmra.mxu0 %v6184
    %v6517 = vpop.f32.mrf.mxu0
    %v6518 = vadd.f32 %v6478, %v6517
    %v6519 = vpop.f32.mrf.mxu0
    %v6520 = vpop.f32.mrf.mxu0
    %v6521 = vpop.f32.mrf.mxu0
    %6522 = vdwg.mxu0
    %s6523 = scalar_lea.vmem [#allocation6], 256
    %v6524 = vld [vmem:[%s6523] sm:$0xf]
    %v6525 = vld [vmem:[%s6523 + $0x4] sm:$0xf]
    %v6526 = vld [vmem:[%s6523 + $0x8] sm:$0xf]
    %v6527 = vld [vmem:[%s6523 + $0xc] sm:$0xf]
    %v6528 = vld [vmem:[%s6523 + $0x10] sm:$0xf]
    %v6529 = vld [vmem:[%s6523 + $0x14] sm:$0xf]
    %v6530 = vld [vmem:[%s6523 + $0x18] sm:$0xf]
    %v6531 = vld [vmem:[%s6523 + $0x1c] sm:$0xf]
    %v6532 = vld [vmem:[%s6523 + $0x20] sm:$0xf]
    %v6533 = vld [vmem:[%s6523 + $0x24] sm:$0xf]
    %v6534 = vld [vmem:[%s6523 + $0x28] sm:$0xf]
    %v6535 = vld [vmem:[%s6523 + $0x2c] sm:$0xf]
    %v6536 = vld [vmem:[%s6523 + $0x30] sm:$0xf]
    %v6537 = vld [vmem:[%s6523 + $0x34] sm:$0xf]
    %v6538 = vld [vmem:[%s6523 + $0x38] sm:$0xf]
    %v6539 = vld [vmem:[%s6523 + $0x3c] sm:$0xf]
    %v6540 = vld [vmem:[%s6523 + $0x40] sm:$0xf]
    %v6541 = vld [vmem:[%s6523 + $0x44] sm:$0xf]
    %v6542 = vld [vmem:[%s6523 + $0x48] sm:$0xf]
    %v6543 = vld [vmem:[%s6523 + $0x4c] sm:$0xf]
    %v6544 = vld [vmem:[%s6523 + $0x50] sm:$0xf]
    %v6545 = vld [vmem:[%s6523 + $0x54] sm:$0xf]
    %v6546 = vld [vmem:[%s6523 + $0x58] sm:$0xf]
    %v6547 = vld [vmem:[%s6523 + $0x5c] sm:$0xf]
    %v6548 = vld [vmem:[%s6523 + $0x60] sm:$0xf]
    %v6549 = vld [vmem:[%s6523 + $0x64] sm:$0xf]
    %v6550 = vld [vmem:[%s6523 + $0x68] sm:$0xf]
    %v6551 = vld [vmem:[%s6523 + $0x6c] sm:$0xf]
    %v6552 = vld [vmem:[%s6523 + $0x70] sm:$0xf]
    %v6553 = vld [vmem:[%s6523 + $0x74] sm:$0xf]
    %v6554 = vld [vmem:[%s6523 + $0x78] sm:$0xf]
    %v6555 = vld [vmem:[%s6523 + $0x7c] sm:$0xf]
    %v6556 = vld [vmem:[%s6523 + $0x80] sm:$0xf]
    %v6557 = vld [vmem:[%s6523 + $0x84] sm:$0xf]
    %v6558 = vld [vmem:[%s6523 + $0x88] sm:$0xf]
    %v6559 = vld [vmem:[%s6523 + $0x8c] sm:$0xf]
    %v6560 = vld [vmem:[%s6523 + $0x90] sm:$0xf]
    %v6561 = vld [vmem:[%s6523 + $0x94] sm:$0xf]
    %v6562 = vld [vmem:[%s6523 + $0x98] sm:$0xf]
    %v6563 = vld [vmem:[%s6523 + $0x9c] sm:$0xf]
    %v6564 = vld [vmem:[%s6523 + $0xa0] sm:$0xf]
    %v6565 = vld [vmem:[%s6523 + $0xa4] sm:$0xf]
    %v6566 = vld [vmem:[%s6523 + $0xa8] sm:$0xf]
    %v6567 = vld [vmem:[%s6523 + $0xac] sm:$0xf]
    %v6568 = vld [vmem:[%s6523 + $0xb0] sm:$0xf]
    %v6569 = vld [vmem:[%s6523 + $0xb4] sm:$0xf]
    %v6570 = vld [vmem:[%s6523 + $0xb8] sm:$0xf]
    %v6571 = vld [vmem:[%s6523 + $0xbc] sm:$0xf]
    %v6572 = vld [vmem:[%s6523 + $0xc0] sm:$0xf]
    %v6573 = vld [vmem:[%s6523 + $0xc4] sm:$0xf]
    %v6574 = vld [vmem:[%s6523 + $0xc8] sm:$0xf]
    %v6575 = vld [vmem:[%s6523 + $0xcc] sm:$0xf]
    %v6576 = vld [vmem:[%s6523 + $0xd0] sm:$0xf]
    %v6577 = vld [vmem:[%s6523 + $0xd4] sm:$0xf]
    %v6578 = vld [vmem:[%s6523 + $0xd8] sm:$0xf]
    %v6579 = vld [vmem:[%s6523 + $0xdc] sm:$0xf]
    %v6580 = vld [vmem:[%s6523 + $0xe0] sm:$0xf]
    %v6581 = vld [vmem:[%s6523 + $0xe4] sm:$0xf]
    %v6582 = vld [vmem:[%s6523 + $0xe8] sm:$0xf]
    %v6583 = vld [vmem:[%s6523 + $0xec] sm:$0xf]
    %v6584 = vld [vmem:[%s6523 + $0xf0] sm:$0xf]
    %v6585 = vld [vmem:[%s6523 + $0xf4] sm:$0xf]
    %v6586 = vld [vmem:[%s6523 + $0xf8] sm:$0xf]
    %v6587 = vld [vmem:[%s6523 + $0xfc] sm:$0xf]
    %v6652 = vunpack.c.l.b16 %v6524
    %v6653 = vunpack.c.l.b16 %v6525
    %v6654 = vunpack.c.l.b16 %v6526
    %v6655 = vunpack.c.l.b16 %v6527
    %v6656 = vunpack.c.l.b16 %v6528
    %v6657 = vunpack.c.l.b16 %v6529
    %v6658 = vunpack.c.l.b16 %v6530
    %v6659 = vunpack.c.l.b16 %v6531
    %v6660 = vunpack.c.l.b16 %v6532
    %v6661 = vunpack.c.l.b16 %v6533
    %v6662 = vunpack.c.l.b16 %v6534
    %v6663 = vunpack.c.l.b16 %v6535
    %v6664 = vunpack.c.l.b16 %v6536
    %v6665 = vunpack.c.l.b16 %v6537
    %v6666 = vunpack.c.l.b16 %v6538
    %v6667 = vunpack.c.l.b16 %v6539
    %v6668 = vunpack.c.l.b16 %v6540
    %v6669 = vunpack.c.l.b16 %v6541
    %v6670 = vunpack.c.l.b16 %v6542
    %v6671 = vunpack.c.l.b16 %v6543
    %v6672 = vunpack.c.l.b16 %v6544
    %v6673 = vunpack.c.l.b16 %v6545
    %v6674 = vunpack.c.l.b16 %v6546
    %v6675 = vunpack.c.l.b16 %v6547
    %v6676 = vunpack.c.l.b16 %v6548
    %v6677 = vunpack.c.l.b16 %v6549
    %v6678 = vunpack.c.l.b16 %v6550
    %v6679 = vunpack.c.l.b16 %v6551
    %v6680 = vunpack.c.l.b16 %v6552
    %v6681 = vunpack.c.l.b16 %v6553
    %v6682 = vunpack.c.l.b16 %v6554
    %v6683 = vunpack.c.l.b16 %v6555
    %v6684 = vunpack.c.l.b16 %v6556
    %v6685 = vunpack.c.l.b16 %v6557
    %v6686 = vunpack.c.l.b16 %v6558
    %v6687 = vunpack.c.l.b16 %v6559
    %v6688 = vunpack.c.l.b16 %v6560
    %v6689 = vunpack.c.l.b16 %v6561
    %v6690 = vunpack.c.l.b16 %v6562
    %v6691 = vunpack.c.l.b16 %v6563
    %v6692 = vunpack.c.l.b16 %v6564
    %v6693 = vunpack.c.l.b16 %v6565
    %v6694 = vunpack.c.l.b16 %v6566
    %v6695 = vunpack.c.l.b16 %v6567
    %v6696 = vunpack.c.l.b16 %v6568
    %v6697 = vunpack.c.l.b16 %v6569
    %v6698 = vunpack.c.l.b16 %v6570
    %v6699 = vunpack.c.l.b16 %v6571
    %v6700 = vunpack.c.l.b16 %v6572
    %v6701 = vunpack.c.l.b16 %v6573
    %v6702 = vunpack.c.l.b16 %v6574
    %v6703 = vunpack.c.l.b16 %v6575
    %v6704 = vunpack.c.l.b16 %v6576
    %v6705 = vunpack.c.l.b16 %v6577
    %v6706 = vunpack.c.l.b16 %v6578
    %v6707 = vunpack.c.l.b16 %v6579
    %v6708 = vunpack.c.l.b16 %v6580
    %v6709 = vunpack.c.l.b16 %v6581
    %v6710 = vunpack.c.l.b16 %v6582
    %v6711 = vunpack.c.l.b16 %v6583
    %v6712 = vunpack.c.l.b16 %v6584
    %v6713 = vunpack.c.l.b16 %v6585
    %v6714 = vunpack.c.l.b16 %v6586
    %v6715 = vunpack.c.l.b16 %v6587
    %v6716 = vpack.c.b16 %v6653, %v6652
    %v6717 = vpack.c.b16 %v6655, %v6654
    %v6718 = vpack.c.b16 %v6657, %v6656
    %v6719 = vpack.c.b16 %v6659, %v6658
    %v6720 = vpack.c.b16 %v6661, %v6660
    %v6721 = vpack.c.b16 %v6663, %v6662
    %v6722 = vpack.c.b16 %v6665, %v6664
    %v6723 = vpack.c.b16 %v6667, %v6666
    %v6724 = vpack.c.b16 %v6669, %v6668
    %v6725 = vpack.c.b16 %v6671, %v6670
    %v6726 = vpack.c.b16 %v6673, %v6672
    %v6727 = vpack.c.b16 %v6675, %v6674
    %v6728 = vpack.c.b16 %v6677, %v6676
    %v6729 = vpack.c.b16 %v6679, %v6678
    %v6730 = vpack.c.b16 %v6681, %v6680
    %v6731 = vpack.c.b16 %v6683, %v6682
    %v6732 = vpack.c.b16 %v6685, %v6684
    %v6733 = vpack.c.b16 %v6687, %v6686
    %v6734 = vpack.c.b16 %v6689, %v6688
    %v6735 = vpack.c.b16 %v6691, %v6690
    %v6736 = vpack.c.b16 %v6693, %v6692
    %v6737 = vpack.c.b16 %v6695, %v6694
    %v6738 = vpack.c.b16 %v6697, %v6696
    %v6739 = vpack.c.b16 %v6699, %v6698
    %v6740 = vpack.c.b16 %v6701, %v6700
    %v6741 = vpack.c.b16 %v6703, %v6702
    %v6742 = vpack.c.b16 %v6705, %v6704
    %v6743 = vpack.c.b16 %v6707, %v6706
    %v6744 = vpack.c.b16 %v6709, %v6708
    %v6745 = vpack.c.b16 %v6711, %v6710
    %v6746 = vpack.c.b16 %v6713, %v6712
    %v6747 = vpack.c.b16 %v6715, %v6714
    %6780 = vmatprep.subr.bf16.mxu0 0
    %6781 = vmatpush1.bf16.msra.mxu0 %v6723
    %6782 = vmatprep.subr.bf16.mxu0 0
    %6783 = vmatpush1.bf16.msra.mxu0 %v6722
    %6784 = vmatprep.subr.bf16.mxu0 0
    %6785 = vmatpush1.bf16.msra.mxu0 %v6721
    %6786 = vmatprep.subr.bf16.mxu0 0
    %6787 = vmatpush1.bf16.msra.mxu0 %v6720
    %6788 = vmatprep.subr.bf16.mxu0 0
    %6789 = vmatpush1.bf16.msra.mxu0 %v6719
    %6790 = vmatprep.subr.bf16.mxu0 0
    %6791 = vmatpush1.bf16.msra.mxu0 %v6718
    %6792 = vmatprep.subr.bf16.mxu0 0
    %6793 = vmatpush1.bf16.msra.mxu0 %v6717
    %6794 = vmatprep.subr.bf16.mxu0 0
    %6795 = vmatpush1.bf16.msra.mxu0 %v6716
    %6796 = vmatprep.subr.bf16.mxu0 0
    %6797 = vmatpush2.bf16.msra.mxu0 %v6731
    %6798 = vmatprep.subr.bf16.mxu0 0
    %6799 = vmatpush2.bf16.msra.mxu0 %v6730
    %6800 = vmatprep.subr.bf16.mxu0 0
    %6801 = vmatpush2.bf16.msra.mxu0 %v6729
    %6802 = vmatprep.subr.bf16.mxu0 0
    %6803 = vmatpush2.bf16.msra.mxu0 %v6728
    %6804 = vmatprep.subr.bf16.mxu0 0
    %6805 = vmatpush2.bf16.msra.mxu0 %v6727
    %6806 = vmatprep.subr.bf16.mxu0 0
    %6807 = vmatpush2.bf16.msra.mxu0 %v6726
    %6808 = vmatprep.subr.bf16.mxu0 0
    %6809 = vmatpush2.bf16.msra.mxu0 %v6725
    %6810 = vmatprep.subr.bf16.mxu0 0
    %6811 = vmatpush2.bf16.msra.mxu0 %v6724
    %6812 = vmatprep.mubr.bf16.mxu0 %v6183
    %6813 = vmatmul.mubr.bf16.gmra.mxu0 %v6182
    %v6814 = vpop.f32.mrf.mxu0
    %v6815 = vadd.f32 0.0, %v6814
    %v6816 = vpop.f32.mrf.mxu0
    %v6817 = vpop.f32.mrf.mxu0
    %v6818 = vpop.f32.mrf.mxu0
    %6819 = vdwg.mxu0
    %6820 = vmatprep.subr.bf16.mxu0 0
    %6821 = vmatpush1.bf16.msra.mxu0 %v6739
    %6822 = vmatprep.subr.bf16.mxu0 0
    %6823 = vmatpush1.bf16.msra.mxu0 %v6738
    %6824 = vmatprep.subr.bf16.mxu0 0
    %6825 = vmatpush1.bf16.msra.mxu0 %v6737
    %6826 = vmatprep.subr.bf16.mxu0 0
    %6827 = vmatpush1.bf16.msra.mxu0 %v6736
    %6828 = vmatprep.subr.bf16.mxu0 0
    %6829 = vmatpush1.bf16.msra.mxu0 %v6735
    %6830 = vmatprep.subr.bf16.mxu0 0
    %6831 = vmatpush1.bf16.msra.mxu0 %v6734
    %6832 = vmatprep.subr.bf16.mxu0 0
    %6833 = vmatpush1.bf16.msra.mxu0 %v6733
    %6834 = vmatprep.subr.bf16.mxu0 0
    %6835 = vmatpush1.bf16.msra.mxu0 %v6732
    %6836 = vmatprep.subr.bf16.mxu0 0
    %6837 = vmatpush2.bf16.msra.mxu0 %v6747
    %6838 = vmatprep.subr.bf16.mxu0 0
    %6839 = vmatpush2.bf16.msra.mxu0 %v6746
    %6840 = vmatprep.subr.bf16.mxu0 0
    %6841 = vmatpush2.bf16.msra.mxu0 %v6745
    %6842 = vmatprep.subr.bf16.mxu0 0
    %6843 = vmatpush2.bf16.msra.mxu0 %v6744
    %6844 = vmatprep.subr.bf16.mxu0 0
    %6845 = vmatpush2.bf16.msra.mxu0 %v6743
    %6846 = vmatprep.subr.bf16.mxu0 0
    %6847 = vmatpush2.bf16.msra.mxu0 %v6742
    %6848 = vmatprep.subr.bf16.mxu0 0
    %6849 = vmatpush2.bf16.msra.mxu0 %v6741
    %6850 = vmatprep.subr.bf16.mxu0 0
    %6851 = vmatpush2.bf16.msra.mxu0 %v6740
    %6852 = vmatprep.mubr.bf16.mxu0 %v6185
    %6853 = vmatmul.mubr.bf16.gmra.mxu0 %v6184
    %v6854 = vpop.f32.mrf.mxu0
    %v6855 = vadd.f32 %v6815, %v6854
    %v6856 = vpop.f32.mrf.mxu0
    %v6857 = vpop.f32.mrf.mxu0
    %v6858 = vpop.f32.mrf.mxu0
    %6859 = vdwg.mxu0
    %v6860 = vmax.f32 %v6518, %v6855
    %s6861 = scalar_lea.vmem [#allocation6], 512
    %v6862 = vld [vmem:[%s6861] sm:$0xf]
    %v6863 = vld [vmem:[%s6861 + $0x4] sm:$0xf]
    %v6864 = vld [vmem:[%s6861 + $0x8] sm:$0xf]
    %v6865 = vld [vmem:[%s6861 + $0xc] sm:$0xf]
    %v6866 = vld [vmem:[%s6861 + $0x10] sm:$0xf]
    %v6867 = vld [vmem:[%s6861 + $0x14] sm:$0xf]
    %v6868 = vld [vmem:[%s6861 + $0x18] sm:$0xf]
    %v6869 = vld [vmem:[%s6861 + $0x1c] sm:$0xf]
    %v6870 = vld [vmem:[%s6861 + $0x20] sm:$0xf]
    %v6871 = vld [vmem:[%s6861 + $0x24] sm:$0xf]
    %v6872 = vld [vmem:[%s6861 + $0x28] sm:$0xf]
    %v6873 = vld [vmem:[%s6861 + $0x2c] sm:$0xf]
    %v6874 = vld [vmem:[%s6861 + $0x30] sm:$0xf]
    %v6875 = vld [vmem:[%s6861 + $0x34] sm:$0xf]
    %v6876 = vld [vmem:[%s6861 + $0x38] sm:$0xf]
    %v6877 = vld [vmem:[%s6861 + $0x3c] sm:$0xf]
    %v6878 = vld [vmem:[%s6861 + $0x40] sm:$0xf]
    %v6879 = vld [vmem:[%s6861 + $0x44] sm:$0xf]
    %v6880 = vld [vmem:[%s6861 + $0x48] sm:$0xf]
    %v6881 = vld [vmem:[%s6861 + $0x4c] sm:$0xf]
    %v6882 = vld [vmem:[%s6861 + $0x50] sm:$0xf]
    %v6883 = vld [vmem:[%s6861 + $0x54] sm:$0xf]
    %v6884 = vld [vmem:[%s6861 + $0x58] sm:$0xf]
    %v6885 = vld [vmem:[%s6861 + $0x5c] sm:$0xf]
    %v6886 = vld [vmem:[%s6861 + $0x60] sm:$0xf]
    %v6887 = vld [vmem:[%s6861 + $0x64] sm:$0xf]
    %v6888 = vld [vmem:[%s6861 + $0x68] sm:$0xf]
    %v6889 = vld [vmem:[%s6861 + $0x6c] sm:$0xf]
    %v6890 = vld [vmem:[%s6861 + $0x70] sm:$0xf]
    %v6891 = vld [vmem:[%s6861 + $0x74] sm:$0xf]
    %v6892 = vld [vmem:[%s6861 + $0x78] sm:$0xf]
    %v6893 = vld [vmem:[%s6861 + $0x7c] sm:$0xf]
    %v6894 = vld [vmem:[%s6861 + $0x80] sm:$0xf]
    %v6895 = vld [vmem:[%s6861 + $0x84] sm:$0xf]
    %v6896 = vld [vmem:[%s6861 + $0x88] sm:$0xf]
    %v6897 = vld [vmem:[%s6861 + $0x8c] sm:$0xf]
    %v6898 = vld [vmem:[%s6861 + $0x90] sm:$0xf]
    %v6899 = vld [vmem:[%s6861 + $0x94] sm:$0xf]
    %v6900 = vld [vmem:[%s6861 + $0x98] sm:$0xf]
    %v6901 = vld [vmem:[%s6861 + $0x9c] sm:$0xf]
    %v6902 = vld [vmem:[%s6861 + $0xa0] sm:$0xf]
    %v6903 = vld [vmem:[%s6861 + $0xa4] sm:$0xf]
    %v6904 = vld [vmem:[%s6861 + $0xa8] sm:$0xf]
    %v6905 = vld [vmem:[%s6861 + $0xac] sm:$0xf]
    %v6906 = vld [vmem:[%s6861 + $0xb0] sm:$0xf]
    %v6907 = vld [vmem:[%s6861 + $0xb4] sm:$0xf]
    %v6908 = vld [vmem:[%s6861 + $0xb8] sm:$0xf]
    %v6909 = vld [vmem:[%s6861 + $0xbc] sm:$0xf]
    %v6910 = vld [vmem:[%s6861 + $0xc0] sm:$0xf]
    %v6911 = vld [vmem:[%s6861 + $0xc4] sm:$0xf]
    %v6912 = vld [vmem:[%s6861 + $0xc8] sm:$0xf]
    %v6913 = vld [vmem:[%s6861 + $0xcc] sm:$0xf]
    %v6914 = vld [vmem:[%s6861 + $0xd0] sm:$0xf]
    %v6915 = vld [vmem:[%s6861 + $0xd4] sm:$0xf]
    %v6916 = vld [vmem:[%s6861 + $0xd8] sm:$0xf]
    %v6917 = vld [vmem:[%s6861 + $0xdc] sm:$0xf]
    %v6918 = vld [vmem:[%s6861 + $0xe0] sm:$0xf]
    %v6919 = vld [vmem:[%s6861 + $0xe4] sm:$0xf]
    %v6920 = vld [vmem:[%s6861 + $0xe8] sm:$0xf]
    %v6921 = vld [vmem:[%s6861 + $0xec] sm:$0xf]
    %v6922 = vld [vmem:[%s6861 + $0xf0] sm:$0xf]
    %v6923 = vld [vmem:[%s6861 + $0xf4] sm:$0xf]
    %v6924 = vld [vmem:[%s6861 + $0xf8] sm:$0xf]
    %v6925 = vld [vmem:[%s6861 + $0xfc] sm:$0xf]
    %v6990 = vunpack.c.l.b16 %v6862
    %v6991 = vunpack.c.l.b16 %v6863
    %v6992 = vunpack.c.l.b16 %v6864
    %v6993 = vunpack.c.l.b16 %v6865
    %v6994 = vunpack.c.l.b16 %v6866
    %v6995 = vunpack.c.l.b16 %v6867
    %v6996 = vunpack.c.l.b16 %v6868
    %v6997 = vunpack.c.l.b16 %v6869
    %v6998 = vunpack.c.l.b16 %v6870
    %v6999 = vunpack.c.l.b16 %v6871
    %v7000 = vunpack.c.l.b16 %v6872
    %v7001 = vunpack.c.l.b16 %v6873
    %v7002 = vunpack.c.l.b16 %v6874
    %v7003 = vunpack.c.l.b16 %v6875
    %v7004 = vunpack.c.l.b16 %v6876
    %v7005 = vunpack.c.l.b16 %v6877
    %v7006 = vunpack.c.l.b16 %v6878
    %v7007 = vunpack.c.l.b16 %v6879
    %v7008 = vunpack.c.l.b16 %v6880
    %v7009 = vunpack.c.l.b16 %v6881
    %v7010 = vunpack.c.l.b16 %v6882
    %v7011 = vunpack.c.l.b16 %v6883
    %v7012 = vunpack.c.l.b16 %v6884
    %v7013 = vunpack.c.l.b16 %v6885
    %v7014 = vunpack.c.l.b16 %v6886
    %v7015 = vunpack.c.l.b16 %v6887
    %v7016 = vunpack.c.l.b16 %v6888
    %v7017 = vunpack.c.l.b16 %v6889
    %v7018 = vunpack.c.l.b16 %v6890
    %v7019 = vunpack.c.l.b16 %v6891
    %v7020 = vunpack.c.l.b16 %v6892
    %v7021 = vunpack.c.l.b16 %v6893
    %v7022 = vunpack.c.l.b16 %v6894
    %v7023 = vunpack.c.l.b16 %v6895
    %v7024 = vunpack.c.l.b16 %v6896
    %v7025 = vunpack.c.l.b16 %v6897
    %v7026 = vunpack.c.l.b16 %v6898
    %v7027 = vunpack.c.l.b16 %v6899
    %v7028 = vunpack.c.l.b16 %v6900
    %v7029 = vunpack.c.l.b16 %v6901
    %v7030 = vunpack.c.l.b16 %v6902
    %v7031 = vunpack.c.l.b16 %v6903
    %v7032 = vunpack.c.l.b16 %v6904
    %v7033 = vunpack.c.l.b16 %v6905
    %v7034 = vunpack.c.l.b16 %v6906
    %v7035 = vunpack.c.l.b16 %v6907
    %v7036 = vunpack.c.l.b16 %v6908
    %v7037 = vunpack.c.l.b16 %v6909
    %v7038 = vunpack.c.l.b16 %v6910
    %v7039 = vunpack.c.l.b16 %v6911
    %v7040 = vunpack.c.l.b16 %v6912
    %v7041 = vunpack.c.l.b16 %v6913
    %v7042 = vunpack.c.l.b16 %v6914
    %v7043 = vunpack.c.l.b16 %v6915
    %v7044 = vunpack.c.l.b16 %v6916
    %v7045 = vunpack.c.l.b16 %v6917
    %v7046 = vunpack.c.l.b16 %v6918
    %v7047 = vunpack.c.l.b16 %v6919
    %v7048 = vunpack.c.l.b16 %v6920
    %v7049 = vunpack.c.l.b16 %v6921
    %v7050 = vunpack.c.l.b16 %v6922
    %v7051 = vunpack.c.l.b16 %v6923
    %v7052 = vunpack.c.l.b16 %v6924
    %v7053 = vunpack.c.l.b16 %v6925
    %v7054 = vpack.c.b16 %v6991, %v6990
    %v7055 = vpack.c.b16 %v6993, %v6992
    %v7056 = vpack.c.b16 %v6995, %v6994
    %v7057 = vpack.c.b16 %v6997, %v6996
    %v7058 = vpack.c.b16 %v6999, %v6998
    %v7059 = vpack.c.b16 %v7001, %v7000
    %v7060 = vpack.c.b16 %v7003, %v7002
    %v7061 = vpack.c.b16 %v7005, %v7004
    %v7062 = vpack.c.b16 %v7007, %v7006
    %v7063 = vpack.c.b16 %v7009, %v7008
    %v7064 = vpack.c.b16 %v7011, %v7010
    %v7065 = vpack.c.b16 %v7013, %v7012
    %v7066 = vpack.c.b16 %v7015, %v7014
    %v7067 = vpack.c.b16 %v7017, %v7016
    %v7068 = vpack.c.b16 %v7019, %v7018
    %v7069 = vpack.c.b16 %v7021, %v7020
    %v7070 = vpack.c.b16 %v7023, %v7022
    %v7071 = vpack.c.b16 %v7025, %v7024
    %v7072 = vpack.c.b16 %v7027, %v7026
    %v7073 = vpack.c.b16 %v7029, %v7028
    %v7074 = vpack.c.b16 %v7031, %v7030
    %v7075 = vpack.c.b16 %v7033, %v7032
    %v7076 = vpack.c.b16 %v7035, %v7034
    %v7077 = vpack.c.b16 %v7037, %v7036
    %v7078 = vpack.c.b16 %v7039, %v7038
    %v7079 = vpack.c.b16 %v7041, %v7040
    %v7080 = vpack.c.b16 %v7043, %v7042
    %v7081 = vpack.c.b16 %v7045, %v7044
    %v7082 = vpack.c.b16 %v7047, %v7046
    %v7083 = vpack.c.b16 %v7049, %v7048
    %v7084 = vpack.c.b16 %v7051, %v7050
    %v7085 = vpack.c.b16 %v7053, %v7052
    %7118 = vmatprep.subr.bf16.mxu0 0
    %7119 = vmatpush1.bf16.msra.mxu0 %v7061
    %7120 = vmatprep.subr.bf16.mxu0 0
    %7121 = vmatpush1.bf16.msra.mxu0 %v7060
    %7122 = vmatprep.subr.bf16.mxu0 0
    %7123 = vmatpush1.bf16.msra.mxu0 %v7059
    %7124 = vmatprep.subr.bf16.mxu0 0
    %7125 = vmatpush1.bf16.msra.mxu0 %v7058
    %7126 = vmatprep.subr.bf16.mxu0 0
    %7127 = vmatpush1.bf16.msra.mxu0 %v7057
    %7128 = vmatprep.subr.bf16.mxu0 0
    %7129 = vmatpush1.bf16.msra.mxu0 %v7056
    %7130 = vmatprep.subr.bf16.mxu0 0
    %7131 = vmatpush1.bf16.msra.mxu0 %v7055
    %7132 = vmatprep.subr.bf16.mxu0 0
    %7133 = vmatpush1.bf16.msra.mxu0 %v7054
    %7134 = vmatprep.subr.bf16.mxu0 0
    %7135 = vmatpush2.bf16.msra.mxu0 %v7069
    %7136 = vmatprep.subr.bf16.mxu0 0
    %7137 = vmatpush2.bf16.msra.mxu0 %v7068
    %7138 = vmatprep.subr.bf16.mxu0 0
    %7139 = vmatpush2.bf16.msra.mxu0 %v7067
    %7140 = vmatprep.subr.bf16.mxu0 0
    %7141 = vmatpush2.bf16.msra.mxu0 %v7066
    %7142 = vmatprep.subr.bf16.mxu0 0
    %7143 = vmatpush2.bf16.msra.mxu0 %v7065
    %7144 = vmatprep.subr.bf16.mxu0 0
    %7145 = vmatpush2.bf16.msra.mxu0 %v7064
    %7146 = vmatprep.subr.bf16.mxu0 0
    %7147 = vmatpush2.bf16.msra.mxu0 %v7063
    %7148 = vmatprep.subr.bf16.mxu0 0
    %7149 = vmatpush2.bf16.msra.mxu0 %v7062
    %7150 = vmatprep.mubr.bf16.mxu0 %v6183
    %7151 = vmatmul.mubr.bf16.gmra.mxu0 %v6182
    %v7152 = vpop.f32.mrf.mxu0
    %v7153 = vadd.f32 0.0, %v7152
    %v7154 = vpop.f32.mrf.mxu0
    %v7155 = vpop.f32.mrf.mxu0
    %v7156 = vpop.f32.mrf.mxu0
    %7157 = vdwg.mxu0
    %7158 = vmatprep.subr.bf16.mxu0 0
    %7159 = vmatpush1.bf16.msra.mxu0 %v7077
    %7160 = vmatprep.subr.bf16.mxu0 0
    %7161 = vmatpush1.bf16.msra.mxu0 %v7076
    %7162 = vmatprep.subr.bf16.mxu0 0
    %7163 = vmatpush1.bf16.msra.mxu0 %v7075
    %7164 = vmatprep.subr.bf16.mxu0 0
    %7165 = vmatpush1.bf16.msra.mxu0 %v7074
    %7166 = vmatprep.subr.bf16.mxu0 0
    %7167 = vmatpush1.bf16.msra.mxu0 %v7073
    %7168 = vmatprep.subr.bf16.mxu0 0
    %7169 = vmatpush1.bf16.msra.mxu0 %v7072
    %7170 = vmatprep.subr.bf16.mxu0 0
    %7171 = vmatpush1.bf16.msra.mxu0 %v7071
    %7172 = vmatprep.subr.bf16.mxu0 0
    %7173 = vmatpush1.bf16.msra.mxu0 %v7070
    %7174 = vmatprep.subr.bf16.mxu0 0
    %7175 = vmatpush2.bf16.msra.mxu0 %v7085
    %7176 = vmatprep.subr.bf16.mxu0 0
    %7177 = vmatpush2.bf16.msra.mxu0 %v7084
    %7178 = vmatprep.subr.bf16.mxu0 0
    %7179 = vmatpush2.bf16.msra.mxu0 %v7083
    %7180 = vmatprep.subr.bf16.mxu0 0
    %7181 = vmatpush2.bf16.msra.mxu0 %v7082
    %7182 = vmatprep.subr.bf16.mxu0 0
    %7183 = vmatpush2.bf16.msra.mxu0 %v7081
    %7184 = vmatprep.subr.bf16.mxu0 0
    %7185 = vmatpush2.bf16.msra.mxu0 %v7080
    %7186 = vmatprep.subr.bf16.mxu0 0
    %7187 = vmatpush2.bf16.msra.mxu0 %v7079
    %7188 = vmatprep.subr.bf16.mxu0 0
    %7189 = vmatpush2.bf16.msra.mxu0 %v7078
    %7190 = vmatprep.mubr.bf16.mxu0 %v6185
    %7191 = vmatmul.mubr.bf16.gmra.mxu0 %v6184
    %v7192 = vpop.f32.mrf.mxu0
    %v7193 = vadd.f32 %v7153, %v7192
    %v7194 = vpop.f32.mrf.mxu0
    %v7195 = vpop.f32.mrf.mxu0
    %v7196 = vpop.f32.mrf.mxu0
    %7197 = vdwg.mxu0
    %v7198 = vmax.f32 %v6860, %v7193
    %s7199 = scalar_lea.vmem [#allocation6], 768
    %v7200 = vld [vmem:[%s7199] sm:$0xf]
    %v7201 = vld [vmem:[%s7199 + $0x4] sm:$0xf]
    %v7202 = vld [vmem:[%s7199 + $0x8] sm:$0xf]
    %v7203 = vld [vmem:[%s7199 + $0xc] sm:$0xf]
    %v7204 = vld [vmem:[%s7199 + $0x10] sm:$0xf]
    %v7205 = vld [vmem:[%s7199 + $0x14] sm:$0xf]
    %v7206 = vld [vmem:[%s7199 + $0x18] sm:$0xf]
    %v7207 = vld [vmem:[%s7199 + $0x1c] sm:$0xf]
    %v7208 = vld [vmem:[%s7199 + $0x20] sm:$0xf]
    %v7209 = vld [vmem:[%s7199 + $0x24] sm:$0xf]
    %v7210 = vld [vmem:[%s7199 + $0x28] sm:$0xf]
    %v7211 = vld [vmem:[%s7199 + $0x2c] sm:$0xf]
    %v7212 = vld [vmem:[%s7199 + $0x30] sm:$0xf]
    %v7213 = vld [vmem:[%s7199 + $0x34] sm:$0xf]
    %v7214 = vld [vmem:[%s7199 + $0x38] sm:$0xf]
    %v7215 = vld [vmem:[%s7199 + $0x3c] sm:$0xf]
    %v7216 = vld [vmem:[%s7199 + $0x40] sm:$0xf]
    %v7217 = vld [vmem:[%s7199 + $0x44] sm:$0xf]
    %v7218 = vld [vmem:[%s7199 + $0x48] sm:$0xf]
    %v7219 = vld [vmem:[%s7199 + $0x4c] sm:$0xf]
    %v7220 = vld [vmem:[%s7199 + $0x50] sm:$0xf]
    %v7221 = vld [vmem:[%s7199 + $0x54] sm:$0xf]
    %v7222 = vld [vmem:[%s7199 + $0x58] sm:$0xf]
    %v7223 = vld [vmem:[%s7199 + $0x5c] sm:$0xf]
    %v7224 = vld [vmem:[%s7199 + $0x60] sm:$0xf]
    %v7225 = vld [vmem:[%s7199 + $0x64] sm:$0xf]
    %v7226 = vld [vmem:[%s7199 + $0x68] sm:$0xf]
    %v7227 = vld [vmem:[%s7199 + $0x6c] sm:$0xf]
    %v7228 = vld [vmem:[%s7199 + $0x70] sm:$0xf]
    %v7229 = vld [vmem:[%s7199 + $0x74] sm:$0xf]
    %v7230 = vld [vmem:[%s7199 + $0x78] sm:$0xf]
    %v7231 = vld [vmem:[%s7199 + $0x7c] sm:$0xf]
    %v7232 = vld [vmem:[%s7199 + $0x80] sm:$0xf]
    %v7233 = vld [vmem:[%s7199 + $0x84] sm:$0xf]
    %v7234 = vld [vmem:[%s7199 + $0x88] sm:$0xf]
    %v7235 = vld [vmem:[%s7199 + $0x8c] sm:$0xf]
    %v7236 = vld [vmem:[%s7199 + $0x90] sm:$0xf]
    %v7237 = vld [vmem:[%s7199 + $0x94] sm:$0xf]
    %v7238 = vld [vmem:[%s7199 + $0x98] sm:$0xf]
    %v7239 = vld [vmem:[%s7199 + $0x9c] sm:$0xf]
    %v7240 = vld [vmem:[%s7199 + $0xa0] sm:$0xf]
    %v7241 = vld [vmem:[%s7199 + $0xa4] sm:$0xf]
    %v7242 = vld [vmem:[%s7199 + $0xa8] sm:$0xf]
    %v7243 = vld [vmem:[%s7199 + $0xac] sm:$0xf]
    %v7244 = vld [vmem:[%s7199 + $0xb0] sm:$0xf]
    %v7245 = vld [vmem:[%s7199 + $0xb4] sm:$0xf]
    %v7246 = vld [vmem:[%s7199 + $0xb8] sm:$0xf]
    %v7247 = vld [vmem:[%s7199 + $0xbc] sm:$0xf]
    %v7248 = vld [vmem:[%s7199 + $0xc0] sm:$0xf]
    %v7249 = vld [vmem:[%s7199 + $0xc4] sm:$0xf]
    %v7250 = vld [vmem:[%s7199 + $0xc8] sm:$0xf]
    %v7251 = vld [vmem:[%s7199 + $0xcc] sm:$0xf]
    %v7252 = vld [vmem:[%s7199 + $0xd0] sm:$0xf]
    %v7253 = vld [vmem:[%s7199 + $0xd4] sm:$0xf]
    %v7254 = vld [vmem:[%s7199 + $0xd8] sm:$0xf]
    %v7255 = vld [vmem:[%s7199 + $0xdc] sm:$0xf]
    %v7256 = vld [vmem:[%s7199 + $0xe0] sm:$0xf]
    %v7257 = vld [vmem:[%s7199 + $0xe4] sm:$0xf]
    %v7258 = vld [vmem:[%s7199 + $0xe8] sm:$0xf]
    %v7259 = vld [vmem:[%s7199 + $0xec] sm:$0xf]
    %v7260 = vld [vmem:[%s7199 + $0xf0] sm:$0xf]
    %v7261 = vld [vmem:[%s7199 + $0xf4] sm:$0xf]
    %v7262 = vld [vmem:[%s7199 + $0xf8] sm:$0xf]
    %v7263 = vld [vmem:[%s7199 + $0xfc] sm:$0xf]
    %v7328 = vunpack.c.l.b16 %v7200
    %v7329 = vunpack.c.l.b16 %v7201
    %v7330 = vunpack.c.l.b16 %v7202
    %v7331 = vunpack.c.l.b16 %v7203
    %v7332 = vunpack.c.l.b16 %v7204
    %v7333 = vunpack.c.l.b16 %v7205
    %v7334 = vunpack.c.l.b16 %v7206
    %v7335 = vunpack.c.l.b16 %v7207
    %v7336 = vunpack.c.l.b16 %v7208
    %v7337 = vunpack.c.l.b16 %v7209
    %v7338 = vunpack.c.l.b16 %v7210
    %v7339 = vunpack.c.l.b16 %v7211
    %v7340 = vunpack.c.l.b16 %v7212
    %v7341 = vunpack.c.l.b16 %v7213
    %v7342 = vunpack.c.l.b16 %v7214
    %v7343 = vunpack.c.l.b16 %v7215
    %v7344 = vunpack.c.l.b16 %v7216
    %v7345 = vunpack.c.l.b16 %v7217
    %v7346 = vunpack.c.l.b16 %v7218
    %v7347 = vunpack.c.l.b16 %v7219
    %v7348 = vunpack.c.l.b16 %v7220
    %v7349 = vunpack.c.l.b16 %v7221
    %v7350 = vunpack.c.l.b16 %v7222
    %v7351 = vunpack.c.l.b16 %v7223
    %v7352 = vunpack.c.l.b16 %v7224
    %v7353 = vunpack.c.l.b16 %v7225
    %v7354 = vunpack.c.l.b16 %v7226
    %v7355 = vunpack.c.l.b16 %v7227
    %v7356 = vunpack.c.l.b16 %v7228
    %v7357 = vunpack.c.l.b16 %v7229
    %v7358 = vunpack.c.l.b16 %v7230
    %v7359 = vunpack.c.l.b16 %v7231
    %v7360 = vunpack.c.l.b16 %v7232
    %v7361 = vunpack.c.l.b16 %v7233
    %v7362 = vunpack.c.l.b16 %v7234
    %v7363 = vunpack.c.l.b16 %v7235
    %v7364 = vunpack.c.l.b16 %v7236
    %v7365 = vunpack.c.l.b16 %v7237
    %v7366 = vunpack.c.l.b16 %v7238
    %v7367 = vunpack.c.l.b16 %v7239
    %v7368 = vunpack.c.l.b16 %v7240
    %v7369 = vunpack.c.l.b16 %v7241
    %v7370 = vunpack.c.l.b16 %v7242
    %v7371 = vunpack.c.l.b16 %v7243
    %v7372 = vunpack.c.l.b16 %v7244
    %v7373 = vunpack.c.l.b16 %v7245
    %v7374 = vunpack.c.l.b16 %v7246
    %v7375 = vunpack.c.l.b16 %v7247
    %v7376 = vunpack.c.l.b16 %v7248
    %v7377 = vunpack.c.l.b16 %v7249
    %v7378 = vunpack.c.l.b16 %v7250
    %v7379 = vunpack.c.l.b16 %v7251
    %v7380 = vunpack.c.l.b16 %v7252
    %v7381 = vunpack.c.l.b16 %v7253
    %v7382 = vunpack.c.l.b16 %v7254
    %v7383 = vunpack.c.l.b16 %v7255
    %v7384 = vunpack.c.l.b16 %v7256
    %v7385 = vunpack.c.l.b16 %v7257
    %v7386 = vunpack.c.l.b16 %v7258
    %v7387 = vunpack.c.l.b16 %v7259
    %v7388 = vunpack.c.l.b16 %v7260
    %v7389 = vunpack.c.l.b16 %v7261
    %v7390 = vunpack.c.l.b16 %v7262
    %v7391 = vunpack.c.l.b16 %v7263
    %v7392 = vpack.c.b16 %v7329, %v7328
    %v7393 = vpack.c.b16 %v7331, %v7330
    %v7394 = vpack.c.b16 %v7333, %v7332
    %v7395 = vpack.c.b16 %v7335, %v7334
    %v7396 = vpack.c.b16 %v7337, %v7336
    %v7397 = vpack.c.b16 %v7339, %v7338
    %v7398 = vpack.c.b16 %v7341, %v7340
    %v7399 = vpack.c.b16 %v7343, %v7342
    %v7400 = vpack.c.b16 %v7345, %v7344
    %v7401 = vpack.c.b16 %v7347, %v7346
    %v7402 = vpack.c.b16 %v7349, %v7348
    %v7403 = vpack.c.b16 %v7351, %v7350
    %v7404 = vpack.c.b16 %v7353, %v7352
    %v7405 = vpack.c.b16 %v7355, %v7354
    %v7406 = vpack.c.b16 %v7357, %v7356
    %v7407 = vpack.c.b16 %v7359, %v7358
    %v7408 = vpack.c.b16 %v7361, %v7360
    %v7409 = vpack.c.b16 %v7363, %v7362
    %v7410 = vpack.c.b16 %v7365, %v7364
    %v7411 = vpack.c.b16 %v7367, %v7366
    %v7412 = vpack.c.b16 %v7369, %v7368
    %v7413 = vpack.c.b16 %v7371, %v7370
    %v7414 = vpack.c.b16 %v7373, %v7372
    %v7415 = vpack.c.b16 %v7375, %v7374
    %v7416 = vpack.c.b16 %v7377, %v7376
    %v7417 = vpack.c.b16 %v7379, %v7378
    %v7418 = vpack.c.b16 %v7381, %v7380
    %v7419 = vpack.c.b16 %v7383, %v7382
    %v7420 = vpack.c.b16 %v7385, %v7384
    %v7421 = vpack.c.b16 %v7387, %v7386
    %v7422 = vpack.c.b16 %v7389, %v7388
    %v7423 = vpack.c.b16 %v7391, %v7390
    %7456 = vmatprep.subr.bf16.mxu0 0
    %7457 = vmatpush1.bf16.msra.mxu0 %v7399
    %7458 = vmatprep.subr.bf16.mxu0 0
    %7459 = vmatpush1.bf16.msra.mxu0 %v7398
    %7460 = vmatprep.subr.bf16.mxu0 0
    %7461 = vmatpush1.bf16.msra.mxu0 %v7397
    %7462 = vmatprep.subr.bf16.mxu0 0
    %7463 = vmatpush1.bf16.msra.mxu0 %v7396
    %7464 = vmatprep.subr.bf16.mxu0 0
    %7465 = vmatpush1.bf16.msra.mxu0 %v7395
    %7466 = vmatprep.subr.bf16.mxu0 0
    %7467 = vmatpush1.bf16.msra.mxu0 %v7394
    %7468 = vmatprep.subr.bf16.mxu0 0
    %7469 = vmatpush1.bf16.msra.mxu0 %v7393
    %7470 = vmatprep.subr.bf16.mxu0 0
    %7471 = vmatpush1.bf16.msra.mxu0 %v7392
    %7472 = vmatprep.subr.bf16.mxu0 0
    %7473 = vmatpush2.bf16.msra.mxu0 %v7407
    %7474 = vmatprep.subr.bf16.mxu0 0
    %7475 = vmatpush2.bf16.msra.mxu0 %v7406
    %7476 = vmatprep.subr.bf16.mxu0 0
    %7477 = vmatpush2.bf16.msra.mxu0 %v7405
    %7478 = vmatprep.subr.bf16.mxu0 0
    %7479 = vmatpush2.bf16.msra.mxu0 %v7404
    %7480 = vmatprep.subr.bf16.mxu0 0
    %7481 = vmatpush2.bf16.msra.mxu0 %v7403
    %7482 = vmatprep.subr.bf16.mxu0 0
    %7483 = vmatpush2.bf16.msra.mxu0 %v7402
    %7484 = vmatprep.subr.bf16.mxu0 0
    %7485 = vmatpush2.bf16.msra.mxu0 %v7401
    %7486 = vmatprep.subr.bf16.mxu0 0
    %7487 = vmatpush2.bf16.msra.mxu0 %v7400
    %7488 = vmatprep.mubr.bf16.mxu0 %v6183
    %7489 = vmatmul.mubr.bf16.gmra.mxu0 %v6182
    %v7490 = vpop.f32.mrf.mxu0
    %v7491 = vadd.f32 0.0, %v7490
    %v7492 = vpop.f32.mrf.mxu0
    %v7493 = vpop.f32.mrf.mxu0
    %v7494 = vpop.f32.mrf.mxu0
    %7495 = vdwg.mxu0
    %7496 = vmatprep.subr.bf16.mxu0 0
    %7497 = vmatpush1.bf16.msra.mxu0 %v7415
    %7498 = vmatprep.subr.bf16.mxu0 0
    %7499 = vmatpush1.bf16.msra.mxu0 %v7414
    %7500 = vmatprep.subr.bf16.mxu0 0
    %7501 = vmatpush1.bf16.msra.mxu0 %v7413
    %7502 = vmatprep.subr.bf16.mxu0 0
    %7503 = vmatpush1.bf16.msra.mxu0 %v7412
    %7504 = vmatprep.subr.bf16.mxu0 0
    %7505 = vmatpush1.bf16.msra.mxu0 %v7411
    %7506 = vmatprep.subr.bf16.mxu0 0
    %7507 = vmatpush1.bf16.msra.mxu0 %v7410
    %7508 = vmatprep.subr.bf16.mxu0 0
    %7509 = vmatpush1.bf16.msra.mxu0 %v7409
    %7510 = vmatprep.subr.bf16.mxu0 0
    %7511 = vmatpush1.bf16.msra.mxu0 %v7408
    %7512 = vmatprep.subr.bf16.mxu0 0
    %7513 = vmatpush2.bf16.msra.mxu0 %v7423
    %7514 = vmatprep.subr.bf16.mxu0 0
    %7515 = vmatpush2.bf16.msra.mxu0 %v7422
    %7516 = vmatprep.subr.bf16.mxu0 0
    %7517 = vmatpush2.bf16.msra.mxu0 %v7421
    %7518 = vmatprep.subr.bf16.mxu0 0
    %7519 = vmatpush2.bf16.msra.mxu0 %v7420
    %7520 = vmatprep.subr.bf16.mxu0 0
    %7521 = vmatpush2.bf16.msra.mxu0 %v7419
    %7522 = vmatprep.subr.bf16.mxu0 0
    %7523 = vmatpush2.bf16.msra.mxu0 %v7418
    %7524 = vmatprep.subr.bf16.mxu0 0
    %7525 = vmatpush2.bf16.msra.mxu0 %v7417
    %7526 = vmatprep.subr.bf16.mxu0 0
    %7527 = vmatpush2.bf16.msra.mxu0 %v7416
    %7528 = vmatprep.mubr.bf16.mxu0 %v6185
    %7529 = vmatmul.mubr.bf16.gmra.mxu0 %v6184
    %v7530 = vpop.f32.mrf.mxu0
    %v7531 = vadd.f32 %v7491, %v7530
    %v7532 = vpop.f32.mrf.mxu0
    %v7533 = vpop.f32.mrf.mxu0
    %v7534 = vpop.f32.mrf.mxu0
    %7535 = vdwg.mxu0
    %v7536 = vmax.f32 %v7198, %v7531
    %v7538 = vlaneseq
    %v7539 = vshrl.u32 %v7538, 7
    %v7540 = vsub.s32 0, %v7539
    %v7541 = vrot.slane %v6186, %v7540
    %v7543 = vadd.f32 %v7536, %v7541
    %v7544 = vmax.f32 %v7543, 0.0
    %v7545 = vpack.c.bf16 %v7544, %v7544
    %v7546 = vld [vmem:[%s5] sm:$0xf]
    %v7547 = vld [vmem:[%s5 + $0x4] sm:$0xf]
    %v7548 = vld [vmem:[%s5 + $0x8] sm:$0xf]
    %v7549 = vld [vmem:[%s5 + $0xc] sm:$0xf]
    %v7550 = vld [vmem:[%s5 + $0x10] sm:$0xf]
    %v7551 = vld [vmem:[%s5 + $0x14] sm:$0xf]
    %v7552 = vld [vmem:[%s5 + $0x18] sm:$0xf]
    %v7553 = vld [vmem:[%s5 + $0x1c] sm:$0xf]
    %v7554 = vld [vmem:[%s5 + $0x20] sm:$0xf]
    %v7555 = vld [vmem:[%s5 + $0x24] sm:$0xf]
    %v7556 = vld [vmem:[%s5 + $0x28] sm:$0xf]
    %v7557 = vld [vmem:[%s5 + $0x2c] sm:$0xf]
    %v7558 = vld [vmem:[%s5 + $0x30] sm:$0xf]
    %v7559 = vld [vmem:[%s5 + $0x34] sm:$0xf]
    %v7560 = vld [vmem:[%s5 + $0x38] sm:$0xf]
    %v7561 = vld [vmem:[%s5 + $0x3c] sm:$0xf]
    %v7562 = vld [vmem:[#allocation9] sm:$0x1]
    %v7564 = vlaneseq
    %v7565 = vshrl.u32 %v7564, 7
    %v7566 = vsub.s32 0, %v7565
    %v7567 = vrot.slane %v7562, %v7566
    %v7585 = vunpack.c.l.b16 %v7546
    %v7586 = vunpack.c.l.b16 %v7547
    %v7587 = vunpack.c.l.b16 %v7548
    %v7588 = vunpack.c.l.b16 %v7549
    %v7589 = vunpack.c.l.b16 %v7550
    %v7590 = vunpack.c.l.b16 %v7551
    %v7591 = vunpack.c.l.b16 %v7552
    %v7592 = vunpack.c.l.b16 %v7553
    %v7593 = vunpack.c.l.b16 %v7554
    %v7594 = vunpack.c.l.b16 %v7555
    %v7595 = vunpack.c.l.b16 %v7556
    %v7596 = vunpack.c.l.b16 %v7557
    %v7597 = vunpack.c.l.b16 %v7558
    %v7598 = vunpack.c.l.b16 %v7559
    %v7599 = vunpack.c.l.b16 %v7560
    %v7600 = vunpack.c.l.b16 %v7561
    %v7601 = vpack.c.b16 %v7586, %v7585
    %v7602 = vpack.c.b16 %v7588, %v7587
    %v7603 = vpack.c.b16 %v7590, %v7589
    %v7604 = vpack.c.b16 %v7592, %v7591
    %v7605 = vpack.c.b16 %v7594, %v7593
    %v7606 = vpack.c.b16 %v7596, %v7595
    %v7607 = vpack.c.b16 %v7598, %v7597
    %v7608 = vpack.c.b16 %v7600, %v7599
    %7617 = vmatprep.subr.bf16.mxu0 0
    %7618 = vmatpush1.bf16.msra.mxu0 %v7608
    %7619 = vmatprep.subr.bf16.mxu0 0
    %7620 = vmatpush1.bf16.msra.mxu0 %v7607
    %7621 = vmatprep.subr.bf16.mxu0 0
    %7622 = vmatpush1.bf16.msra.mxu0 %v7606
    %7623 = vmatprep.subr.bf16.mxu0 0
    %7624 = vmatpush1.bf16.msra.mxu0 %v7605
    %7625 = vmatprep.subr.bf16.mxu0 0
    %7626 = vmatpush1.bf16.msra.mxu0 %v7604
    %7627 = vmatprep.subr.bf16.mxu0 0
    %7628 = vmatpush1.bf16.msra.mxu0 %v7603
    %7629 = vmatprep.subr.bf16.mxu0 0
    %7630 = vmatpush1.bf16.msra.mxu0 %v7602
    %7631 = vmatprep.subr.bf16.mxu0 0
    %7632 = vmatpush1.bf16.msra.mxu0 %v7601
    %7633 = vmatprep.subr.bf16.mxu0 0
    %7634 = vmatpush2.bf16.msra.mxu0 0
    %7635 = vmatprep.subr.bf16.mxu0 0
    %7636 = vmatpush2.bf16.msra.mxu0 0
    %7637 = vmatprep.subr.bf16.mxu0 0
    %7638 = vmatpush2.bf16.msra.mxu0 0
    %7639 = vmatprep.subr.bf16.mxu0 0
    %7640 = vmatpush2.bf16.msra.mxu0 0
    %7641 = vmatprep.subr.bf16.mxu0 0
    %7642 = vmatpush2.bf16.msra.mxu0 0
    %7643 = vmatprep.subr.bf16.mxu0 0
    %7644 = vmatpush2.bf16.msra.mxu0 0
    %7645 = vmatprep.subr.bf16.mxu0 0
    %7646 = vmatpush2.bf16.msra.mxu0 0
    %7647 = vmatprep.subr.bf16.mxu0 0
    %7648 = vmatpush2.bf16.msra.mxu0 0
    %7649 = vmatprep.mubr.bf16.mxu0 0
    %7650 = vmatmul.mubr.bf16.gmra.mxu0 %v7545
    %v7651 = vpop.f32.mrf.mxu0
    %v7652 = vadd.f32 %v7567, %v7651
    %v7653 = vpop.f32.mrf.mxu0
    %v7654 = vpop.f32.mrf.mxu0
    %v7655 = vpop.f32.mrf.mxu0
    %7656 = vdwg.mxu0
    %vm7657 = vcmask 80896
    %7658 = vst.msk [vmem:[%s7] sm:$0xff] %vm7657, %v7652
    // Predicated region
    $region50: #{netD_mnist_forward.1} parent=1 // pred_check
      _
    $region51: #{netD_mnist_forward.1} parent=1 // pred_check_branch
      %7660 = sbr.rel (0) target = $region53
    $region52: #{netD_mnist_forward.1} parent=1 // pred_region
      _
    $region53: #{netD_mnist_forward.1} parent=1 // pred_fallthru
      _
    // Predicated region
    $region54: #{netD_mnist_forward.1} parent=1 // pred_check
      _
    $region55: #{netD_mnist_forward.1} parent=1 // pred_check_branch
      %7662 = sbr.rel (0) target = $region57
    $region56: #{netD_mnist_forward.1} parent=1 // pred_region
      _
    $region57: #{netD_mnist_forward.1} parent=1 // pred_fallthru
      _
    %7663 = vsyncpa [#allocation3], 1
    %7664 = vsyncpa [#allocation5], 1
    %7665 = vsyncpa [#allocation8], 1

</llo_original>
